<compile_context>
chip_gen: v5e
topology: v5e:2x2
jax: 0.10.0
libtpu: 0.0.40
codegen_flags: <defaults>
</compile_context>

<pallas_src>
import jax
import jax.numpy as jnp
from jax import lax
from jax.experimental import pallas as pl
from jax.experimental.pallas import tpu as pltpu


# ----------------------------------------------------------------------------
# Glue helpers (plain JAX): affine bookkeeping, same math as the torch code.
# ----------------------------------------------------------------------------
def get_zooms(affines):
    # TODO(synk): repo helper not provided; nibabel-style voxel sizes =
    # column norms of the 3x3 rotation/zoom block.
    return jnp.sqrt(jnp.sum(affines[:, :3, :3] ** 2, axis=1))  # [B, 3]


def rescale_rot_components_with_diag(affines, scale):
    # Multiply the 3x3 block on the right by diag(scale) (rescales column j).
    rot = affines[:, :3, :3] * scale[:, None, :]
    return affines.at[:, :3, :3].set(rot)


def _default_mxu_dtype():
    # v6e/v7x run bf16 on MXU/VPU at full rate; keep f32 on older chips
    # (v5e has no bf16 VPU) and whenever detection fails.
    try:
        kind = jax.devices()[0].device_kind.lower()
    except Exception:
        return jnp.float32
    if ("v6" in kind) or ("v7" in kind):
        return jnp.bfloat16
    return jnp.float32


# ----------------------------------------------------------------------------
# Pallas kernel: fused affine_grid + trilinear grid_sample of the zero-embedded
# volume.  One program per (batch, output-point-chunk); all views are handled
# inside the program so the output block is channel-dense.
# ----------------------------------------------------------------------------
def _make_kernel(S, B, V, C_PER, NP, w_dtype):
    HALF = float(S // 2)
    INV_S = 1.0 / S
    CS = C_PER * S
    is_pow2 = (S & (S - 1)) == 0
    log2S = S.bit_length() - 1 if is_pow2 else None

    def kernel(theta_ref, x_ref, out_ref):
        b = pl.program_id(0)
        pc = pl.program_id(1)

        # ---- per-output-point pipeline, everything (1, NP), points on LANES.
        # Keep this whole block in f32: the exact x0 == HALF compare and the
        # floor()-based neighbor matching must not be done in bf16.
        p = lax.broadcasted_iota(jnp.int32, (1, NP), 1) + pc * NP
        if is_pow2:
            d = (p >> (2 * log2S)).astype(jnp.float32)
            h = ((p >> log2S) & (S - 1)).astype(jnp.float32)
            w = (p & (S - 1)).astype(jnp.float32)
        else:  # generic fallback (int div/mod is slow but rarely taken)
            d = (p // (S * S)).astype(jnp.float32)
            h = ((p // S) % S).astype(jnp.float32)
            w = (p % S).astype(jnp.float32)

        xb = (2.0 * w + 1.0) * INV_S - 1.0   # base grid coord along W
        yb = (2.0 * h + 1.0) * INV_S - 1.0   # along H
        zb = (2.0 * d + 1.0) * INV_S - 1.0   # along D

        row_i = lax.broadcasted_iota(jnp.int32, (S, NP), 0)

        # V is a small static constant -> unrolled; each view writes its own
        # C_PER rows of the channel-dense (1, V*C_PER, NP) output block.
        for v in range(V):
            # theta layout is (V, B, 3, 4) flattened row-major; keep the
            # stack/reshape order in the wrapper in sync with this.
            base = (v * B + b) * 12
            t = [theta_ref[base + k] for k in range(12)]

            # affine_grid (align_corners=False): grid = theta @ [x, y, z, 1]
            gx = t[0] * xb + t[1] * yb + t[2] * zb + t[3]
            gy = t[4] * xb + t[5] * yb + t[6] * zb + t[7]
            gz = t[8] * xb + t[9] * yb + t[10] * zb + t[11]

            # grid_sample unnormalization (align_corners=False)
            ix = ((gx + 1.0) * S - 1.0) * 0.5    # indexes input W axis
            iy = ((gy + 1.0) * S - 1.0) * 0.5    # indexes input H axis
            iz = ((gz + 1.0) * S - 1.0) * 0.5    # indexes input D axis

            x0 = jnp.floor(ix)
            fx = ix - x0
            y0 = jnp.floor(iy)
            fy = iy - y0
            z0 = jnp.floor(iz)
            fz = iz - z0

            # W axis: only slice w == S//2 of x_mid is nonzero.  Exact float
            # equality is safe: floor() of f32 gives exactly-representable
            # small integers.  Stays f32.
            wsc = ((1.0 - fx) * (x0 == HALF).astype(jnp.float32)
                   + fx * ((x0 + 1.0) == HALF).astype(jnp.float32))   # (1, NP)

            z0i = z0.astype(jnp.int32)
            y0i = y0.astype(jnp.int32)

            # D-axis weights carry the W-slice factor; cast only here to the
            # MXU dtype (bf16 on v6e/v7x) so wz is built directly in w_dtype.
            az0 = (wsc * (1.0 - fz)).astype(w_dtype)
            az1 = (wsc * fz).astype(w_dtype)
            ay0 = 1.0 - fy                         # H-axis weights stay f32
            ay1 = fy

            # Sparse separable weights; out-of-range neighbors never match a
            # row => weight 0, matching padding_mode='zeros'.
            wz = (jnp.where(row_i == z0i, az0, 0.0)
                  + jnp.where(row_i == z0i + 1, az1, 0.0))     # (S, NP) w_dtype
            wy = (jnp.where(row_i == y0i, ay0, 0.0)
                  + jnp.where(row_i == y0i + 1, ay1, 0.0))     # (S, NP) f32

            # stage 1 (MXU): tmp[c*S + y, p] = sum_z x[c, y, z] * wz[z, p]
            lhs = x_ref[0, v * CS:(v + 1) * CS, :]             # (C_PER*S, S)
            tmp = jnp.dot(lhs, wz, preferred_element_type=jnp.float32)  # (CS, NP)

            # stage 2 (VPU multiply + cross-sublane reduce on the XLU):
            #   out[c, p] = sum_y tmp[c*S + y, p] * wy[y, p]
            for c in range(C_PER):
                ci = v * C_PER + c
                seg = tmp[c * S:(c + 1) * S, :] * wy           # (S, NP) f32
                out_ref[0, ci:ci + 1, :] = jnp.sum(
                    seg, axis=0, keepdims=True).astype(out_ref.dtype)

    return kernel


def skip_connector_forward(x, b_grid_affines, n_views, mxu_dtype=None):
    """Pallas implementation of SkipConnector.forward.

    mxu_dtype: dtype for the matmul operands.  None -> auto (bf16 on v6e/v7x,
    f32 elsewhere).  The coordinate pipeline always stays in f32.
    """
    B, C, S, S2 = x.shape
    assert S == S2 and C % n_views == 0
    V = n_views
    C_PER = C // V
    NPTS = S ** 3

    # Per-view theta: rescale rotation columns by 1/zooms, invert, top 3 rows.
    # Layout after stack/reshape is (V, B, 3, 4) row-major -> kernel reads
    # theta_flat[(v*B + b)*12 + k].  Keep in sync with the kernel.
    thetas = []
    for ga in b_grid_affines:
        resc = rescale_rot_components_with_diag(ga, 1.0 / get_zooms(ga))
        thetas.append(jnp.linalg.inv(resc.astype(jnp.float32))[:, :3, :])
    theta_flat = jnp.stack(thetas, axis=0).reshape(-1)            # (V*B*12,)

    compute_dtype = _default_mxu_dtype() if mxu_dtype is None else mxu_dtype
    itemc = jnp.dtype(compute_dtype).itemsize
    itemo = jnp.dtype(x.dtype).itemsize

    # LHS layout for the stage-1 matmul: rows are (channel, H/y) pairs and
    # columns are D/z, i.e. x permuted [B, C, H, D] -> (B, C*S, S).
    x_perm = jnp.swapaxes(x, 2, 3).astype(compute_dtype).reshape(B, C * S, S)

    # ---- choose points-per-program NP -------------------------------------
    # Per-point VMEM bytes inside one program (one view's transients live at a
    # time): wz + wy + tmp + double-buffered output block + ~two dozen live
    # (1, NP) f32 coordinate vectors.
    bytes_per_point = (S * itemc          # wz
                       + S * 4            # wy (f32)
                       + C_PER * S * 4    # tmp (f32 matmul result)
                       + 2 * C * itemo    # double-buffered output block
                       + 24 * 4)          # coordinate pipeline
    try:
        vmem_phys = int(pltpu.get_tpu_info().vmem_capacity_bytes)
    except Exception:
        vmem_phys = 64 * 1024 * 1024      # v7x per-TC physical (most restrictive)
    budget = vmem_phys // 8
    # 2048 cap keeps the (1, NP) pipeline's vreg/spill pressure bounded.
    np_cap = max(128, min(2048, budget // bytes_per_point))

    lane_divs = [dv for dv in range(128, NPTS + 1, 128) if NPTS % dv == 0]
    if not lane_divs:                      # tiny volume: one full chunk
        NP = NPTS
    else:
        fitting = [dv for dv in lane_divs if dv <= np_cap] or [min(lane_divs)]
        NP = max(fitting)
        # v7x 2-TensorCore load balance: avoid a small, odd parallel count.
        if (B * (NPTS // NP)) % 2 == 1 and B * (NPTS // NP) < 8:
            even = [dv for dv in fitting if (B * (NPTS // dv)) % 2 == 0]
            if even:
                NP = max(even)
    n_chunks = NPTS // NP

    # Derive the scoped-VMEM request from actual per-program bytes (+headroom
    # for Mosaic internal scratch) instead of a flat 32 MiB.
    x_block_bytes = C * S * S * itemc
    per_prog_bytes = NP * bytes_per_point + 2 * x_block_bytes
    vmem_limit = int(min(vmem_phys,
                         max(16 * 1024 * 1024, 2 * per_prog_bytes + (4 << 20))))

    cost = pl.CostEstimate(
        flops=2 * B * V * C_PER * S * (S + 1) * NPTS,    # stage 1 + stage 2
        transcendentals=0,
        bytes_accessed=int(B * C * S * S * itemc          # x (compute dtype)
                           + B * C * NPTS * itemo         # output
                           + V * B * 12 * 4))             # thetas

    out = pl.pallas_call(
        _make_kernel(S, B, V, C_PER, NP, compute_dtype),
        # Emit directly in x.dtype: halves HBM writeback when x is bf16.
        out_shape=jax.ShapeDtypeStruct((B, C, NPTS), x.dtype),
        # pc is the innermost grid axis; the x index_map is independent of it,
        # so the (C*S, S) x block stays resident in VMEM across chunks.
        grid=(B, n_chunks),
        in_specs=[
            pl.BlockSpec(memory_space=pltpu.MemorySpace.SMEM),        # thetas
            pl.BlockSpec((1, C * S, S), lambda b, pc: (b, 0, 0)),
        ],
        out_specs=pl.BlockSpec((1, C, NP), lambda b, pc: (b, 0, pc)),
        compiler_params=pltpu.CompilerParams(
            dimension_semantics=("parallel", "parallel"),
            vmem_limit_bytes=vmem_limit),
        cost_estimate=cost,
    )(theta_flat, x_perm)

    return out.reshape(B, C, S, S, S)


# ----------------------------------------------------------------------------
# Pure-JAX reference (full zero-embedded volume + explicit trilinear gather)
# ----------------------------------------------------------------------------
def _affine_grid_3d(theta, S):
    coords = (2.0 * jnp.arange(S) + 1.0) / S - 1.0
    zc, yc, xc = jnp.meshgrid(coords, coords, coords, indexing="ij")
    base = jnp.stack([xc, yc, zc, jnp.ones_like(xc)], axis=-1)       # (S,S,S,4)
    return jnp.einsum("dhwj,bij->bdhwi", base, theta)                # (B,S,S,S,3)


def _grid_sample_3d(vol, grid):
    B, C, D, H, W = vol.shape
    gx, gy, gz = grid[..., 0], grid[..., 1], grid[..., 2]
    ix = ((gx + 1.0) * W - 1.0) / 2.0
    iy = ((gy + 1.0) * H - 1.0) / 2.0
    iz = ((gz + 1.0) * D - 1.0) / 2.0
    x0, y0, z0 = jnp.floor(ix), jnp.floor(iy), jnp.floor(iz)
    fx, fy, fz = ix - x0, iy - y0, iz - z0
    bidx = jnp.arange(B)[:, None, None, None, None]
    cidx = jnp.arange(C)[None, :, None, None, None]
    out = jnp.zeros((B, C) + gx.shape[1:], vol.dtype)
    for dz, wz in ((z0, 1.0 - fz), (z0 + 1.0, fz)):
        for dy, wy in ((y0, 1.0 - fy), (y0 + 1.0, fy)):
            for dx, wx in ((x0, 1.0 - fx), (x0 + 1.0, fx)):
                valid = ((dz >= 0) & (dz < D) & (dy >= 0) & (dy < H)
                         & (dx >= 0) & (dx < W)).astype(vol.dtype)
                zi = jnp.clip(dz, 0, D - 1).astype(jnp.int32)
                yi = jnp.clip(dy, 0, H - 1).astype(jnp.int32)
                xi = jnp.clip(dx, 0, W - 1).astype(jnp.int32)
                vals = vol[bidx, cidx, zi[:, None], yi[:, None], xi[:, None]]
                out = out + ((wz * wy * wx * valid)[:, None]) * vals
    return out


def reference_forward(x, b_grid_affines, n_views):
    B, C, S, _ = x.shape
    C_PER = C // n_views
    x_mid = jnp.zeros((B, C, S, S, S), x.dtype).at[..., S // 2].set(x)
    outs = []
    for v, ga in enumerate(b_grid_affines):
        vx = x_mid[:, v * C_PER:(v + 1) * C_PER]
        resc = rescale_rot_components_with_diag(ga, 1.0 / get_zooms(ga))
        theta = jnp.linalg.inv(resc.astype(jnp.float32))[:, :3, :]
        grid = _affine_grid_3d(theta, S)
        outs.append(_grid_sample_3d(vx, grid))
    return jnp.concatenate(outs, axis=1)


if __name__ == "__main__":
    B, n_views, C_per, S = 2, 2, 2, 16
    C = n_views * C_per
    key = jax.random.PRNGKey(0)
    x = jax.random.normal(key, (B, C, S, S), jnp.float32)

    def make_affine(angle, zooms, trans):
        c, s = jnp.cos(angle), jnp.sin(angle)
        rot = jnp.array([[c, -s, 0.0], [s, c, 0.0], [0.0, 0.0, 1.0]], jnp.float32)
        A = jnp.eye(4, dtype=jnp.float32)
        A = A.at[:3, :3].set(rot @ jnp.diag(jnp.asarray(zooms, jnp.float32)))
        A = A.at[:3, 3].set(jnp.asarray(trans, jnp.float32))
        return A

    b_grid_affines = []
    for v in range(n_views):
        mats = []
        for b in range(B):
            angle = 0.3 * (v + 1) + 0.15 * b
            mats.append(make_affine(jnp.float32(angle), (1.2, 0.9, 1.1),
                                    (0.05 * (b + 1), -0.1 * v, 0.02)))
        b_grid_affines.append(jnp.stack(mats, 0))

    out = skip_connector_forward(x, b_grid_affines, n_views)
    out = jax.block_until_ready(out)

    ref = reference_forward(x, b_grid_affines, n_views)
    assert out.shape == (B, C, S, S, S)
    assert bool(jnp.all(jnp.isfinite(out)))
    out_f32 = out.astype(jnp.float32)
    max_err = float(jnp.max(jnp.abs(out_f32 - ref)))
    assert jnp.allclose(out_f32, ref, atol=2e-2, rtol=2e-2), max_err
    print("KERNEL_OK")
</pallas_src>

<mosaic_0001>
module attributes {stable_mosaic.version = 11 : i64} {
  func.func @kernel(%arg0: i32, %arg1: i32, %arg2: memref<48xf32, #tpu.memory_space<smem>>, %arg3: memref<1x64x16xf32, #tpu.memory_space<vmem>>, %arg4: memref<1x4x2048xf32, #tpu.memory_space<vmem>>) attributes {dimension_semantics = [#tpu.dimension_semantics<parallel>, #tpu.dimension_semantics<parallel>], iteration_bounds = array<i64: 2, 2>, scalar_prefetch = 0 : i64, scratch_operands = 0 : i64, tpu.core_type = #tpu.core_type<tc>, window_params = [{transform_indices = @transform_0, window_bounds = array<i64: 48>}, {transform_indices = @transform_1, window_bounds = array<i64: 1, 64, 16>}, {transform_indices = @transform_2, window_bounds = array<i64: 1, 4, 2048>}]} {
    %0 = tpu.iota {dimensions = array<i32: 1>} : vector<1x2048xi32>
    %c2048_i32 = arith.constant 2048 : i32
    %1 = arith.muli %arg1, %c2048_i32 : i32
    %2 = vector.broadcast %1 : i32 to vector<1x2048xi32>
    %3 = arith.addi %0, %2 : vector<1x2048xi32>
    %c8_i32 = arith.constant 8 : i32
    %4 = vector.broadcast %c8_i32 : i32 to vector<1x2048xi32>
    %5 = arith.shrsi %3, %4 : vector<1x2048xi32>
    %6 = arith.sitofp %5 : vector<1x2048xi32> to vector<1x2048xf32>
    %c4_i32 = arith.constant 4 : i32
    %7 = vector.broadcast %c4_i32 : i32 to vector<1x2048xi32>
    %8 = arith.shrsi %3, %7 : vector<1x2048xi32>
    %c15_i32 = arith.constant 15 : i32
    %9 = vector.broadcast %c15_i32 : i32 to vector<1x2048xi32>
    %10 = arith.andi %8, %9 : vector<1x2048xi32>
    %11 = arith.sitofp %10 : vector<1x2048xi32> to vector<1x2048xf32>
    %c15_i32_0 = arith.constant 15 : i32
    %12 = vector.broadcast %c15_i32_0 : i32 to vector<1x2048xi32>
    %13 = arith.andi %3, %12 : vector<1x2048xi32>
    %14 = arith.sitofp %13 : vector<1x2048xi32> to vector<1x2048xf32>
    %cst = arith.constant 2.000000e+00 : f32
    %15 = vector.broadcast %cst : f32 to vector<1x2048xf32>
    %16 = arith.mulf %15, %14 : vector<1x2048xf32>
    %cst_1 = arith.constant 1.000000e+00 : f32
    %17 = vector.broadcast %cst_1 : f32 to vector<1x2048xf32>
    %18 = arith.addf %16, %17 : vector<1x2048xf32>
    %cst_2 = arith.constant 6.250000e-02 : f32
    %19 = vector.broadcast %cst_2 : f32 to vector<1x2048xf32>
    %20 = arith.mulf %18, %19 : vector<1x2048xf32>
    %cst_3 = arith.constant 1.000000e+00 : f32
    %21 = vector.broadcast %cst_3 : f32 to vector<1x2048xf32>
    %22 = arith.subf %20, %21 : vector<1x2048xf32>
    %cst_4 = arith.constant 2.000000e+00 : f32
    %23 = vector.broadcast %cst_4 : f32 to vector<1x2048xf32>
    %24 = arith.mulf %23, %11 : vector<1x2048xf32>
    %cst_5 = arith.constant 1.000000e+00 : f32
    %25 = vector.broadcast %cst_5 : f32 to vector<1x2048xf32>
    %26 = arith.addf %24, %25 : vector<1x2048xf32>
    %cst_6 = arith.constant 6.250000e-02 : f32
    %27 = vector.broadcast %cst_6 : f32 to vector<1x2048xf32>
    %28 = arith.mulf %26, %27 : vector<1x2048xf32>
    %cst_7 = arith.constant 1.000000e+00 : f32
    %29 = vector.broadcast %cst_7 : f32 to vector<1x2048xf32>
    %30 = arith.subf %28, %29 : vector<1x2048xf32>
    %cst_8 = arith.constant 2.000000e+00 : f32
    %31 = vector.broadcast %cst_8 : f32 to vector<1x2048xf32>
    %32 = arith.mulf %31, %6 : vector<1x2048xf32>
    %cst_9 = arith.constant 1.000000e+00 : f32
    %33 = vector.broadcast %cst_9 : f32 to vector<1x2048xf32>
    %34 = arith.addf %32, %33 : vector<1x2048xf32>
    %cst_10 = arith.constant 6.250000e-02 : f32
    %35 = vector.broadcast %cst_10 : f32 to vector<1x2048xf32>
    %36 = arith.mulf %34, %35 : vector<1x2048xf32>
    %cst_11 = arith.constant 1.000000e+00 : f32
    %37 = vector.broadcast %cst_11 : f32 to vector<1x2048xf32>
    %38 = arith.subf %36, %37 : vector<1x2048xf32>
    %39 = tpu.iota {dimensions = array<i32: 0>} : vector<16x2048xi32>
    %c0_i32 = arith.constant 0 : i32
    %40 = arith.addi %c0_i32, %arg0 : i32
    %c12_i32 = arith.constant 12 : i32
    %41 = arith.muli %40, %c12_i32 : i32
    %c0_i32_12 = arith.constant 0 : i32
    %42 = arith.addi %41, %c0_i32_12 : i32
    %43 = arith.index_cast %42 : i32 to index
    %44 = memref.load %arg2[%43] : memref<48xf32, #tpu.memory_space<smem>>
    %c1_i32 = arith.constant 1 : i32
    %45 = arith.addi %41, %c1_i32 : i32
    %46 = arith.index_cast %45 : i32 to index
    %47 = memref.load %arg2[%46] : memref<48xf32, #tpu.memory_space<smem>>
    %c2_i32 = arith.constant 2 : i32
    %48 = arith.addi %41, %c2_i32 : i32
    %49 = arith.index_cast %48 : i32 to index
    %50 = memref.load %arg2[%49] : memref<48xf32, #tpu.memory_space<smem>>
    %c3_i32 = arith.constant 3 : i32
    %51 = arith.addi %41, %c3_i32 : i32
    %52 = arith.index_cast %51 : i32 to index
    %53 = memref.load %arg2[%52] : memref<48xf32, #tpu.memory_space<smem>>
    %c4_i32_13 = arith.constant 4 : i32
    %54 = arith.addi %41, %c4_i32_13 : i32
    %55 = arith.index_cast %54 : i32 to index
    %56 = memref.load %arg2[%55] : memref<48xf32, #tpu.memory_space<smem>>
    %c5_i32 = arith.constant 5 : i32
    %57 = arith.addi %41, %c5_i32 : i32
    %58 = arith.index_cast %57 : i32 to index
    %59 = memref.load %arg2[%58] : memref<48xf32, #tpu.memory_space<smem>>
    %c6_i32 = arith.constant 6 : i32
    %60 = arith.addi %41, %c6_i32 : i32
    %61 = arith.index_cast %60 : i32 to index
    %62 = memref.load %arg2[%61] : memref<48xf32, #tpu.memory_space<smem>>
    %c7_i32 = arith.constant 7 : i32
    %63 = arith.addi %41, %c7_i32 : i32
    %64 = arith.index_cast %63 : i32 to index
    %65 = memref.load %arg2[%64] : memref<48xf32, #tpu.memory_space<smem>>
    %c8_i32_14 = arith.constant 8 : i32
    %66 = arith.addi %41, %c8_i32_14 : i32
    %67 = arith.index_cast %66 : i32 to index
    %68 = memref.load %arg2[%67] : memref<48xf32, #tpu.memory_space<smem>>
    %c9_i32 = arith.constant 9 : i32
    %69 = arith.addi %41, %c9_i32 : i32
    %70 = arith.index_cast %69 : i32 to index
    %71 = memref.load %arg2[%70] : memref<48xf32, #tpu.memory_space<smem>>
    %c10_i32 = arith.constant 10 : i32
    %72 = arith.addi %41, %c10_i32 : i32
    %73 = arith.index_cast %72 : i32 to index
    %74 = memref.load %arg2[%73] : memref<48xf32, #tpu.memory_space<smem>>
    %c11_i32 = arith.constant 11 : i32
    %75 = arith.addi %41, %c11_i32 : i32
    %76 = arith.index_cast %75 : i32 to index
    %77 = memref.load %arg2[%76] : memref<48xf32, #tpu.memory_space<smem>>
    %78 = vector.broadcast %44 : f32 to vector<1x2048xf32>
    %79 = arith.mulf %78, %22 : vector<1x2048xf32>
    %80 = vector.broadcast %47 : f32 to vector<1x2048xf32>
    %81 = arith.mulf %80, %30 : vector<1x2048xf32>
    %82 = arith.addf %79, %81 : vector<1x2048xf32>
    %83 = vector.broadcast %50 : f32 to vector<1x2048xf32>
    %84 = arith.mulf %83, %38 : vector<1x2048xf32>
    %85 = arith.addf %82, %84 : vector<1x2048xf32>
    %86 = vector.broadcast %53 : f32 to vector<1x2048xf32>
    %87 = arith.addf %85, %86 : vector<1x2048xf32>
    %88 = vector.broadcast %56 : f32 to vector<1x2048xf32>
    %89 = arith.mulf %88, %22 : vector<1x2048xf32>
    %90 = vector.broadcast %59 : f32 to vector<1x2048xf32>
    %91 = arith.mulf %90, %30 : vector<1x2048xf32>
    %92 = arith.addf %89, %91 : vector<1x2048xf32>
    %93 = vector.broadcast %62 : f32 to vector<1x2048xf32>
    %94 = arith.mulf %93, %38 : vector<1x2048xf32>
    %95 = arith.addf %92, %94 : vector<1x2048xf32>
    %96 = vector.broadcast %65 : f32 to vector<1x2048xf32>
    %97 = arith.addf %95, %96 : vector<1x2048xf32>
    %98 = vector.broadcast %68 : f32 to vector<1x2048xf32>
    %99 = arith.mulf %98, %22 : vector<1x2048xf32>
    %100 = vector.broadcast %71 : f32 to vector<1x2048xf32>
    %101 = arith.mulf %100, %30 : vector<1x2048xf32>
    %102 = arith.addf %99, %101 : vector<1x2048xf32>
    %103 = vector.broadcast %74 : f32 to vector<1x2048xf32>
    %104 = arith.mulf %103, %38 : vector<1x2048xf32>
    %105 = arith.addf %102, %104 : vector<1x2048xf32>
    %106 = vector.broadcast %77 : f32 to vector<1x2048xf32>
    %107 = arith.addf %105, %106 : vector<1x2048xf32>
    %cst_15 = arith.constant 1.000000e+00 : f32
    %108 = vector.broadcast %cst_15 : f32 to vector<1x2048xf32>
    %109 = arith.addf %87, %108 : vector<1x2048xf32>
    %cst_16 = arith.constant 1.600000e+01 : f32
    %110 = vector.broadcast %cst_16 : f32 to vector<1x2048xf32>
    %111 = arith.mulf %109, %110 : vector<1x2048xf32>
    %cst_17 = arith.constant 1.000000e+00 : f32
    %112 = vector.broadcast %cst_17 : f32 to vector<1x2048xf32>
    %113 = arith.subf %111, %112 : vector<1x2048xf32>
    %cst_18 = arith.constant 5.000000e-01 : f32
    %114 = vector.broadcast %cst_18 : f32 to vector<1x2048xf32>
    %115 = arith.mulf %113, %114 : vector<1x2048xf32>
    %cst_19 = arith.constant 1.000000e+00 : f32
    %116 = vector.broadcast %cst_19 : f32 to vector<1x2048xf32>
    %117 = arith.addf %97, %116 : vector<1x2048xf32>
    %cst_20 = arith.constant 1.600000e+01 : f32
    %118 = vector.broadcast %cst_20 : f32 to vector<1x2048xf32>
    %119 = arith.mulf %117, %118 : vector<1x2048xf32>
    %cst_21 = arith.constant 1.000000e+00 : f32
    %120 = vector.broadcast %cst_21 : f32 to vector<1x2048xf32>
    %121 = arith.subf %119, %120 : vector<1x2048xf32>
    %cst_22 = arith.constant 5.000000e-01 : f32
    %122 = vector.broadcast %cst_22 : f32 to vector<1x2048xf32>
    %123 = arith.mulf %121, %122 : vector<1x2048xf32>
    %cst_23 = arith.constant 1.000000e+00 : f32
    %124 = vector.broadcast %cst_23 : f32 to vector<1x2048xf32>
    %125 = arith.addf %107, %124 : vector<1x2048xf32>
    %cst_24 = arith.constant 1.600000e+01 : f32
    %126 = vector.broadcast %cst_24 : f32 to vector<1x2048xf32>
    %127 = arith.mulf %125, %126 : vector<1x2048xf32>
    %cst_25 = arith.constant 1.000000e+00 : f32
    %128 = vector.broadcast %cst_25 : f32 to vector<1x2048xf32>
    %129 = arith.subf %127, %128 : vector<1x2048xf32>
    %cst_26 = arith.constant 5.000000e-01 : f32
    %130 = vector.broadcast %cst_26 : f32 to vector<1x2048xf32>
    %131 = arith.mulf %129, %130 : vector<1x2048xf32>
    %132 = math.floor %115 : vector<1x2048xf32>
    %133 = arith.subf %115, %132 : vector<1x2048xf32>
    %134 = math.floor %123 : vector<1x2048xf32>
    %135 = arith.subf %123, %134 : vector<1x2048xf32>
    %136 = math.floor %131 : vector<1x2048xf32>
    %137 = arith.subf %131, %136 : vector<1x2048xf32>
    %cst_27 = arith.constant 1.000000e+00 : f32
    %138 = vector.broadcast %cst_27 : f32 to vector<1x2048xf32>
    %139 = arith.subf %138, %133 : vector<1x2048xf32>
    %cst_28 = arith.constant 8.000000e+00 : f32
    %140 = vector.broadcast %cst_28 : f32 to vector<1x2048xf32>
    %141 = arith.cmpf oeq, %132, %140 : vector<1x2048xf32>
    %142 = arith.extui %141 : vector<1x2048xi1> to vector<1x2048xi32>
    %143 = arith.sitofp %142 : vector<1x2048xi32> to vector<1x2048xf32>
    %144 = arith.mulf %139, %143 : vector<1x2048xf32>
    %cst_29 = arith.constant 1.000000e+00 : f32
    %145 = vector.broadcast %cst_29 : f32 to vector<1x2048xf32>
    %146 = arith.addf %132, %145 : vector<1x2048xf32>
    %cst_30 = arith.constant 8.000000e+00 : f32
    %147 = vector.broadcast %cst_30 : f32 to vector<1x2048xf32>
    %148 = arith.cmpf oeq, %146, %147 : vector<1x2048xf32>
    %149 = arith.extui %148 : vector<1x2048xi1> to vector<1x2048xi32>
    %150 = arith.sitofp %149 : vector<1x2048xi32> to vector<1x2048xf32>
    %151 = arith.mulf %133, %150 : vector<1x2048xf32>
    %152 = arith.addf %144, %151 : vector<1x2048xf32>
    %153 = arith.fptosi %136 : vector<1x2048xf32> to vector<1x2048xi32>
    %154 = arith.fptosi %134 : vector<1x2048xf32> to vector<1x2048xi32>
    %cst_31 = arith.constant 1.000000e+00 : f32
    %155 = vector.broadcast %cst_31 : f32 to vector<1x2048xf32>
    %156 = arith.subf %155, %137 : vector<1x2048xf32>
    %157 = arith.mulf %152, %156 : vector<1x2048xf32>
    %158 = arith.mulf %152, %137 : vector<1x2048xf32>
    %cst_32 = arith.constant 1.000000e+00 : f32
    %159 = vector.broadcast %cst_32 : f32 to vector<1x2048xf32>
    %160 = arith.subf %159, %135 : vector<1x2048xf32>
    %161 = vector.broadcast %153 : vector<1x2048xi32> to vector<16x2048xi32>
    %162 = arith.cmpi eq, %39, %161 : vector<16x2048xi32>
    %cst_33 = arith.constant 0.000000e+00 : f32
    %163 = vector.shape_cast %157 : vector<1x2048xf32> to vector<1x2048xf32>
    %164 = vector.broadcast %163 : vector<1x2048xf32> to vector<16x2048xf32>
    %165 = vector.broadcast %cst_33 : f32 to vector<16x2048xf32>
    %166 = arith.select %162, %164, %165 : vector<16x2048xi1>, vector<16x2048xf32>
    %c1_i32_34 = arith.constant 1 : i32
    %167 = vector.broadcast %c1_i32_34 : i32 to vector<1x2048xi32>
    %168 = arith.addi %153, %167 : vector<1x2048xi32>
    %169 = vector.broadcast %168 : vector<1x2048xi32> to vector<16x2048xi32>
    %170 = arith.cmpi eq, %39, %169 : vector<16x2048xi32>
    %cst_35 = arith.constant 0.000000e+00 : f32
    %171 = vector.shape_cast %158 : vector<1x2048xf32> to vector<1x2048xf32>
    %172 = vector.broadcast %171 : vector<1x2048xf32> to vector<16x2048xf32>
    %173 = vector.broadcast %cst_35 : f32 to vector<16x2048xf32>
    %174 = arith.select %170, %172, %173 : vector<16x2048xi1>, vector<16x2048xf32>
    %175 = arith.addf %166, %174 : vector<16x2048xf32>
    %176 = vector.broadcast %154 : vector<1x2048xi32> to vector<16x2048xi32>
    %177 = arith.cmpi eq, %39, %176 : vector<16x2048xi32>
    %cst_36 = arith.constant 0.000000e+00 : f32
    %178 = vector.shape_cast %160 : vector<1x2048xf32> to vector<1x2048xf32>
    %179 = vector.broadcast %178 : vector<1x2048xf32> to vector<16x2048xf32>
    %180 = vector.broadcast %cst_36 : f32 to vector<16x2048xf32>
    %181 = arith.select %177, %179, %180 : vector<16x2048xi1>, vector<16x2048xf32>
    %c1_i32_37 = arith.constant 1 : i32
    %182 = vector.broadcast %c1_i32_37 : i32 to vector<1x2048xi32>
    %183 = arith.addi %154, %182 : vector<1x2048xi32>
    %184 = vector.broadcast %183 : vector<1x2048xi32> to vector<16x2048xi32>
    %185 = arith.cmpi eq, %39, %184 : vector<16x2048xi32>
    %cst_38 = arith.constant 0.000000e+00 : f32
    %186 = vector.shape_cast %135 : vector<1x2048xf32> to vector<1x2048xf32>
    %187 = vector.broadcast %186 : vector<1x2048xf32> to vector<16x2048xf32>
    %188 = vector.broadcast %cst_38 : f32 to vector<16x2048xf32>
    %189 = arith.select %185, %187, %188 : vector<16x2048xi1>, vector<16x2048xf32>
    %190 = arith.addf %181, %189 : vector<16x2048xf32>
    %c0 = arith.constant 0 : index
    %c0_39 = arith.constant 0 : index
    %c0_40 = arith.constant 0 : index
    %191 = vector.load %arg3[%c0, %c0_39, %c0_40] : memref<1x64x16xf32, #tpu.memory_space<vmem>>, vector<1x32x16xf32>
    %192 = vector.shape_cast %191 : vector<1x32x16xf32> to vector<32x16xf32>
    %cst_41 = arith.constant dense<0.000000e+00> : vector<32x2048xf32>
    %193 = tpu.matmul %192, %175, %cst_41 {dimension_numbers = #tpu.dot_dimension_numbers<[1], [0], [0], [1], [0, 0, 1, 1], [], []>} : vector<32x16xf32>, vector<16x2048xf32>, vector<32x2048xf32> -> vector<32x2048xf32>
    %194 = vector.extract_strided_slice %193 {offsets = [0, 0], sizes = [16, 2048], strides = [1, 1]} : vector<32x2048xf32> to vector<16x2048xf32>
    %195 = arith.mulf %194, %190 : vector<16x2048xf32>
    %cst_42 = arith.constant dense<0.000000e+00> : vector<2048xf32>
    %196 = vector.multi_reduction <add>, %195, %cst_42 [0] : vector<16x2048xf32> to vector<2048xf32>
    %197 = vector.shape_cast %196 : vector<2048xf32> to vector<1x2048xf32>
    %c0_43 = arith.constant 0 : index
    %c0_44 = arith.constant 0 : index
    %c0_45 = arith.constant 0 : index
    %198 = vector.load %arg4[%c0_43, %c0_44, %c0_45] : memref<1x4x2048xf32, #tpu.memory_space<vmem>>, vector<1x1x2048xf32>
    %199 = vector.shape_cast %198 : vector<1x1x2048xf32> to vector<1x2048xf32>
    %200 = vector.shape_cast %197 : vector<1x2048xf32> to vector<1x1x2048xf32>
    tpu.vector_store %arg4[%c0_43, %c0_44, %c0_45], %200 {strides = array<i32>} : memref<1x4x2048xf32, #tpu.memory_space<vmem>>, vector<1x1x2048xf32>,
    %201 = vector.extract_strided_slice %193 {offsets = [16, 0], sizes = [16, 2048], strides = [1, 1]} : vector<32x2048xf32> to vector<16x2048xf32>
    %202 = arith.mulf %201, %190 : vector<16x2048xf32>
    %cst_46 = arith.constant dense<0.000000e+00> : vector<2048xf32>
    %203 = vector.multi_reduction <add>, %202, %cst_46 [0] : vector<16x2048xf32> to vector<2048xf32>
    %204 = vector.shape_cast %203 : vector<2048xf32> to vector<1x2048xf32>
    %c0_47 = arith.constant 0 : index
    %c1 = arith.constant 1 : index
    %c0_48 = arith.constant 0 : index
    %205 = vector.load %arg4[%c0_47, %c1, %c0_48] : memref<1x4x2048xf32, #tpu.memory_space<vmem>>, vector<1x1x2048xf32>
    %206 = vector.shape_cast %205 : vector<1x1x2048xf32> to vector<1x2048xf32>
    %207 = vector.shape_cast %204 : vector<1x2048xf32> to vector<1x1x2048xf32>
    tpu.vector_store %arg4[%c0_47, %c1, %c0_48], %207 {strides = array<i32>} : memref<1x4x2048xf32, #tpu.memory_space<vmem>>, vector<1x1x2048xf32>,
    %c2_i32_49 = arith.constant 2 : i32
    %208 = arith.addi %c2_i32_49, %arg0 : i32
    %c12_i32_50 = arith.constant 12 : i32
    %209 = arith.muli %208, %c12_i32_50 : i32
    %c0_i32_51 = arith.constant 0 : i32
    %210 = arith.addi %209, %c0_i32_51 : i32
    %211 = arith.index_cast %210 : i32 to index
    %212 = memref.load %arg2[%211] : memref<48xf32, #tpu.memory_space<smem>>
    %c1_i32_52 = arith.constant 1 : i32
    %213 = arith.addi %209, %c1_i32_52 : i32
    %214 = arith.index_cast %213 : i32 to index
    %215 = memref.load %arg2[%214] : memref<48xf32, #tpu.memory_space<smem>>
    %c2_i32_53 = arith.constant 2 : i32
    %216 = arith.addi %209, %c2_i32_53 : i32
    %217 = arith.index_cast %216 : i32 to index
    %218 = memref.load %arg2[%217] : memref<48xf32, #tpu.memory_space<smem>>
    %c3_i32_54 = arith.constant 3 : i32
    %219 = arith.addi %209, %c3_i32_54 : i32
    %220 = arith.index_cast %219 : i32 to index
    %221 = memref.load %arg2[%220] : memref<48xf32, #tpu.memory_space<smem>>
    %c4_i32_55 = arith.constant 4 : i32
    %222 = arith.addi %209, %c4_i32_55 : i32
    %223 = arith.index_cast %222 : i32 to index
    %224 = memref.load %arg2[%223] : memref<48xf32, #tpu.memory_space<smem>>
    %c5_i32_56 = arith.constant 5 : i32
    %225 = arith.addi %209, %c5_i32_56 : i32
    %226 = arith.index_cast %225 : i32 to index
    %227 = memref.load %arg2[%226] : memref<48xf32, #tpu.memory_space<smem>>
    %c6_i32_57 = arith.constant 6 : i32
    %228 = arith.addi %209, %c6_i32_57 : i32
    %229 = arith.index_cast %228 : i32 to index
    %230 = memref.load %arg2[%229] : memref<48xf32, #tpu.memory_space<smem>>
    %c7_i32_58 = arith.constant 7 : i32
    %231 = arith.addi %209, %c7_i32_58 : i32
    %232 = arith.index_cast %231 : i32 to index
    %233 = memref.load %arg2[%232] : memref<48xf32, #tpu.memory_space<smem>>
    %c8_i32_59 = arith.constant 8 : i32
    %234 = arith.addi %209, %c8_i32_59 : i32
    %235 = arith.index_cast %234 : i32 to index
    %236 = memref.load %arg2[%235] : memref<48xf32, #tpu.memory_space<smem>>
    %c9_i32_60 = arith.constant 9 : i32
    %237 = arith.addi %209, %c9_i32_60 : i32
    %238 = arith.index_cast %237 : i32 to index
    %239 = memref.load %arg2[%238] : memref<48xf32, #tpu.memory_space<smem>>
    %c10_i32_61 = arith.constant 10 : i32
    %240 = arith.addi %209, %c10_i32_61 : i32
    %241 = arith.index_cast %240 : i32 to index
    %242 = memref.load %arg2[%241] : memref<48xf32, #tpu.memory_space<smem>>
    %c11_i32_62 = arith.constant 11 : i32
    %243 = arith.addi %209, %c11_i32_62 : i32
    %244 = arith.index_cast %243 : i32 to index
    %245 = memref.load %arg2[%244] : memref<48xf32, #tpu.memory_space<smem>>
    %246 = vector.broadcast %212 : f32 to vector<1x2048xf32>
    %247 = arith.mulf %246, %22 : vector<1x2048xf32>
    %248 = vector.broadcast %215 : f32 to vector<1x2048xf32>
    %249 = arith.mulf %248, %30 : vector<1x2048xf32>
    %250 = arith.addf %247, %249 : vector<1x2048xf32>
    %251 = vector.broadcast %218 : f32 to vector<1x2048xf32>
    %252 = arith.mulf %251, %38 : vector<1x2048xf32>
    %253 = arith.addf %250, %252 : vector<1x2048xf32>
    %254 = vector.broadcast %221 : f32 to vector<1x2048xf32>
    %255 = arith.addf %253, %254 : vector<1x2048xf32>
    %256 = vector.broadcast %224 : f32 to vector<1x2048xf32>
    %257 = arith.mulf %256, %22 : vector<1x2048xf32>
    %258 = vector.broadcast %227 : f32 to vector<1x2048xf32>
    %259 = arith.mulf %258, %30 : vector<1x2048xf32>
    %260 = arith.addf %257, %259 : vector<1x2048xf32>
    %261 = vector.broadcast %230 : f32 to vector<1x2048xf32>
    %262 = arith.mulf %261, %38 : vector<1x2048xf32>
    %263 = arith.addf %260, %262 : vector<1x2048xf32>
    %264 = vector.broadcast %233 : f32 to vector<1x2048xf32>
    %265 = arith.addf %263, %264 : vector<1x2048xf32>
    %266 = vector.broadcast %236 : f32 to vector<1x2048xf32>
    %267 = arith.mulf %266, %22 : vector<1x2048xf32>
    %268 = vector.broadcast %239 : f32 to vector<1x2048xf32>
    %269 = arith.mulf %268, %30 : vector<1x2048xf32>
    %270 = arith.addf %267, %269 : vector<1x2048xf32>
    %271 = vector.broadcast %242 : f32 to vector<1x2048xf32>
    %272 = arith.mulf %271, %38 : vector<1x2048xf32>
    %273 = arith.addf %270, %272 : vector<1x2048xf32>
    %274 = vector.broadcast %245 : f32 to vector<1x2048xf32>
    %275 = arith.addf %273, %274 : vector<1x2048xf32>
    %cst_63 = arith.constant 1.000000e+00 : f32
    %276 = vector.broadcast %cst_63 : f32 to vector<1x2048xf32>
    %277 = arith.addf %255, %276 : vector<1x2048xf32>
    %cst_64 = arith.constant 1.600000e+01 : f32
    %278 = vector.broadcast %cst_64 : f32 to vector<1x2048xf32>
    %279 = arith.mulf %277, %278 : vector<1x2048xf32>
    %cst_65 = arith.constant 1.000000e+00 : f32
    %280 = vector.broadcast %cst_65 : f32 to vector<1x2048xf32>
    %281 = arith.subf %279, %280 : vector<1x2048xf32>
    %cst_66 = arith.constant 5.000000e-01 : f32
    %282 = vector.broadcast %cst_66 : f32 to vector<1x2048xf32>
    %283 = arith.mulf %281, %282 : vector<1x2048xf32>
    %cst_67 = arith.constant 1.000000e+00 : f32
    %284 = vector.broadcast %cst_67 : f32 to vector<1x2048xf32>
    %285 = arith.addf %265, %284 : vector<1x2048xf32>
    %cst_68 = arith.constant 1.600000e+01 : f32
    %286 = vector.broadcast %cst_68 : f32 to vector<1x2048xf32>
    %287 = arith.mulf %285, %286 : vector<1x2048xf32>
    %cst_69 = arith.constant 1.000000e+00 : f32
    %288 = vector.broadcast %cst_69 : f32 to vector<1x2048xf32>
    %289 = arith.subf %287, %288 : vector<1x2048xf32>
    %cst_70 = arith.constant 5.000000e-01 : f32
    %290 = vector.broadcast %cst_70 : f32 to vector<1x2048xf32>
    %291 = arith.mulf %289, %290 : vector<1x2048xf32>
    %cst_71 = arith.constant 1.000000e+00 : f32
    %292 = vector.broadcast %cst_71 : f32 to vector<1x2048xf32>
    %293 = arith.addf %275, %292 : vector<1x2048xf32>
    %cst_72 = arith.constant 1.600000e+01 : f32
    %294 = vector.broadcast %cst_72 : f32 to vector<1x2048xf32>
    %295 = arith.mulf %293, %294 : vector<1x2048xf32>
    %cst_73 = arith.constant 1.000000e+00 : f32
    %296 = vector.broadcast %cst_73 : f32 to vector<1x2048xf32>
    %297 = arith.subf %295, %296 : vector<1x2048xf32>
    %cst_74 = arith.constant 5.000000e-01 : f32
    %298 = vector.broadcast %cst_74 : f32 to vector<1x2048xf32>
    %299 = arith.mulf %297, %298 : vector<1x2048xf32>
    %300 = math.floor %283 : vector<1x2048xf32>
    %301 = arith.subf %283, %300 : vector<1x2048xf32>
    %302 = math.floor %291 : vector<1x2048xf32>
    %303 = arith.subf %291, %302 : vector<1x2048xf32>
    %304 = math.floor %299 : vector<1x2048xf32>
    %305 = arith.subf %299, %304 : vector<1x2048xf32>
    %cst_75 = arith.constant 1.000000e+00 : f32
    %306 = vector.broadcast %cst_75 : f32 to vector<1x2048xf32>
    %307 = arith.subf %306, %301 : vector<1x2048xf32>
    %cst_76 = arith.constant 8.000000e+00 : f32
    %308 = vector.broadcast %cst_76 : f32 to vector<1x2048xf32>
    %309 = arith.cmpf oeq, %300, %308 : vector<1x2048xf32>
    %310 = arith.extui %309 : vector<1x2048xi1> to vector<1x2048xi32>
    %311 = arith.sitofp %310 : vector<1x2048xi32> to vector<1x2048xf32>
    %312 = arith.mulf %307, %311 : vector<1x2048xf32>
    %cst_77 = arith.constant 1.000000e+00 : f32
    %313 = vector.broadcast %cst_77 : f32 to vector<1x2048xf32>
    %314 = arith.addf %300, %313 : vector<1x2048xf32>
    %cst_78 = arith.constant 8.000000e+00 : f32
    %315 = vector.broadcast %cst_78 : f32 to vector<1x2048xf32>
    %316 = arith.cmpf oeq, %314, %315 : vector<1x2048xf32>
    %317 = arith.extui %316 : vector<1x2048xi1> to vector<1x2048xi32>
    %318 = arith.sitofp %317 : vector<1x2048xi32> to vector<1x2048xf32>
    %319 = arith.mulf %301, %318 : vector<1x2048xf32>
    %320 = arith.addf %312, %319 : vector<1x2048xf32>
    %321 = arith.fptosi %304 : vector<1x2048xf32> to vector<1x2048xi32>
    %322 = arith.fptosi %302 : vector<1x2048xf32> to vector<1x2048xi32>
    %cst_79 = arith.constant 1.000000e+00 : f32
    %323 = vector.broadcast %cst_79 : f32 to vector<1x2048xf32>
    %324 = arith.subf %323, %305 : vector<1x2048xf32>
    %325 = arith.mulf %320, %324 : vector<1x2048xf32>
    %326 = arith.mulf %320, %305 : vector<1x2048xf32>
    %cst_80 = arith.constant 1.000000e+00 : f32
    %327 = vector.broadcast %cst_80 : f32 to vector<1x2048xf32>
    %328 = arith.subf %327, %303 : vector<1x2048xf32>
    %329 = vector.broadcast %321 : vector<1x2048xi32> to vector<16x2048xi32>
    %330 = arith.cmpi eq, %39, %329 : vector<16x2048xi32>
    %cst_81 = arith.constant 0.000000e+00 : f32
    %331 = vector.shape_cast %325 : vector<1x2048xf32> to vector<1x2048xf32>
    %332 = vector.broadcast %331 : vector<1x2048xf32> to vector<16x2048xf32>
    %333 = vector.broadcast %cst_81 : f32 to vector<16x2048xf32>
    %334 = arith.select %330, %332, %333 : vector<16x2048xi1>, vector<16x2048xf32>
    %c1_i32_82 = arith.constant 1 : i32
    %335 = vector.broadcast %c1_i32_82 : i32 to vector<1x2048xi32>
    %336 = arith.addi %321, %335 : vector<1x2048xi32>
    %337 = vector.broadcast %336 : vector<1x2048xi32> to vector<16x2048xi32>
    %338 = arith.cmpi eq, %39, %337 : vector<16x2048xi32>
    %cst_83 = arith.constant 0.000000e+00 : f32
    %339 = vector.shape_cast %326 : vector<1x2048xf32> to vector<1x2048xf32>
    %340 = vector.broadcast %339 : vector<1x2048xf32> to vector<16x2048xf32>
    %341 = vector.broadcast %cst_83 : f32 to vector<16x2048xf32>
    %342 = arith.select %338, %340, %341 : vector<16x2048xi1>, vector<16x2048xf32>
    %343 = arith.addf %334, %342 : vector<16x2048xf32>
    %344 = vector.broadcast %322 : vector<1x2048xi32> to vector<16x2048xi32>
    %345 = arith.cmpi eq, %39, %344 : vector<16x2048xi32>
    %cst_84 = arith.constant 0.000000e+00 : f32
    %346 = vector.shape_cast %328 : vector<1x2048xf32> to vector<1x2048xf32>
    %347 = vector.broadcast %346 : vector<1x2048xf32> to vector<16x2048xf32>
    %348 = vector.broadcast %cst_84 : f32 to vector<16x2048xf32>
    %349 = arith.select %345, %347, %348 : vector<16x2048xi1>, vector<16x2048xf32>
    %c1_i32_85 = arith.constant 1 : i32
    %350 = vector.broadcast %c1_i32_85 : i32 to vector<1x2048xi32>
    %351 = arith.addi %322, %350 : vector<1x2048xi32>
    %352 = vector.broadcast %351 : vector<1x2048xi32> to vector<16x2048xi32>
    %353 = arith.cmpi eq, %39, %352 : vector<16x2048xi32>
    %cst_86 = arith.constant 0.000000e+00 : f32
    %354 = vector.shape_cast %303 : vector<1x2048xf32> to vector<1x2048xf32>
    %355 = vector.broadcast %354 : vector<1x2048xf32> to vector<16x2048xf32>
    %356 = vector.broadcast %cst_86 : f32 to vector<16x2048xf32>
    %357 = arith.select %353, %355, %356 : vector<16x2048xi1>, vector<16x2048xf32>
    %358 = arith.addf %349, %357 : vector<16x2048xf32>
    %c0_87 = arith.constant 0 : index
    %c32 = arith.constant 32 : index
    %c0_88 = arith.constant 0 : index
    %359 = vector.load %arg3[%c0_87, %c32, %c0_88] : memref<1x64x16xf32, #tpu.memory_space<vmem>>, vector<1x32x16xf32>
    %360 = vector.shape_cast %359 : vector<1x32x16xf32> to vector<32x16xf32>
    %cst_89 = arith.constant dense<0.000000e+00> : vector<32x2048xf32>
    %361 = tpu.matmul %360, %343, %cst_89 {dimension_numbers = #tpu.dot_dimension_numbers<[1], [0], [0], [1], [0, 0, 1, 1], [], []>} : vector<32x16xf32>, vector<16x2048xf32>, vector<32x2048xf32> -> vector<32x2048xf32>
    %362 = vector.extract_strided_slice %361 {offsets = [0, 0], sizes = [16, 2048], strides = [1, 1]} : vector<32x2048xf32> to vector<16x2048xf32>
    %363 = arith.mulf %362, %358 : vector<16x2048xf32>
    %cst_90 = arith.constant dense<0.000000e+00> : vector<2048xf32>
    %364 = vector.multi_reduction <add>, %363, %cst_90 [0] : vector<16x2048xf32> to vector<2048xf32>
    %365 = vector.shape_cast %364 : vector<2048xf32> to vector<1x2048xf32>
    %c0_91 = arith.constant 0 : index
    %c2 = arith.constant 2 : index
    %c0_92 = arith.constant 0 : index
    %366 = vector.load %arg4[%c0_91, %c2, %c0_92] : memref<1x4x2048xf32, #tpu.memory_space<vmem>>, vector<1x1x2048xf32>
    %367 = vector.shape_cast %366 : vector<1x1x2048xf32> to vector<1x2048xf32>
    %368 = vector.shape_cast %365 : vector<1x2048xf32> to vector<1x1x2048xf32>
    tpu.vector_store %arg4[%c0_91, %c2, %c0_92], %368 {strides = array<i32>} : memref<1x4x2048xf32, #tpu.memory_space<vmem>>, vector<1x1x2048xf32>,
    %369 = vector.extract_strided_slice %361 {offsets = [16, 0], sizes = [16, 2048], strides = [1, 1]} : vector<32x2048xf32> to vector<16x2048xf32>
    %370 = arith.mulf %369, %358 : vector<16x2048xf32>
    %cst_93 = arith.constant dense<0.000000e+00> : vector<2048xf32>
    %371 = vector.multi_reduction <add>, %370, %cst_93 [0] : vector<16x2048xf32> to vector<2048xf32>
    %372 = vector.shape_cast %371 : vector<2048xf32> to vector<1x2048xf32>
    %c0_94 = arith.constant 0 : index
    %c3 = arith.constant 3 : index
    %c0_95 = arith.constant 0 : index
    %373 = vector.load %arg4[%c0_94, %c3, %c0_95] : memref<1x4x2048xf32, #tpu.memory_space<vmem>>, vector<1x1x2048xf32>
    %374 = vector.shape_cast %373 : vector<1x1x2048xf32> to vector<1x2048xf32>
    %375 = vector.shape_cast %372 : vector<1x2048xf32> to vector<1x1x2048xf32>
    tpu.vector_store %arg4[%c0_94, %c3, %c0_95], %375 {strides = array<i32>} : memref<1x4x2048xf32, #tpu.memory_space<vmem>>, vector<1x1x2048xf32>,
    return
  }
  func.func @transform_0(%arg0: i32, %arg1: i32) -> i32 {
    %c0_i32 = arith.constant 0 : i32
    %c0_i32_0 = arith.constant 0 : i32
    return %c0_i32 : i32
  }
  func.func @transform_1(%arg0: i32, %arg1: i32) -> (i32, i32, i32) {
    %c0_i32 = arith.constant 0 : i32
    %c0_i32_0 = arith.constant 0 : i32
    %c0_i32_1 = arith.constant 0 : i32
    return %arg0, %c0_i32, %c0_i32_0 : i32, i32, i32
  }
  func.func @transform_2(%arg0: i32, %arg1: i32) -> (i32, i32, i32) {
    %c0_i32 = arith.constant 0 : i32
    %c0_i32_0 = arith.constant 0 : i32
    return %arg0, %c0_i32, %arg1 : i32, i32, i32
  }
}

</mosaic_0001>

<llo_original>
// kernel: tpu_custom_call.1
$region0: #{tpu_custom_call.1}
  #allocation0 [shape = 'u32[]', space=smem, size = 0x4, offset = 0x4, fixed_abs, tag = 'smem constant byte address 0x4 - core index']
  #allocation1 [shape = 'u32[72,128]{1,0:T(1,128)}', space=vmem, size = 0x9000, scoped, tag = 'internal scratch']
  %s0 = inlined_call_operand.vmem [shape: f32[48], index: 0, kind: input, shape index: {}]
  %s1 = inlined_call_operand.vmem [shape: f32[2,64,16], index: 1, kind: input, shape index: {}]
  %s2 = inlined_call_operand.hbm [shape: f32[2,4,4096], index: 2, kind: output, shape index: {}]
  %s3 = sld [smem:[#allocation0]]
  $region45: #{tpu_custom_call.1} parent=0
    _
  %s5 = ssub.s32 1, %s3
  %s6 = scalar_select 0, %s5, %s3
  $region1: #{tpu_custom_call.1} parent=0
    #allocation2 [shape = 'u8[512]{0}', space=smem, size = 0x200, scoped, tag = 'input window, operand 0, single buffered']
    #allocation3 [shape = 's32[2]{0}', space=sflag, size = 0x8, scoped, tag = 'scoped memory for tpu_custom_call.1']
    #allocation4 [shape = 's32[2]{0}', space=sflag, size = 0x8, scoped, tag = 'scoped memory for tpu_custom_call.1']
    #allocation5 [shape = 'u8[65536]{0}', space=vmem, size = 0x10000, scoped, tag = 'output window, operand 0']
    %7 = vsyncpa [#allocation4], 0
    %8 = vsyncpa [#allocation3], 0
    %s9 = scalar_lea.sflag [#allocation3], 1
    %10 = vsyncpa %s9, 0
    loop: start=0, step=1, limit=6
    $region2: #{tpu_custom_call.1} parent=1 // loop_pre_header
      _
    $region3: #{tpu_custom_call.1} parent=1 // loop_header
      %s12 = sphi 0, %s16
      %p13 = scmp.ge.s32.totalorder %s12, 6
      %s19 = sphi 0, %s31
      %s20 = sphi 0, %s27
      %s21 = sphi 0, %s19
      %s22 = sphi 0, %s20
      %s23 = sphi 0, %s21
      %s24 = sphi 0, %s22
      %s32 = sphi 0, %s32
      %s34 = sphi 0, %s32
      %s35 = sphi 0, %s34
      %s49 = sphi 0, %s35
      %s55 = sphi 0, %s57
      %s58 = sphi 0, %s55
      %s59 = sphi 0, %s58
      %s75 = sphi 0, %s59
      %s83 = sphi 0, %s85
      %s86 = sphi 0, %s83
      %s87 = sphi 0, %s86
      %s103 = sphi 0, %s87
    $region4: #{tpu_custom_call.1} parent=1 // loop_header_branch
      %15 = sbr.rel (%p13) target = $region8
    $region5: #{tpu_custom_call.1} parent=1 // loop_body
      %s17 = ssub.s32 %s12, 1
      %s18 = ssub.s32 %s12, 2
      %s25 = sadd.s32 1, %s20
      %p26 = scmp.ge.s32.totalorder %s25, 2
      %s27 = scalar_select %p26, 0, %s25
      %s28 = sadd.s32 1, %s19
      %s29 = scalar_select %p26, %s28, %s19
      %p30 = scmp.ge.s32.totalorder %s29, 2
      %s31 = scalar_select %p30, 0, %s29
      %s33 = sadd.s32 %s32, 1
      %p36 = scmp.eq.s32.totalorder %s12, 3
      %p37 = scmp.ne.s32.totalorder %s32, %s34
      %p38 = scmp.eq.s32.totalorder %s12, 0
      %p39 = por %p37, %p38
      %p40 = scmp.ne.s32.totalorder %s32, %s34
      %p41 = scmp.eq.s32.totalorder %s17, 3
      %p42 = por %p40, %p41
      %p43 = scmp.ne.s32.totalorder %s34, %s35
      %p44 = scmp.eq.s32.totalorder %s17, 0
      %p45 = por %p43, %p44
      %p46 = scmp.ne.s32.totalorder %s34, %s35
      %p47 = scmp.eq.s32.totalorder %s18, 3
      %p48 = por %p46, %p47
      %p50 = scmp.ne.s32.totalorder %s35, %s49
      %p51 = scmp.eq.s32.totalorder %s18, 0
      %p52 = por %p50, %p51
      %s53 = ssub.s32 %s19, %s31
      %p54 = scmp.eq.s32.totalorder %s53, 0
      %s56 = sadd.s32 %s55, 1
      %s57 = scalar_select %p54, %s55, %s56
      %p60 = pneg %p54
      %p61 = scmp.eq.s32.totalorder %s12, 3
      %p62 = por %p60, %p61
      %p63 = scmp.ne.s32.totalorder %s55, %s58
      %p64 = scmp.eq.s32.totalorder %s12, 0
      %p65 = por %p63, %p64
      %p66 = scmp.ne.s32.totalorder %s55, %s58
      %p67 = scmp.eq.s32.totalorder %s17, 3
      %p68 = por %p66, %p67
      %p69 = scmp.ne.s32.totalorder %s58, %s59
      %p70 = scmp.eq.s32.totalorder %s17, 0
      %p71 = por %p69, %p70
      %p72 = scmp.ne.s32.totalorder %s58, %s59
      %p73 = scmp.eq.s32.totalorder %s18, 3
      %p74 = por %p72, %p73
      %p76 = scmp.ne.s32.totalorder %s59, %s75
      %p77 = scmp.eq.s32.totalorder %s18, 0
      %p78 = por %p76, %p77
      %s79 = ssub.s32 %s19, %s31
      %s80 = ssub.s32 %s20, %s27
      %s81 = sor.u32 %s79, %s80
      %p82 = scmp.eq.s32.totalorder %s81, 0
      %s84 = sadd.s32 %s83, 1
      %s85 = scalar_select %p82, %s83, %s84
      %p88 = pneg %p82
      %p89 = scmp.eq.s32.totalorder %s12, 3
      %p90 = por %p88, %p89
      %p91 = scmp.ne.s32.totalorder %s83, %s86
      %p92 = scmp.eq.s32.totalorder %s12, 0
      %p93 = por %p91, %p92
      %p94 = scmp.ne.s32.totalorder %s83, %s86
      %p95 = scmp.eq.s32.totalorder %s17, 3
      %p96 = por %p94, %p95
      %p97 = scmp.ne.s32.totalorder %s86, %s87
      %p98 = scmp.eq.s32.totalorder %s17, 0
      %p99 = por %p97, %p98
      %p100 = scmp.ne.s32.totalorder %s86, %s87
      %p101 = scmp.eq.s32.totalorder %s18, 3
      %p102 = por %p100, %p101
      %p104 = scmp.ne.s32.totalorder %s87, %s103
      %p105 = scmp.eq.s32.totalorder %s18, 0
      %p106 = por %p104, %p105
      %p107 = scmp.le.s32.totalorder 1, %s12
      %p108 = scmp.lt.s32.totalorder %s12, 5
      %p109 = pnand %p107, %p108
      %p110 = pneg %p109
      // Predicated region
      $region9: #{tpu_custom_call.1} parent=5 // pred_check
        _
      $region10: #{tpu_custom_call.1} parent=5 // pred_check_branch
        %112 = sbr.rel (%p109) target = $region12
      $region11: #{tpu_custom_call.1} parent=5 // pred_region
        %s113 = ssub.s32 %s12, 1
        // Predicated region
        $region13: #{tpu_custom_call.1} parent=11 // pred_check
          %p114 = pneg %p45
        $region14: #{tpu_custom_call.1} parent=11 // pred_check_branch
          %116 = sbr.rel (%p114) target = $region16
        $region15: #{tpu_custom_call.1} parent=11 // pred_region
          %118 = vsyncadd [#allocation4], 0
          %s120 = sshll.u32 %s0, 4
          %s121 = int_to_ptr.vmem [resolvable:$true] %s120
          %123 = dma.vmem_to_smem %s121, 16, [#allocation2], [#allocation4]
        $region16: #{tpu_custom_call.1} parent=11 // pred_fallthru
          _
      $region12: #{tpu_custom_call.1} parent=5 // pred_fallthru
        _
      %p124 = scmp.lt.s32.totalorder %s12, 4
      // Predicated region
      $region17: #{tpu_custom_call.1} parent=5 // pred_check
        %p125 = pneg %p124
      $region18: #{tpu_custom_call.1} parent=5 // pred_check_branch
        %127 = sbr.rel (%p125) target = $region20
      $region19: #{tpu_custom_call.1} parent=5 // pred_region
        // Predicated region
        $region21: #{tpu_custom_call.1} parent=19 // pred_check
          %p128 = pneg %p65
        $region22: #{tpu_custom_call.1} parent=19 // pred_check_branch
          %130 = sbr.rel (%p128) target = $region24
        $region23: #{tpu_custom_call.1} parent=19 // pred_region
          %p131 = scmp.lt.s32.totalorder %s19, 1
          %s132 = scalar_select %p131, %s19, 1
          %s133 = smul.addr %s132, 8
          %s134 = smul.addr %s133, 8
          %s135 = scalar_lea.vmem %s1, %s134
        $region24: #{tpu_custom_call.1} parent=19 // pred_fallthru
          _
      $region20: #{tpu_custom_call.1} parent=5 // pred_fallthru
        _
      %p136 = scmp.le.s32.totalorder 1, %s12
      %p137 = scmp.lt.s32.totalorder %s12, 5
      %p138 = pnand %p136, %p137
      %p139 = pneg %p138
      // Predicated region
      $region25: #{tpu_custom_call.1} parent=5 // pred_check
        _
      $region26: #{tpu_custom_call.1} parent=5 // pred_check_branch
        %141 = sbr.rel (%p138) target = $region28
      $region27: #{tpu_custom_call.1} parent=5 // pred_region
        %s142 = ssub.s32 %s12, 1
        // Predicated region
        $region29: #{tpu_custom_call.1} parent=27 // pred_check
          %p143 = pneg %p45
        $region30: #{tpu_custom_call.1} parent=27 // pred_check_branch
          %145 = sbr.rel (%p143) target = $region32
        $region31: #{tpu_custom_call.1} parent=27 // pred_region
          %147 = dma.done [#allocation4], 16
        $region32: #{tpu_custom_call.1} parent=27 // pred_fallthru
          _
        %148 = sfence
        %p149 = pneg %p45
        %p150 = pneg %p42
        %p151 = scmp.lt.s32.totalorder %s21, 1
        %s152 = scalar_select %p151, %s21, 1
        %s153 = smul.addr %s152, 8
        %s154 = smul.addr %s153, 8
        %s155 = scalar_lea.vmem %s1, %s154
        %p156 = pneg %p71
        %p157 = pneg %p68
        %p158 = pneg %p99
        %p159 = pneg %p96
        %s160 = sand.u32 %s86, 1
        %s161 = scalar_lea.sflag [#allocation3], %s160
        %s162 = sand.u32 %s86, 1
        %s163 = smul.addr %s162, 64
        %s164 = scalar_lea.vmem [#allocation5], %s163
        %p165 = scmp.lt.s32.totalorder %s21, 1
        %s166 = scalar_select %p165, %s21, 1
        %s167 = smul.addr %s166, 8
        %s168 = smul.addr %s167, 8
        %s169 = scalar_lea.vmem %s1, %s168
        %s170 = smul.u32 16, %s22
        %v171 = vlaneseq
        %v172 = vand.u32 %v171, 127
        %v173 = vadd.s32 %v172, 128
        %v174 = vadd.s32 %v172, 256
        %v175 = vadd.s32 %v172, 384
        %v176 = vadd.s32 %v172, 512
        %v177 = vadd.s32 %v172, 640
        %v178 = vadd.s32 %v172, 768
        %v179 = vadd.s32 %v172, 896
        %v180 = vadd.s32 %v172, 1024
        %v181 = vadd.s32 %v172, 1152
        %v182 = vadd.s32 %v172, 1280
        %v183 = vadd.s32 %v172, 1408
        %v184 = vadd.s32 %v172, 1536
        %v185 = vadd.s32 %v172, 1664
        %v186 = vadd.s32 %v172, 1792
        %v187 = vadd.s32 %v172, 1920
        %s188 = smul.u32 %s22, 2048
        %v189 = vstv %s188
        %v190 = vadd.s32 %v172, %v189
        %v191 = vadd.s32 %v173, %v189
        %v192 = vadd.s32 %v174, %v189
        %v193 = vadd.s32 %v175, %v189
        %v194 = vadd.s32 %v176, %v189
        %v195 = vadd.s32 %v177, %v189
        %v196 = vadd.s32 %v178, %v189
        %v197 = vadd.s32 %v179, %v189
        %v198 = vadd.s32 %v180, %v189
        %v199 = vadd.s32 %v181, %v189
        %v200 = vadd.s32 %v182, %v189
        %v201 = vadd.s32 %v183, %v189
        %v202 = vadd.s32 %v184, %v189
        %v203 = vadd.s32 %v185, %v189
        %v204 = vadd.s32 %v186, %v189
        %v205 = vadd.s32 %v187, %v189
        %v206 = vshra.s32 %v190, 8
        %v207 = vshra.s32 %v191, 8
        %v208 = vshra.s32 %v192, 8
        %v209 = vshra.s32 %v193, 8
        %v210 = vshra.s32 %v194, 8
        %v211 = vshra.s32 %v195, 8
        %v212 = vshra.s32 %v196, 8
        %v213 = vshra.s32 %v197, 8
        %v214 = vshra.s32 %v198, 8
        %v215 = vshra.s32 %v199, 8
        %v216 = vshra.s32 %v200, 8
        %v217 = vshra.s32 %v201, 8
        %v218 = vshra.s32 %v202, 8
        %v219 = vshra.s32 %v203, 8
        %v220 = vshra.s32 %v204, 8
        %v221 = vshra.s32 %v205, 8
        %v222 = vcvt.s32.f32 %v206
        %v223 = vcvt.s32.f32 %v207
        %v224 = vcvt.s32.f32 %v208
        %v225 = vcvt.s32.f32 %v209
        %v226 = vcvt.s32.f32 %v210
        %v227 = vcvt.s32.f32 %v211
        %v228 = vcvt.s32.f32 %v212
        %v229 = vcvt.s32.f32 %v213
        %v230 = vcvt.s32.f32 %v214
        %v231 = vcvt.s32.f32 %v215
        %v232 = vcvt.s32.f32 %v216
        %v233 = vcvt.s32.f32 %v217
        %v234 = vcvt.s32.f32 %v218
        %v235 = vcvt.s32.f32 %v219
        %v236 = vcvt.s32.f32 %v220
        %v237 = vcvt.s32.f32 %v221
        %v238 = vshra.s32 %v190, 4
        %v239 = vshra.s32 %v191, 4
        %v240 = vshra.s32 %v192, 4
        %v241 = vshra.s32 %v193, 4
        %v242 = vshra.s32 %v194, 4
        %v243 = vshra.s32 %v195, 4
        %v244 = vshra.s32 %v196, 4
        %v245 = vshra.s32 %v197, 4
        %v246 = vshra.s32 %v198, 4
        %v247 = vshra.s32 %v199, 4
        %v248 = vshra.s32 %v200, 4
        %v249 = vshra.s32 %v201, 4
        %v250 = vshra.s32 %v202, 4
        %v251 = vshra.s32 %v203, 4
        %v252 = vshra.s32 %v204, 4
        %v253 = vshra.s32 %v205, 4
        %v254 = vand.u32 %v238, 15
        %v255 = vand.u32 %v239, 15
        %v256 = vand.u32 %v240, 15
        %v257 = vand.u32 %v241, 15
        %v258 = vand.u32 %v242, 15
        %v259 = vand.u32 %v243, 15
        %v260 = vand.u32 %v244, 15
        %v261 = vand.u32 %v245, 15
        %v262 = vand.u32 %v246, 15
        %v263 = vand.u32 %v247, 15
        %v264 = vand.u32 %v248, 15
        %v265 = vand.u32 %v249, 15
        %v266 = vand.u32 %v250, 15
        %v267 = vand.u32 %v251, 15
        %v268 = vand.u32 %v252, 15
        %v269 = vand.u32 %v253, 15
        %v270 = vcvt.s32.f32 %v254
        %v271 = vcvt.s32.f32 %v255
        %v272 = vcvt.s32.f32 %v256
        %v273 = vcvt.s32.f32 %v257
        %v274 = vcvt.s32.f32 %v258
        %v275 = vcvt.s32.f32 %v259
        %v276 = vcvt.s32.f32 %v260
        %v277 = vcvt.s32.f32 %v261
        %v278 = vcvt.s32.f32 %v262
        %v279 = vcvt.s32.f32 %v263
        %v280 = vcvt.s32.f32 %v264
        %v281 = vcvt.s32.f32 %v265
        %v282 = vcvt.s32.f32 %v266
        %v283 = vcvt.s32.f32 %v267
        %v284 = vcvt.s32.f32 %v268
        %v285 = vcvt.s32.f32 %v269
        %v286 = vand.u32 %v190, 15
        %v287 = vand.u32 %v191, 15
        %v288 = vand.u32 %v192, 15
        %v289 = vand.u32 %v193, 15
        %v290 = vand.u32 %v194, 15
        %v291 = vand.u32 %v195, 15
        %v292 = vand.u32 %v196, 15
        %v293 = vand.u32 %v197, 15
        %v294 = vand.u32 %v198, 15
        %v295 = vand.u32 %v199, 15
        %v296 = vand.u32 %v200, 15
        %v297 = vand.u32 %v201, 15
        %v298 = vand.u32 %v202, 15
        %v299 = vand.u32 %v203, 15
        %v300 = vand.u32 %v204, 15
        %v301 = vand.u32 %v205, 15
        %v302 = vcvt.s32.f32 %v286
        %v303 = vcvt.s32.f32 %v287
        %v304 = vcvt.s32.f32 %v288
        %v305 = vcvt.s32.f32 %v289
        %v306 = vcvt.s32.f32 %v290
        %v307 = vcvt.s32.f32 %v291
        %v308 = vcvt.s32.f32 %v292
        %v309 = vcvt.s32.f32 %v293
        %v310 = vcvt.s32.f32 %v294
        %v311 = vcvt.s32.f32 %v295
        %v312 = vcvt.s32.f32 %v296
        %v313 = vcvt.s32.f32 %v297
        %v314 = vcvt.s32.f32 %v298
        %v315 = vcvt.s32.f32 %v299
        %v316 = vcvt.s32.f32 %v300
        %v317 = vcvt.s32.f32 %v301
        %v318 = vmul.f32 %v302, 2.0
        %v319 = vmul.f32 %v303, 2.0
        %v320 = vmul.f32 %v304, 2.0
        %v321 = vmul.f32 %v305, 2.0
        %v322 = vmul.f32 %v306, 2.0
        %v323 = vmul.f32 %v307, 2.0
        %v324 = vmul.f32 %v308, 2.0
        %v325 = vmul.f32 %v309, 2.0
        %v326 = vmul.f32 %v310, 2.0
        %v327 = vmul.f32 %v311, 2.0
        %v328 = vmul.f32 %v312, 2.0
        %v329 = vmul.f32 %v313, 2.0
        %v330 = vmul.f32 %v314, 2.0
        %v331 = vmul.f32 %v315, 2.0
        %v332 = vmul.f32 %v316, 2.0
        %v333 = vmul.f32 %v317, 2.0
        %v334 = vadd.f32 %v318, 1.0
        %v335 = vadd.f32 %v319, 1.0
        %v336 = vadd.f32 %v320, 1.0
        %v337 = vadd.f32 %v321, 1.0
        %v338 = vadd.f32 %v322, 1.0
        %v339 = vadd.f32 %v323, 1.0
        %v340 = vadd.f32 %v324, 1.0
        %v341 = vadd.f32 %v325, 1.0
        %v342 = vadd.f32 %v326, 1.0
        %v343 = vadd.f32 %v327, 1.0
        %v344 = vadd.f32 %v328, 1.0
        %v345 = vadd.f32 %v329, 1.0
        %v346 = vadd.f32 %v330, 1.0
        %v347 = vadd.f32 %v331, 1.0
        %v348 = vadd.f32 %v332, 1.0
        %v349 = vadd.f32 %v333, 1.0
        %v350 = vmul.f32 %v334, 0.0625
        %v351 = vmul.f32 %v335, 0.0625
        %v352 = vmul.f32 %v336, 0.0625
        %v353 = vmul.f32 %v337, 0.0625
        %v354 = vmul.f32 %v338, 0.0625
        %v355 = vmul.f32 %v339, 0.0625
        %v356 = vmul.f32 %v340, 0.0625
        %v357 = vmul.f32 %v341, 0.0625
        %v358 = vmul.f32 %v342, 0.0625
        %v359 = vmul.f32 %v343, 0.0625
        %v360 = vmul.f32 %v344, 0.0625
        %v361 = vmul.f32 %v345, 0.0625
        %v362 = vmul.f32 %v346, 0.0625
        %v363 = vmul.f32 %v347, 0.0625
        %v364 = vmul.f32 %v348, 0.0625
        %v365 = vmul.f32 %v349, 0.0625
        %v366 = vsub.f32 %v350, 1.0
        %v367 = vsub.f32 %v351, 1.0
        %v368 = vsub.f32 %v352, 1.0
        %v369 = vsub.f32 %v353, 1.0
        %v370 = vsub.f32 %v354, 1.0
        %v371 = vsub.f32 %v355, 1.0
        %v372 = vsub.f32 %v356, 1.0
        %v373 = vsub.f32 %v357, 1.0
        %v374 = vsub.f32 %v358, 1.0
        %v375 = vsub.f32 %v359, 1.0
        %v376 = vsub.f32 %v360, 1.0
        %v377 = vsub.f32 %v361, 1.0
        %v378 = vsub.f32 %v362, 1.0
        %v379 = vsub.f32 %v363, 1.0
        %v380 = vsub.f32 %v364, 1.0
        %v381 = vsub.f32 %v365, 1.0
        %v382 = vmul.f32 %v270, 2.0
        %v383 = vmul.f32 %v271, 2.0
        %v384 = vmul.f32 %v272, 2.0
        %v385 = vmul.f32 %v273, 2.0
        %v386 = vmul.f32 %v274, 2.0
        %v387 = vmul.f32 %v275, 2.0
        %v388 = vmul.f32 %v276, 2.0
        %v389 = vmul.f32 %v277, 2.0
        %v390 = vmul.f32 %v278, 2.0
        %v391 = vmul.f32 %v279, 2.0
        %v392 = vmul.f32 %v280, 2.0
        %v393 = vmul.f32 %v281, 2.0
        %v394 = vmul.f32 %v282, 2.0
        %v395 = vmul.f32 %v283, 2.0
        %v396 = vmul.f32 %v284, 2.0
        %v397 = vmul.f32 %v285, 2.0
        %v398 = vadd.f32 %v382, 1.0
        %v399 = vadd.f32 %v383, 1.0
        %v400 = vadd.f32 %v384, 1.0
        %v401 = vadd.f32 %v385, 1.0
        %v402 = vadd.f32 %v386, 1.0
        %v403 = vadd.f32 %v387, 1.0
        %v404 = vadd.f32 %v388, 1.0
        %v405 = vadd.f32 %v389, 1.0
        %v406 = vadd.f32 %v390, 1.0
        %v407 = vadd.f32 %v391, 1.0
        %v408 = vadd.f32 %v392, 1.0
        %v409 = vadd.f32 %v393, 1.0
        %v410 = vadd.f32 %v394, 1.0
        %v411 = vadd.f32 %v395, 1.0
        %v412 = vadd.f32 %v396, 1.0
        %v413 = vadd.f32 %v397, 1.0
        %v414 = vmul.f32 %v398, 0.0625
        %v415 = vmul.f32 %v399, 0.0625
        %v416 = vmul.f32 %v400, 0.0625
        %v417 = vmul.f32 %v401, 0.0625
        %v418 = vmul.f32 %v402, 0.0625
        %v419 = vmul.f32 %v403, 0.0625
        %v420 = vmul.f32 %v404, 0.0625
        %v421 = vmul.f32 %v405, 0.0625
        %v422 = vmul.f32 %v406, 0.0625
        %v423 = vmul.f32 %v407, 0.0625
        %v424 = vmul.f32 %v408, 0.0625
        %v425 = vmul.f32 %v409, 0.0625
        %v426 = vmul.f32 %v410, 0.0625
        %v427 = vmul.f32 %v411, 0.0625
        %v428 = vmul.f32 %v412, 0.0625
        %v429 = vmul.f32 %v413, 0.0625
        %v430 = vsub.f32 %v414, 1.0
        %v431 = vsub.f32 %v415, 1.0
        %v432 = vsub.f32 %v416, 1.0
        %v433 = vsub.f32 %v417, 1.0
        %v434 = vsub.f32 %v418, 1.0
        %v435 = vsub.f32 %v419, 1.0
        %v436 = vsub.f32 %v420, 1.0
        %v437 = vsub.f32 %v421, 1.0
        %v438 = vsub.f32 %v422, 1.0
        %v439 = vsub.f32 %v423, 1.0
        %v440 = vsub.f32 %v424, 1.0
        %v441 = vsub.f32 %v425, 1.0
        %v442 = vsub.f32 %v426, 1.0
        %v443 = vsub.f32 %v427, 1.0
        %v444 = vsub.f32 %v428, 1.0
        %v445 = vsub.f32 %v429, 1.0
        %v446 = vmul.f32 %v222, 2.0
        %v447 = vmul.f32 %v223, 2.0
        %v448 = vmul.f32 %v224, 2.0
        %v449 = vmul.f32 %v225, 2.0
        %v450 = vmul.f32 %v226, 2.0
        %v451 = vmul.f32 %v227, 2.0
        %v452 = vmul.f32 %v228, 2.0
        %v453 = vmul.f32 %v229, 2.0
        %v454 = vmul.f32 %v230, 2.0
        %v455 = vmul.f32 %v231, 2.0
        %v456 = vmul.f32 %v232, 2.0
        %v457 = vmul.f32 %v233, 2.0
        %v458 = vmul.f32 %v234, 2.0
        %v459 = vmul.f32 %v235, 2.0
        %v460 = vmul.f32 %v236, 2.0
        %v461 = vmul.f32 %v237, 2.0
        %v462 = vadd.f32 %v446, 1.0
        %v463 = vadd.f32 %v447, 1.0
        %v464 = vadd.f32 %v448, 1.0
        %v465 = vadd.f32 %v449, 1.0
        %v466 = vadd.f32 %v450, 1.0
        %v467 = vadd.f32 %v451, 1.0
        %v468 = vadd.f32 %v452, 1.0
        %v469 = vadd.f32 %v453, 1.0
        %v470 = vadd.f32 %v454, 1.0
        %v471 = vadd.f32 %v455, 1.0
        %v472 = vadd.f32 %v456, 1.0
        %v473 = vadd.f32 %v457, 1.0
        %v474 = vadd.f32 %v458, 1.0
        %v475 = vadd.f32 %v459, 1.0
        %v476 = vadd.f32 %v460, 1.0
        %v477 = vadd.f32 %v461, 1.0
        %v478 = vmul.f32 %v462, 0.0625
        %v479 = vmul.f32 %v463, 0.0625
        %v480 = vmul.f32 %v464, 0.0625
        %v481 = vmul.f32 %v465, 0.0625
        %v482 = vmul.f32 %v466, 0.0625
        %v483 = vmul.f32 %v467, 0.0625
        %v484 = vmul.f32 %v468, 0.0625
        %v485 = vmul.f32 %v469, 0.0625
        %v486 = vmul.f32 %v470, 0.0625
        %v487 = vmul.f32 %v471, 0.0625
        %v488 = vmul.f32 %v472, 0.0625
        %v489 = vmul.f32 %v473, 0.0625
        %v490 = vmul.f32 %v474, 0.0625
        %v491 = vmul.f32 %v475, 0.0625
        %v492 = vmul.f32 %v476, 0.0625
        %v493 = vmul.f32 %v477, 0.0625
        %v494 = vsub.f32 %v478, 1.0
        %v495 = vsub.f32 %v479, 1.0
        %v496 = vsub.f32 %v480, 1.0
        %v497 = vsub.f32 %v481, 1.0
        %v498 = vsub.f32 %v482, 1.0
        %v499 = vsub.f32 %v483, 1.0
        %v500 = vsub.f32 %v484, 1.0
        %v501 = vsub.f32 %v485, 1.0
        %v502 = vsub.f32 %v486, 1.0
        %v503 = vsub.f32 %v487, 1.0
        %v504 = vsub.f32 %v488, 1.0
        %v505 = vsub.f32 %v489, 1.0
        %v506 = vsub.f32 %v490, 1.0
        %v507 = vsub.f32 %v491, 1.0
        %v508 = vsub.f32 %v492, 1.0
        %v509 = vsub.f32 %v493, 1.0
        %v510 = vlaneseq
        %v511 = vshrl.u32 %v510, 7
        %v512 = vadd.s32 %v511, 8
        %s513 = smul.u32 %s21, 12
        %s514 = sld [smem:[#allocation2 + %s513]]
        %s515 = sadd.s32 %s513, 1
        %s516 = sld [smem:[#allocation2 + %s515]]
        %s517 = sadd.s32 %s513, 2
        %s518 = sld [smem:[#allocation2 + %s517]]
        %s519 = sadd.s32 %s513, 3
        %s520 = sld [smem:[#allocation2 + %s519]]
        %s521 = sadd.s32 %s513, 4
        %s522 = sld [smem:[#allocation2 + %s521]]
        %s523 = sadd.s32 %s513, 5
        %s524 = sld [smem:[#allocation2 + %s523]]
        %s525 = sadd.s32 %s513, 6
        %s526 = sld [smem:[#allocation2 + %s525]]
        %s527 = sadd.s32 %s513, 7
        %s528 = sld [smem:[#allocation2 + %s527]]
        %s529 = sadd.s32 %s513, 8
        %s530 = sld [smem:[#allocation2 + %s529]]
        %s531 = sadd.s32 %s513, 9
        %s532 = sld [smem:[#allocation2 + %s531]]
        %s533 = sadd.s32 %s513, 10
        %s534 = sld [smem:[#allocation2 + %s533]]
        %s535 = sadd.s32 %s513, 11
        %s536 = sld [smem:[#allocation2 + %s535]]
        %v537 = vstv %s514
        %v538 = vmul.f32 %v537, %v366
        %v539 = vmul.f32 %v537, %v367
        %v540 = vmul.f32 %v537, %v368
        %v541 = vmul.f32 %v537, %v369
        %v542 = vmul.f32 %v537, %v370
        %v543 = vmul.f32 %v537, %v371
        %v544 = vmul.f32 %v537, %v372
        %v545 = vmul.f32 %v537, %v373
        %v546 = vmul.f32 %v537, %v374
        %v547 = vmul.f32 %v537, %v375
        %v548 = vmul.f32 %v537, %v376
        %v549 = vmul.f32 %v537, %v377
        %v550 = vmul.f32 %v537, %v378
        %v551 = vmul.f32 %v537, %v379
        %v552 = vmul.f32 %v537, %v380
        %v553 = vmul.f32 %v537, %v381
        %v554 = vstv %s516
        %v555 = vmul.f32 %v554, %v430
        %v556 = vmul.f32 %v554, %v431
        %v557 = vmul.f32 %v554, %v432
        %v558 = vmul.f32 %v554, %v433
        %v559 = vmul.f32 %v554, %v434
        %v560 = vmul.f32 %v554, %v435
        %v561 = vmul.f32 %v554, %v436
        %v562 = vmul.f32 %v554, %v437
        %v563 = vmul.f32 %v554, %v438
        %v564 = vmul.f32 %v554, %v439
        %v565 = vmul.f32 %v554, %v440
        %v566 = vmul.f32 %v554, %v441
        %v567 = vmul.f32 %v554, %v442
        %v568 = vmul.f32 %v554, %v443
        %v569 = vmul.f32 %v554, %v444
        %v570 = vmul.f32 %v554, %v445
        %v571 = vadd.f32 %v538, %v555
        %v572 = vadd.f32 %v539, %v556
        %v573 = vadd.f32 %v540, %v557
        %v574 = vadd.f32 %v541, %v558
        %v575 = vadd.f32 %v542, %v559
        %v576 = vadd.f32 %v543, %v560
        %v577 = vadd.f32 %v544, %v561
        %v578 = vadd.f32 %v545, %v562
        %v579 = vadd.f32 %v546, %v563
        %v580 = vadd.f32 %v547, %v564
        %v581 = vadd.f32 %v548, %v565
        %v582 = vadd.f32 %v549, %v566
        %v583 = vadd.f32 %v550, %v567
        %v584 = vadd.f32 %v551, %v568
        %v585 = vadd.f32 %v552, %v569
        %v586 = vadd.f32 %v553, %v570
        %v587 = vstv %s518
        %v588 = vmul.f32 %v587, %v494
        %v589 = vmul.f32 %v587, %v495
        %v590 = vmul.f32 %v587, %v496
        %v591 = vmul.f32 %v587, %v497
        %v592 = vmul.f32 %v587, %v498
        %v593 = vmul.f32 %v587, %v499
        %v594 = vmul.f32 %v587, %v500
        %v595 = vmul.f32 %v587, %v501
        %v596 = vmul.f32 %v587, %v502
        %v597 = vmul.f32 %v587, %v503
        %v598 = vmul.f32 %v587, %v504
        %v599 = vmul.f32 %v587, %v505
        %v600 = vmul.f32 %v587, %v506
        %v601 = vmul.f32 %v587, %v507
        %v602 = vmul.f32 %v587, %v508
        %v603 = vmul.f32 %v587, %v509
        %v604 = vadd.f32 %v571, %v588
        %v605 = vadd.f32 %v572, %v589
        %v606 = vadd.f32 %v573, %v590
        %v607 = vadd.f32 %v574, %v591
        %v608 = vadd.f32 %v575, %v592
        %v609 = vadd.f32 %v576, %v593
        %v610 = vadd.f32 %v577, %v594
        %v611 = vadd.f32 %v578, %v595
        %v612 = vadd.f32 %v579, %v596
        %v613 = vadd.f32 %v580, %v597
        %v614 = vadd.f32 %v581, %v598
        %v615 = vadd.f32 %v582, %v599
        %v616 = vadd.f32 %v583, %v600
        %v617 = vadd.f32 %v584, %v601
        %v618 = vadd.f32 %v585, %v602
        %v619 = vadd.f32 %v586, %v603
        %v620 = vstv %s520
        %v621 = vadd.f32 %v604, %v620
        %v622 = vadd.f32 %v605, %v620
        %v623 = vadd.f32 %v606, %v620
        %v624 = vadd.f32 %v607, %v620
        %v625 = vadd.f32 %v608, %v620
        %v626 = vadd.f32 %v609, %v620
        %v627 = vadd.f32 %v610, %v620
        %v628 = vadd.f32 %v611, %v620
        %v629 = vadd.f32 %v612, %v620
        %v630 = vadd.f32 %v613, %v620
        %v631 = vadd.f32 %v614, %v620
        %v632 = vadd.f32 %v615, %v620
        %v633 = vadd.f32 %v616, %v620
        %v634 = vadd.f32 %v617, %v620
        %v635 = vadd.f32 %v618, %v620
        %v636 = vadd.f32 %v619, %v620
        %v637 = vstv %s522
        %v638 = vmul.f32 %v637, %v366
        %v639 = vmul.f32 %v637, %v367
        %v640 = vmul.f32 %v637, %v368
        %v641 = vmul.f32 %v637, %v369
        %v642 = vmul.f32 %v637, %v370
        %v643 = vmul.f32 %v637, %v371
        %v644 = vmul.f32 %v637, %v372
        %v645 = vmul.f32 %v637, %v373
        %v646 = vmul.f32 %v637, %v374
        %v647 = vmul.f32 %v637, %v375
        %v648 = vmul.f32 %v637, %v376
        %v649 = vmul.f32 %v637, %v377
        %v650 = vmul.f32 %v637, %v378
        %v651 = vmul.f32 %v637, %v379
        %v652 = vmul.f32 %v637, %v380
        %v653 = vmul.f32 %v637, %v381
        %v654 = vstv %s524
        %v655 = vmul.f32 %v654, %v430
        %v656 = vmul.f32 %v654, %v431
        %v657 = vmul.f32 %v654, %v432
        %v658 = vmul.f32 %v654, %v433
        %v659 = vmul.f32 %v654, %v434
        %v660 = vmul.f32 %v654, %v435
        %v661 = vmul.f32 %v654, %v436
        %v662 = vmul.f32 %v654, %v437
        %v663 = vmul.f32 %v654, %v438
        %v664 = vmul.f32 %v654, %v439
        %v665 = vmul.f32 %v654, %v440
        %v666 = vmul.f32 %v654, %v441
        %v667 = vmul.f32 %v654, %v442
        %v668 = vmul.f32 %v654, %v443
        %v669 = vmul.f32 %v654, %v444
        %v670 = vmul.f32 %v654, %v445
        %v671 = vadd.f32 %v638, %v655
        %v672 = vadd.f32 %v639, %v656
        %v673 = vadd.f32 %v640, %v657
        %v674 = vadd.f32 %v641, %v658
        %v675 = vadd.f32 %v642, %v659
        %v676 = vadd.f32 %v643, %v660
        %v677 = vadd.f32 %v644, %v661
        %v678 = vadd.f32 %v645, %v662
        %v679 = vadd.f32 %v646, %v663
        %v680 = vadd.f32 %v647, %v664
        %v681 = vadd.f32 %v648, %v665
        %v682 = vadd.f32 %v649, %v666
        %v683 = vadd.f32 %v650, %v667
        %v684 = vadd.f32 %v651, %v668
        %v685 = vadd.f32 %v652, %v669
        %v686 = vadd.f32 %v653, %v670
        %v687 = vstv %s526
        %v688 = vmul.f32 %v687, %v494
        %v689 = vmul.f32 %v687, %v495
        %v690 = vmul.f32 %v687, %v496
        %v691 = vmul.f32 %v687, %v497
        %v692 = vmul.f32 %v687, %v498
        %v693 = vmul.f32 %v687, %v499
        %v694 = vmul.f32 %v687, %v500
        %v695 = vmul.f32 %v687, %v501
        %v696 = vmul.f32 %v687, %v502
        %v697 = vmul.f32 %v687, %v503
        %v698 = vmul.f32 %v687, %v504
        %v699 = vmul.f32 %v687, %v505
        %v700 = vmul.f32 %v687, %v506
        %v701 = vmul.f32 %v687, %v507
        %v702 = vmul.f32 %v687, %v508
        %v703 = vmul.f32 %v687, %v509
        %v704 = vadd.f32 %v671, %v688
        %v705 = vadd.f32 %v672, %v689
        %v706 = vadd.f32 %v673, %v690
        %v707 = vadd.f32 %v674, %v691
        %v708 = vadd.f32 %v675, %v692
        %v709 = vadd.f32 %v676, %v693
        %v710 = vadd.f32 %v677, %v694
        %v711 = vadd.f32 %v678, %v695
        %v712 = vadd.f32 %v679, %v696
        %v713 = vadd.f32 %v680, %v697
        %v714 = vadd.f32 %v681, %v698
        %v715 = vadd.f32 %v682, %v699
        %v716 = vadd.f32 %v683, %v700
        %v717 = vadd.f32 %v684, %v701
        %v718 = vadd.f32 %v685, %v702
        %v719 = vadd.f32 %v686, %v703
        %v720 = vstv %s528
        %v721 = vadd.f32 %v704, %v720
        %v722 = vadd.f32 %v705, %v720
        %v723 = vadd.f32 %v706, %v720
        %v724 = vadd.f32 %v707, %v720
        %v725 = vadd.f32 %v708, %v720
        %v726 = vadd.f32 %v709, %v720
        %v727 = vadd.f32 %v710, %v720
        %v728 = vadd.f32 %v711, %v720
        %v729 = vadd.f32 %v712, %v720
        %v730 = vadd.f32 %v713, %v720
        %v731 = vadd.f32 %v714, %v720
        %v732 = vadd.f32 %v715, %v720
        %v733 = vadd.f32 %v716, %v720
        %v734 = vadd.f32 %v717, %v720
        %v735 = vadd.f32 %v718, %v720
        %v736 = vadd.f32 %v719, %v720
        %v737 = vstv %s530
        %v738 = vmul.f32 %v737, %v366
        %v739 = vmul.f32 %v737, %v367
        %v740 = vmul.f32 %v737, %v368
        %v741 = vmul.f32 %v737, %v369
        %v742 = vmul.f32 %v737, %v370
        %v743 = vmul.f32 %v737, %v371
        %v744 = vmul.f32 %v737, %v372
        %v745 = vmul.f32 %v737, %v373
        %v746 = vmul.f32 %v737, %v374
        %v747 = vmul.f32 %v737, %v375
        %v748 = vmul.f32 %v737, %v376
        %v749 = vmul.f32 %v737, %v377
        %v750 = vmul.f32 %v737, %v378
        %v751 = vmul.f32 %v737, %v379
        %v752 = vmul.f32 %v737, %v380
        %v753 = vmul.f32 %v737, %v381
        %v754 = vstv %s532
        %v755 = vmul.f32 %v754, %v430
        %v756 = vmul.f32 %v754, %v431
        %v757 = vmul.f32 %v754, %v432
        %v758 = vmul.f32 %v754, %v433
        %v759 = vmul.f32 %v754, %v434
        %v760 = vmul.f32 %v754, %v435
        %v761 = vmul.f32 %v754, %v436
        %v762 = vmul.f32 %v754, %v437
        %v763 = vmul.f32 %v754, %v438
        %v764 = vmul.f32 %v754, %v439
        %v765 = vmul.f32 %v754, %v440
        %v766 = vmul.f32 %v754, %v441
        %v767 = vmul.f32 %v754, %v442
        %v768 = vmul.f32 %v754, %v443
        %v769 = vmul.f32 %v754, %v444
        %v770 = vmul.f32 %v754, %v445
        %v771 = vadd.f32 %v738, %v755
        %v772 = vadd.f32 %v739, %v756
        %v773 = vadd.f32 %v740, %v757
        %v774 = vadd.f32 %v741, %v758
        %v775 = vadd.f32 %v742, %v759
        %v776 = vadd.f32 %v743, %v760
        %v777 = vadd.f32 %v744, %v761
        %v778 = vadd.f32 %v745, %v762
        %v779 = vadd.f32 %v746, %v763
        %v780 = vadd.f32 %v747, %v764
        %v781 = vadd.f32 %v748, %v765
        %v782 = vadd.f32 %v749, %v766
        %v783 = vadd.f32 %v750, %v767
        %v784 = vadd.f32 %v751, %v768
        %v785 = vadd.f32 %v752, %v769
        %v786 = vadd.f32 %v753, %v770
        %v787 = vstv %s534
        %v788 = vmul.f32 %v787, %v494
        %v789 = vmul.f32 %v787, %v495
        %v790 = vmul.f32 %v787, %v496
        %v791 = vmul.f32 %v787, %v497
        %v792 = vmul.f32 %v787, %v498
        %v793 = vmul.f32 %v787, %v499
        %v794 = vmul.f32 %v787, %v500
        %v795 = vmul.f32 %v787, %v501
        %v796 = vmul.f32 %v787, %v502
        %v797 = vmul.f32 %v787, %v503
        %v798 = vmul.f32 %v787, %v504
        %v799 = vmul.f32 %v787, %v505
        %v800 = vmul.f32 %v787, %v506
        %v801 = vmul.f32 %v787, %v507
        %v802 = vmul.f32 %v787, %v508
        %v803 = vmul.f32 %v787, %v509
        %v804 = vadd.f32 %v771, %v788
        %v805 = vadd.f32 %v772, %v789
        %v806 = vadd.f32 %v773, %v790
        %v807 = vadd.f32 %v774, %v791
        %v808 = vadd.f32 %v775, %v792
        %v809 = vadd.f32 %v776, %v793
        %v810 = vadd.f32 %v777, %v794
        %v811 = vadd.f32 %v778, %v795
        %v812 = vadd.f32 %v779, %v796
        %v813 = vadd.f32 %v780, %v797
        %v814 = vadd.f32 %v781, %v798
        %v815 = vadd.f32 %v782, %v799
        %v816 = vadd.f32 %v783, %v800
        %v817 = vadd.f32 %v784, %v801
        %v818 = vadd.f32 %v785, %v802
        %v819 = vadd.f32 %v786, %v803
        %v820 = vstv %s536
        %v821 = vadd.f32 %v804, %v820
        %v822 = vadd.f32 %v805, %v820
        %v823 = vadd.f32 %v806, %v820
        %v824 = vadd.f32 %v807, %v820
        %v825 = vadd.f32 %v808, %v820
        %v826 = vadd.f32 %v809, %v820
        %v827 = vadd.f32 %v810, %v820
        %v828 = vadd.f32 %v811, %v820
        %v829 = vadd.f32 %v812, %v820
        %v830 = vadd.f32 %v813, %v820
        %v831 = vadd.f32 %v814, %v820
        %v832 = vadd.f32 %v815, %v820
        %v833 = vadd.f32 %v816, %v820
        %v834 = vadd.f32 %v817, %v820
        %v835 = vadd.f32 %v818, %v820
        %v836 = vadd.f32 %v819, %v820
        %v837 = vadd.f32 %v621, 1.0
        %v838 = vadd.f32 %v622, 1.0
        %v839 = vadd.f32 %v623, 1.0
        %v840 = vadd.f32 %v624, 1.0
        %v841 = vadd.f32 %v625, 1.0
        %v842 = vadd.f32 %v626, 1.0
        %v843 = vadd.f32 %v627, 1.0
        %v844 = vadd.f32 %v628, 1.0
        %v845 = vadd.f32 %v629, 1.0
        %v846 = vadd.f32 %v630, 1.0
        %v847 = vadd.f32 %v631, 1.0
        %v848 = vadd.f32 %v632, 1.0
        %v849 = vadd.f32 %v633, 1.0
        %v850 = vadd.f32 %v634, 1.0
        %v851 = vadd.f32 %v635, 1.0
        %v852 = vadd.f32 %v636, 1.0
        %v853 = vmul.f32 %v837, 16.0
        %v854 = vmul.f32 %v838, 16.0
        %v855 = vmul.f32 %v839, 16.0
        %v856 = vmul.f32 %v840, 16.0
        %v857 = vmul.f32 %v841, 16.0
        %v858 = vmul.f32 %v842, 16.0
        %v859 = vmul.f32 %v843, 16.0
        %v860 = vmul.f32 %v844, 16.0
        %v861 = vmul.f32 %v845, 16.0
        %v862 = vmul.f32 %v846, 16.0
        %v863 = vmul.f32 %v847, 16.0
        %v864 = vmul.f32 %v848, 16.0
        %v865 = vmul.f32 %v849, 16.0
        %v866 = vmul.f32 %v850, 16.0
        %v867 = vmul.f32 %v851, 16.0
        %v868 = vmul.f32 %v852, 16.0
        %v869 = vsub.f32 %v853, 1.0
        %v870 = vsub.f32 %v854, 1.0
        %v871 = vsub.f32 %v855, 1.0
        %v872 = vsub.f32 %v856, 1.0
        %v873 = vsub.f32 %v857, 1.0
        %v874 = vsub.f32 %v858, 1.0
        %v875 = vsub.f32 %v859, 1.0
        %v876 = vsub.f32 %v860, 1.0
        %v877 = vsub.f32 %v861, 1.0
        %v878 = vsub.f32 %v862, 1.0
        %v879 = vsub.f32 %v863, 1.0
        %v880 = vsub.f32 %v864, 1.0
        %v881 = vsub.f32 %v865, 1.0
        %v882 = vsub.f32 %v866, 1.0
        %v883 = vsub.f32 %v867, 1.0
        %v884 = vsub.f32 %v868, 1.0
        %v885 = vmul.f32 %v869, 0.5
        %v886 = vmul.f32 %v870, 0.5
        %v887 = vmul.f32 %v871, 0.5
        %v888 = vmul.f32 %v872, 0.5
        %v889 = vmul.f32 %v873, 0.5
        %v890 = vmul.f32 %v874, 0.5
        %v891 = vmul.f32 %v875, 0.5
        %v892 = vmul.f32 %v876, 0.5
        %v893 = vmul.f32 %v877, 0.5
        %v894 = vmul.f32 %v878, 0.5
        %v895 = vmul.f32 %v879, 0.5
        %v896 = vmul.f32 %v880, 0.5
        %v897 = vmul.f32 %v881, 0.5
        %v898 = vmul.f32 %v882, 0.5
        %v899 = vmul.f32 %v883, 0.5
        %v900 = vmul.f32 %v884, 0.5
        %v901 = vadd.f32 %v721, 1.0
        %v902 = vadd.f32 %v722, 1.0
        %v903 = vadd.f32 %v723, 1.0
        %v904 = vadd.f32 %v724, 1.0
        %v905 = vadd.f32 %v725, 1.0
        %v906 = vadd.f32 %v726, 1.0
        %v907 = vadd.f32 %v727, 1.0
        %v908 = vadd.f32 %v728, 1.0
        %v909 = vadd.f32 %v729, 1.0
        %v910 = vadd.f32 %v730, 1.0
        %v911 = vadd.f32 %v731, 1.0
        %v912 = vadd.f32 %v732, 1.0
        %v913 = vadd.f32 %v733, 1.0
        %v914 = vadd.f32 %v734, 1.0
        %v915 = vadd.f32 %v735, 1.0
        %v916 = vadd.f32 %v736, 1.0
        %v917 = vmul.f32 %v901, 16.0
        %v918 = vmul.f32 %v902, 16.0
        %v919 = vmul.f32 %v903, 16.0
        %v920 = vmul.f32 %v904, 16.0
        %v921 = vmul.f32 %v905, 16.0
        %v922 = vmul.f32 %v906, 16.0
        %v923 = vmul.f32 %v907, 16.0
        %v924 = vmul.f32 %v908, 16.0
        %v925 = vmul.f32 %v909, 16.0
        %v926 = vmul.f32 %v910, 16.0
        %v927 = vmul.f32 %v911, 16.0
        %v928 = vmul.f32 %v912, 16.0
        %v929 = vmul.f32 %v913, 16.0
        %v930 = vmul.f32 %v914, 16.0
        %v931 = vmul.f32 %v915, 16.0
        %v932 = vmul.f32 %v916, 16.0
        %v933 = vsub.f32 %v917, 1.0
        %v934 = vsub.f32 %v918, 1.0
        %v935 = vsub.f32 %v919, 1.0
        %v936 = vsub.f32 %v920, 1.0
        %v937 = vsub.f32 %v921, 1.0
        %v938 = vsub.f32 %v922, 1.0
        %v939 = vsub.f32 %v923, 1.0
        %v940 = vsub.f32 %v924, 1.0
        %v941 = vsub.f32 %v925, 1.0
        %v942 = vsub.f32 %v926, 1.0
        %v943 = vsub.f32 %v927, 1.0
        %v944 = vsub.f32 %v928, 1.0
        %v945 = vsub.f32 %v929, 1.0
        %v946 = vsub.f32 %v930, 1.0
        %v947 = vsub.f32 %v931, 1.0
        %v948 = vsub.f32 %v932, 1.0
        %v949 = vmul.f32 %v933, 0.5
        %v950 = vmul.f32 %v934, 0.5
        %v951 = vmul.f32 %v935, 0.5
        %v952 = vmul.f32 %v936, 0.5
        %v953 = vmul.f32 %v937, 0.5
        %v954 = vmul.f32 %v938, 0.5
        %v955 = vmul.f32 %v939, 0.5
        %v956 = vmul.f32 %v940, 0.5
        %v957 = vmul.f32 %v941, 0.5
        %v958 = vmul.f32 %v942, 0.5
        %v959 = vmul.f32 %v943, 0.5
        %v960 = vmul.f32 %v944, 0.5
        %v961 = vmul.f32 %v945, 0.5
        %v962 = vmul.f32 %v946, 0.5
        %v963 = vmul.f32 %v947, 0.5
        %v964 = vmul.f32 %v948, 0.5
        %v965 = vadd.f32 %v821, 1.0
        %v966 = vadd.f32 %v822, 1.0
        %v967 = vadd.f32 %v823, 1.0
        %v968 = vadd.f32 %v824, 1.0
        %v969 = vadd.f32 %v825, 1.0
        %v970 = vadd.f32 %v826, 1.0
        %v971 = vadd.f32 %v827, 1.0
        %v972 = vadd.f32 %v828, 1.0
        %v973 = vadd.f32 %v829, 1.0
        %v974 = vadd.f32 %v830, 1.0
        %v975 = vadd.f32 %v831, 1.0
        %v976 = vadd.f32 %v832, 1.0
        %v977 = vadd.f32 %v833, 1.0
        %v978 = vadd.f32 %v834, 1.0
        %v979 = vadd.f32 %v835, 1.0
        %v980 = vadd.f32 %v836, 1.0
        %v981 = vmul.f32 %v965, 16.0
        %v982 = vmul.f32 %v966, 16.0
        %v983 = vmul.f32 %v967, 16.0
        %v984 = vmul.f32 %v968, 16.0
        %v985 = vmul.f32 %v969, 16.0
        %v986 = vmul.f32 %v970, 16.0
        %v987 = vmul.f32 %v971, 16.0
        %v988 = vmul.f32 %v972, 16.0
        %v989 = vmul.f32 %v973, 16.0
        %v990 = vmul.f32 %v974, 16.0
        %v991 = vmul.f32 %v975, 16.0
        %v992 = vmul.f32 %v976, 16.0
        %v993 = vmul.f32 %v977, 16.0
        %v994 = vmul.f32 %v978, 16.0
        %v995 = vmul.f32 %v979, 16.0
        %v996 = vmul.f32 %v980, 16.0
        %v997 = vsub.f32 %v981, 1.0
        %v998 = vsub.f32 %v982, 1.0
        %v999 = vsub.f32 %v983, 1.0
        %v1000 = vsub.f32 %v984, 1.0
        %v1001 = vsub.f32 %v985, 1.0
        %v1002 = vsub.f32 %v986, 1.0
        %v1003 = vsub.f32 %v987, 1.0
        %v1004 = vsub.f32 %v988, 1.0
        %v1005 = vsub.f32 %v989, 1.0
        %v1006 = vsub.f32 %v990, 1.0
        %v1007 = vsub.f32 %v991, 1.0
        %v1008 = vsub.f32 %v992, 1.0
        %v1009 = vsub.f32 %v993, 1.0
        %v1010 = vsub.f32 %v994, 1.0
        %v1011 = vsub.f32 %v995, 1.0
        %v1012 = vsub.f32 %v996, 1.0
        %v1013 = vmul.f32 %v997, 0.5
        %v1014 = vmul.f32 %v998, 0.5
        %v1015 = vmul.f32 %v999, 0.5
        %v1016 = vmul.f32 %v1000, 0.5
        %v1017 = vmul.f32 %v1001, 0.5
        %v1018 = vmul.f32 %v1002, 0.5
        %v1019 = vmul.f32 %v1003, 0.5
        %v1020 = vmul.f32 %v1004, 0.5
        %v1021 = vmul.f32 %v1005, 0.5
        %v1022 = vmul.f32 %v1006, 0.5
        %v1023 = vmul.f32 %v1007, 0.5
        %v1024 = vmul.f32 %v1008, 0.5
        %v1025 = vmul.f32 %v1009, 0.5
        %v1026 = vmul.f32 %v1010, 0.5
        %v1027 = vmul.f32 %v1011, 0.5
        %v1028 = vmul.f32 %v1012, 0.5
        %v1029 = vfloor.f32 %v885
        %v1030 = vfloor.f32 %v886
        %v1031 = vfloor.f32 %v887
        %v1032 = vfloor.f32 %v888
        %v1033 = vfloor.f32 %v889
        %v1034 = vfloor.f32 %v890
        %v1035 = vfloor.f32 %v891
        %v1036 = vfloor.f32 %v892
        %v1037 = vfloor.f32 %v893
        %v1038 = vfloor.f32 %v894
        %v1039 = vfloor.f32 %v895
        %v1040 = vfloor.f32 %v896
        %v1041 = vfloor.f32 %v897
        %v1042 = vfloor.f32 %v898
        %v1043 = vfloor.f32 %v899
        %v1044 = vfloor.f32 %v900
        %v1045 = vsub.f32 %v885, %v1029
        %v1046 = vsub.f32 %v886, %v1030
        %v1047 = vsub.f32 %v887, %v1031
        %v1048 = vsub.f32 %v888, %v1032
        %v1049 = vsub.f32 %v889, %v1033
        %v1050 = vsub.f32 %v890, %v1034
        %v1051 = vsub.f32 %v891, %v1035
        %v1052 = vsub.f32 %v892, %v1036
        %v1053 = vsub.f32 %v893, %v1037
        %v1054 = vsub.f32 %v894, %v1038
        %v1055 = vsub.f32 %v895, %v1039
        %v1056 = vsub.f32 %v896, %v1040
        %v1057 = vsub.f32 %v897, %v1041
        %v1058 = vsub.f32 %v898, %v1042
        %v1059 = vsub.f32 %v899, %v1043
        %v1060 = vsub.f32 %v900, %v1044
        %v1061 = vfloor.f32 %v949
        %v1062 = vfloor.f32 %v950
        %v1063 = vfloor.f32 %v951
        %v1064 = vfloor.f32 %v952
        %v1065 = vfloor.f32 %v953
        %v1066 = vfloor.f32 %v954
        %v1067 = vfloor.f32 %v955
        %v1068 = vfloor.f32 %v956
        %v1069 = vfloor.f32 %v957
        %v1070 = vfloor.f32 %v958
        %v1071 = vfloor.f32 %v959
        %v1072 = vfloor.f32 %v960
        %v1073 = vfloor.f32 %v961
        %v1074 = vfloor.f32 %v962
        %v1075 = vfloor.f32 %v963
        %v1076 = vfloor.f32 %v964
        %v1077 = vsub.f32 %v949, %v1061
        %v1078 = vsub.f32 %v950, %v1062
        %v1079 = vsub.f32 %v951, %v1063
        %v1080 = vsub.f32 %v952, %v1064
        %v1081 = vsub.f32 %v953, %v1065
        %v1082 = vsub.f32 %v954, %v1066
        %v1083 = vsub.f32 %v955, %v1067
        %v1084 = vsub.f32 %v956, %v1068
        %v1085 = vsub.f32 %v957, %v1069
        %v1086 = vsub.f32 %v958, %v1070
        %v1087 = vsub.f32 %v959, %v1071
        %v1088 = vsub.f32 %v960, %v1072
        %v1089 = vsub.f32 %v961, %v1073
        %v1090 = vsub.f32 %v962, %v1074
        %v1091 = vsub.f32 %v963, %v1075
        %v1092 = vsub.f32 %v964, %v1076
        %v1093 = vfloor.f32 %v1013
        %v1094 = vfloor.f32 %v1014
        %v1095 = vfloor.f32 %v1015
        %v1096 = vfloor.f32 %v1016
        %v1097 = vfloor.f32 %v1017
        %v1098 = vfloor.f32 %v1018
        %v1099 = vfloor.f32 %v1019
        %v1100 = vfloor.f32 %v1020
        %v1101 = vfloor.f32 %v1021
        %v1102 = vfloor.f32 %v1022
        %v1103 = vfloor.f32 %v1023
        %v1104 = vfloor.f32 %v1024
        %v1105 = vfloor.f32 %v1025
        %v1106 = vfloor.f32 %v1026
        %v1107 = vfloor.f32 %v1027
        %v1108 = vfloor.f32 %v1028
        %v1109 = vsub.f32 %v1013, %v1093
        %v1110 = vsub.f32 %v1014, %v1094
        %v1111 = vsub.f32 %v1015, %v1095
        %v1112 = vsub.f32 %v1016, %v1096
        %v1113 = vsub.f32 %v1017, %v1097
        %v1114 = vsub.f32 %v1018, %v1098
        %v1115 = vsub.f32 %v1019, %v1099
        %v1116 = vsub.f32 %v1020, %v1100
        %v1117 = vsub.f32 %v1021, %v1101
        %v1118 = vsub.f32 %v1022, %v1102
        %v1119 = vsub.f32 %v1023, %v1103
        %v1120 = vsub.f32 %v1024, %v1104
        %v1121 = vsub.f32 %v1025, %v1105
        %v1122 = vsub.f32 %v1026, %v1106
        %v1123 = vsub.f32 %v1027, %v1107
        %v1124 = vsub.f32 %v1028, %v1108
        %v1125 = vsub.f32 1.0, %v1045
        %v1126 = vsub.f32 1.0, %v1046
        %v1127 = vsub.f32 1.0, %v1047
        %v1128 = vsub.f32 1.0, %v1048
        %v1129 = vsub.f32 1.0, %v1049
        %v1130 = vsub.f32 1.0, %v1050
        %v1131 = vsub.f32 1.0, %v1051
        %v1132 = vsub.f32 1.0, %v1052
        %v1133 = vsub.f32 1.0, %v1053
        %v1134 = vsub.f32 1.0, %v1054
        %v1135 = vsub.f32 1.0, %v1055
        %v1136 = vsub.f32 1.0, %v1056
        %v1137 = vsub.f32 1.0, %v1057
        %v1138 = vsub.f32 1.0, %v1058
        %v1139 = vsub.f32 1.0, %v1059
        %v1140 = vsub.f32 1.0, %v1060
        %vm1141 = vcmp.eq.f32.partialorder %v1029, 8.0
        %vm1142 = vcmp.eq.f32.partialorder %v1030, 8.0
        %vm1143 = vcmp.eq.f32.partialorder %v1031, 8.0
        %vm1144 = vcmp.eq.f32.partialorder %v1032, 8.0
        %vm1145 = vcmp.eq.f32.partialorder %v1033, 8.0
        %vm1146 = vcmp.eq.f32.partialorder %v1034, 8.0
        %vm1147 = vcmp.eq.f32.partialorder %v1035, 8.0
        %vm1148 = vcmp.eq.f32.partialorder %v1036, 8.0
        %vm1149 = vcmp.eq.f32.partialorder %v1037, 8.0
        %vm1150 = vcmp.eq.f32.partialorder %v1038, 8.0
        %vm1151 = vcmp.eq.f32.partialorder %v1039, 8.0
        %vm1152 = vcmp.eq.f32.partialorder %v1040, 8.0
        %vm1153 = vcmp.eq.f32.partialorder %v1041, 8.0
        %vm1154 = vcmp.eq.f32.partialorder %v1042, 8.0
        %vm1155 = vcmp.eq.f32.partialorder %v1043, 8.0
        %vm1156 = vcmp.eq.f32.partialorder %v1044, 8.0
        %v1157 = vsel %vm1141, 1, 0
        %v1158 = vsel %vm1142, 1, 0
        %v1159 = vsel %vm1143, 1, 0
        %v1160 = vsel %vm1144, 1, 0
        %v1161 = vsel %vm1145, 1, 0
        %v1162 = vsel %vm1146, 1, 0
        %v1163 = vsel %vm1147, 1, 0
        %v1164 = vsel %vm1148, 1, 0
        %v1165 = vsel %vm1149, 1, 0
        %v1166 = vsel %vm1150, 1, 0
        %v1167 = vsel %vm1151, 1, 0
        %v1168 = vsel %vm1152, 1, 0
        %v1169 = vsel %vm1153, 1, 0
        %v1170 = vsel %vm1154, 1, 0
        %v1171 = vsel %vm1155, 1, 0
        %v1172 = vsel %vm1156, 1, 0
        %v1173 = vcvt.s32.f32 %v1157
        %v1174 = vcvt.s32.f32 %v1158
        %v1175 = vcvt.s32.f32 %v1159
        %v1176 = vcvt.s32.f32 %v1160
        %v1177 = vcvt.s32.f32 %v1161
        %v1178 = vcvt.s32.f32 %v1162
        %v1179 = vcvt.s32.f32 %v1163
        %v1180 = vcvt.s32.f32 %v1164
        %v1181 = vcvt.s32.f32 %v1165
        %v1182 = vcvt.s32.f32 %v1166
        %v1183 = vcvt.s32.f32 %v1167
        %v1184 = vcvt.s32.f32 %v1168
        %v1185 = vcvt.s32.f32 %v1169
        %v1186 = vcvt.s32.f32 %v1170
        %v1187 = vcvt.s32.f32 %v1171
        %v1188 = vcvt.s32.f32 %v1172
        %v1189 = vmul.f32 %v1125, %v1173
        %v1190 = vmul.f32 %v1126, %v1174
        %v1191 = vmul.f32 %v1127, %v1175
        %v1192 = vmul.f32 %v1128, %v1176
        %v1193 = vmul.f32 %v1129, %v1177
        %v1194 = vmul.f32 %v1130, %v1178
        %v1195 = vmul.f32 %v1131, %v1179
        %v1196 = vmul.f32 %v1132, %v1180
        %v1197 = vmul.f32 %v1133, %v1181
        %v1198 = vmul.f32 %v1134, %v1182
        %v1199 = vmul.f32 %v1135, %v1183
        %v1200 = vmul.f32 %v1136, %v1184
        %v1201 = vmul.f32 %v1137, %v1185
        %v1202 = vmul.f32 %v1138, %v1186
        %v1203 = vmul.f32 %v1139, %v1187
        %v1204 = vmul.f32 %v1140, %v1188
        %v1205 = vadd.f32 %v1029, 1.0
        %v1206 = vadd.f32 %v1030, 1.0
        %v1207 = vadd.f32 %v1031, 1.0
        %v1208 = vadd.f32 %v1032, 1.0
        %v1209 = vadd.f32 %v1033, 1.0
        %v1210 = vadd.f32 %v1034, 1.0
        %v1211 = vadd.f32 %v1035, 1.0
        %v1212 = vadd.f32 %v1036, 1.0
        %v1213 = vadd.f32 %v1037, 1.0
        %v1214 = vadd.f32 %v1038, 1.0
        %v1215 = vadd.f32 %v1039, 1.0
        %v1216 = vadd.f32 %v1040, 1.0
        %v1217 = vadd.f32 %v1041, 1.0
        %v1218 = vadd.f32 %v1042, 1.0
        %v1219 = vadd.f32 %v1043, 1.0
        %v1220 = vadd.f32 %v1044, 1.0
        %vm1221 = vcmp.eq.f32.partialorder %v1205, 8.0
        %vm1222 = vcmp.eq.f32.partialorder %v1206, 8.0
        %vm1223 = vcmp.eq.f32.partialorder %v1207, 8.0
        %vm1224 = vcmp.eq.f32.partialorder %v1208, 8.0
        %vm1225 = vcmp.eq.f32.partialorder %v1209, 8.0
        %vm1226 = vcmp.eq.f32.partialorder %v1210, 8.0
        %vm1227 = vcmp.eq.f32.partialorder %v1211, 8.0
        %vm1228 = vcmp.eq.f32.partialorder %v1212, 8.0
        %vm1229 = vcmp.eq.f32.partialorder %v1213, 8.0
        %vm1230 = vcmp.eq.f32.partialorder %v1214, 8.0
        %vm1231 = vcmp.eq.f32.partialorder %v1215, 8.0
        %vm1232 = vcmp.eq.f32.partialorder %v1216, 8.0
        %vm1233 = vcmp.eq.f32.partialorder %v1217, 8.0
        %vm1234 = vcmp.eq.f32.partialorder %v1218, 8.0
        %vm1235 = vcmp.eq.f32.partialorder %v1219, 8.0
        %vm1236 = vcmp.eq.f32.partialorder %v1220, 8.0
        %v1237 = vsel %vm1221, 1, 0
        %v1238 = vsel %vm1222, 1, 0
        %v1239 = vsel %vm1223, 1, 0
        %v1240 = vsel %vm1224, 1, 0
        %v1241 = vsel %vm1225, 1, 0
        %v1242 = vsel %vm1226, 1, 0
        %v1243 = vsel %vm1227, 1, 0
        %v1244 = vsel %vm1228, 1, 0
        %v1245 = vsel %vm1229, 1, 0
        %v1246 = vsel %vm1230, 1, 0
        %v1247 = vsel %vm1231, 1, 0
        %v1248 = vsel %vm1232, 1, 0
        %v1249 = vsel %vm1233, 1, 0
        %v1250 = vsel %vm1234, 1, 0
        %v1251 = vsel %vm1235, 1, 0
        %v1252 = vsel %vm1236, 1, 0
        %v1253 = vcvt.s32.f32 %v1237
        %v1254 = vcvt.s32.f32 %v1238
        %v1255 = vcvt.s32.f32 %v1239
        %v1256 = vcvt.s32.f32 %v1240
        %v1257 = vcvt.s32.f32 %v1241
        %v1258 = vcvt.s32.f32 %v1242
        %v1259 = vcvt.s32.f32 %v1243
        %v1260 = vcvt.s32.f32 %v1244
        %v1261 = vcvt.s32.f32 %v1245
        %v1262 = vcvt.s32.f32 %v1246
        %v1263 = vcvt.s32.f32 %v1247
        %v1264 = vcvt.s32.f32 %v1248
        %v1265 = vcvt.s32.f32 %v1249
        %v1266 = vcvt.s32.f32 %v1250
        %v1267 = vcvt.s32.f32 %v1251
        %v1268 = vcvt.s32.f32 %v1252
        %v1269 = vmul.f32 %v1045, %v1253
        %v1270 = vmul.f32 %v1046, %v1254
        %v1271 = vmul.f32 %v1047, %v1255
        %v1272 = vmul.f32 %v1048, %v1256
        %v1273 = vmul.f32 %v1049, %v1257
        %v1274 = vmul.f32 %v1050, %v1258
        %v1275 = vmul.f32 %v1051, %v1259
        %v1276 = vmul.f32 %v1052, %v1260
        %v1277 = vmul.f32 %v1053, %v1261
        %v1278 = vmul.f32 %v1054, %v1262
        %v1279 = vmul.f32 %v1055, %v1263
        %v1280 = vmul.f32 %v1056, %v1264
        %v1281 = vmul.f32 %v1057, %v1265
        %v1282 = vmul.f32 %v1058, %v1266
        %v1283 = vmul.f32 %v1059, %v1267
        %v1284 = vmul.f32 %v1060, %v1268
        %v1285 = vadd.f32 %v1189, %v1269
        %v1286 = vadd.f32 %v1190, %v1270
        %v1287 = vadd.f32 %v1191, %v1271
        %v1288 = vadd.f32 %v1192, %v1272
        %v1289 = vadd.f32 %v1193, %v1273
        %v1290 = vadd.f32 %v1194, %v1274
        %v1291 = vadd.f32 %v1195, %v1275
        %v1292 = vadd.f32 %v1196, %v1276
        %v1293 = vadd.f32 %v1197, %v1277
        %v1294 = vadd.f32 %v1198, %v1278
        %v1295 = vadd.f32 %v1199, %v1279
        %v1296 = vadd.f32 %v1200, %v1280
        %v1297 = vadd.f32 %v1201, %v1281
        %v1298 = vadd.f32 %v1202, %v1282
        %v1299 = vadd.f32 %v1203, %v1283
        %v1300 = vadd.f32 %v1204, %v1284
        %v1301 = vcvt.f32.s32.to.zero.pseudo %v1093
        %v1302 = vcvt.f32.s32.to.zero.pseudo %v1094
        %v1303 = vcvt.f32.s32.to.zero.pseudo %v1095
        %v1304 = vcvt.f32.s32.to.zero.pseudo %v1096
        %v1305 = vcvt.f32.s32.to.zero.pseudo %v1097
        %v1306 = vcvt.f32.s32.to.zero.pseudo %v1098
        %v1307 = vcvt.f32.s32.to.zero.pseudo %v1099
        %v1308 = vcvt.f32.s32.to.zero.pseudo %v1100
        %v1309 = vcvt.f32.s32.to.zero.pseudo %v1101
        %v1310 = vcvt.f32.s32.to.zero.pseudo %v1102
        %v1311 = vcvt.f32.s32.to.zero.pseudo %v1103
        %v1312 = vcvt.f32.s32.to.zero.pseudo %v1104
        %v1313 = vcvt.f32.s32.to.zero.pseudo %v1105
        %v1314 = vcvt.f32.s32.to.zero.pseudo %v1106
        %v1315 = vcvt.f32.s32.to.zero.pseudo %v1107
        %v1316 = vcvt.f32.s32.to.zero.pseudo %v1108
        %v1317 = vcvt.f32.s32.to.zero.pseudo %v1061
        %v1318 = vcvt.f32.s32.to.zero.pseudo %v1062
        %v1319 = vcvt.f32.s32.to.zero.pseudo %v1063
        %v1320 = vcvt.f32.s32.to.zero.pseudo %v1064
        %v1321 = vcvt.f32.s32.to.zero.pseudo %v1065
        %v1322 = vcvt.f32.s32.to.zero.pseudo %v1066
        %v1323 = vcvt.f32.s32.to.zero.pseudo %v1067
        %v1324 = vcvt.f32.s32.to.zero.pseudo %v1068
        %v1325 = vcvt.f32.s32.to.zero.pseudo %v1069
        %v1326 = vcvt.f32.s32.to.zero.pseudo %v1070
        %v1327 = vcvt.f32.s32.to.zero.pseudo %v1071
        %v1328 = vcvt.f32.s32.to.zero.pseudo %v1072
        %v1329 = vcvt.f32.s32.to.zero.pseudo %v1073
        %v1330 = vcvt.f32.s32.to.zero.pseudo %v1074
        %v1331 = vcvt.f32.s32.to.zero.pseudo %v1075
        %v1332 = vcvt.f32.s32.to.zero.pseudo %v1076
        %v1333 = vsub.f32 1.0, %v1109
        %v1334 = vsub.f32 1.0, %v1110
        %v1335 = vsub.f32 1.0, %v1111
        %v1336 = vsub.f32 1.0, %v1112
        %v1337 = vsub.f32 1.0, %v1113
        %v1338 = vsub.f32 1.0, %v1114
        %v1339 = vsub.f32 1.0, %v1115
        %v1340 = vsub.f32 1.0, %v1116
        %v1341 = vsub.f32 1.0, %v1117
        %v1342 = vsub.f32 1.0, %v1118
        %v1343 = vsub.f32 1.0, %v1119
        %v1344 = vsub.f32 1.0, %v1120
        %v1345 = vsub.f32 1.0, %v1121
        %v1346 = vsub.f32 1.0, %v1122
        %v1347 = vsub.f32 1.0, %v1123
        %v1348 = vsub.f32 1.0, %v1124
        %v1349 = vmul.f32 %v1285, %v1333
        %v1350 = vmul.f32 %v1286, %v1334
        %v1351 = vmul.f32 %v1287, %v1335
        %v1352 = vmul.f32 %v1288, %v1336
        %v1353 = vmul.f32 %v1289, %v1337
        %v1354 = vmul.f32 %v1290, %v1338
        %v1355 = vmul.f32 %v1291, %v1339
        %v1356 = vmul.f32 %v1292, %v1340
        %v1357 = vmul.f32 %v1293, %v1341
        %v1358 = vmul.f32 %v1294, %v1342
        %v1359 = vmul.f32 %v1295, %v1343
        %v1360 = vmul.f32 %v1296, %v1344
        %v1361 = vmul.f32 %v1297, %v1345
        %v1362 = vmul.f32 %v1298, %v1346
        %v1363 = vmul.f32 %v1299, %v1347
        %v1364 = vmul.f32 %v1300, %v1348
        %v1365 = vmul.f32 %v1285, %v1109
        %v1366 = vmul.f32 %v1286, %v1110
        %v1367 = vmul.f32 %v1287, %v1111
        %v1368 = vmul.f32 %v1288, %v1112
        %v1369 = vmul.f32 %v1289, %v1113
        %v1370 = vmul.f32 %v1290, %v1114
        %v1371 = vmul.f32 %v1291, %v1115
        %v1372 = vmul.f32 %v1292, %v1116
        %v1373 = vmul.f32 %v1293, %v1117
        %v1374 = vmul.f32 %v1294, %v1118
        %v1375 = vmul.f32 %v1295, %v1119
        %v1376 = vmul.f32 %v1296, %v1120
        %v1377 = vmul.f32 %v1297, %v1121
        %v1378 = vmul.f32 %v1298, %v1122
        %v1379 = vmul.f32 %v1299, %v1123
        %v1380 = vmul.f32 %v1300, %v1124
        %v1381 = vsub.f32 1.0, %v1077
        %v1382 = vsub.f32 1.0, %v1078
        %v1383 = vsub.f32 1.0, %v1079
        %v1384 = vsub.f32 1.0, %v1080
        %v1385 = vsub.f32 1.0, %v1081
        %v1386 = vsub.f32 1.0, %v1082
        %v1387 = vsub.f32 1.0, %v1083
        %v1388 = vsub.f32 1.0, %v1084
        %v1389 = vsub.f32 1.0, %v1085
        %v1390 = vsub.f32 1.0, %v1086
        %v1391 = vsub.f32 1.0, %v1087
        %v1392 = vsub.f32 1.0, %v1088
        %v1393 = vsub.f32 1.0, %v1089
        %v1394 = vsub.f32 1.0, %v1090
        %v1395 = vsub.f32 1.0, %v1091
        %v1396 = vsub.f32 1.0, %v1092
        %vm1397 = vcmp.eq.s32.totalorder %v511, %v1301
        %vm1398 = vcmp.eq.s32.totalorder %v511, %v1302
        %vm1399 = vcmp.eq.s32.totalorder %v511, %v1303
        %vm1400 = vcmp.eq.s32.totalorder %v511, %v1304
        %vm1401 = vcmp.eq.s32.totalorder %v511, %v1305
        %vm1402 = vcmp.eq.s32.totalorder %v511, %v1306
        %vm1403 = vcmp.eq.s32.totalorder %v511, %v1307
        %vm1404 = vcmp.eq.s32.totalorder %v511, %v1308
        %vm1405 = vcmp.eq.s32.totalorder %v511, %v1309
        %vm1406 = vcmp.eq.s32.totalorder %v511, %v1310
        %vm1407 = vcmp.eq.s32.totalorder %v511, %v1311
        %vm1408 = vcmp.eq.s32.totalorder %v511, %v1312
        %vm1409 = vcmp.eq.s32.totalorder %v511, %v1313
        %vm1410 = vcmp.eq.s32.totalorder %v511, %v1314
        %vm1411 = vcmp.eq.s32.totalorder %v511, %v1315
        %vm1412 = vcmp.eq.s32.totalorder %v511, %v1316
        %vm1413 = vcmp.eq.s32.totalorder %v512, %v1301
        %vm1414 = vcmp.eq.s32.totalorder %v512, %v1302
        %vm1415 = vcmp.eq.s32.totalorder %v512, %v1303
        %vm1416 = vcmp.eq.s32.totalorder %v512, %v1304
        %vm1417 = vcmp.eq.s32.totalorder %v512, %v1305
        %vm1418 = vcmp.eq.s32.totalorder %v512, %v1306
        %vm1419 = vcmp.eq.s32.totalorder %v512, %v1307
        %vm1420 = vcmp.eq.s32.totalorder %v512, %v1308
        %vm1421 = vcmp.eq.s32.totalorder %v512, %v1309
        %vm1422 = vcmp.eq.s32.totalorder %v512, %v1310
        %vm1423 = vcmp.eq.s32.totalorder %v512, %v1311
        %vm1424 = vcmp.eq.s32.totalorder %v512, %v1312
        %vm1425 = vcmp.eq.s32.totalorder %v512, %v1313
        %vm1426 = vcmp.eq.s32.totalorder %v512, %v1314
        %vm1427 = vcmp.eq.s32.totalorder %v512, %v1315
        %vm1428 = vcmp.eq.s32.totalorder %v512, %v1316
        %v1429 = vsel %vm1397, %v1349, 0.0
        %v1430 = vsel %vm1398, %v1350, 0.0
        %v1431 = vsel %vm1399, %v1351, 0.0
        %v1432 = vsel %vm1400, %v1352, 0.0
        %v1433 = vsel %vm1401, %v1353, 0.0
        %v1434 = vsel %vm1402, %v1354, 0.0
        %v1435 = vsel %vm1403, %v1355, 0.0
        %v1436 = vsel %vm1404, %v1356, 0.0
        %v1437 = vsel %vm1405, %v1357, 0.0
        %v1438 = vsel %vm1406, %v1358, 0.0
        %v1439 = vsel %vm1407, %v1359, 0.0
        %v1440 = vsel %vm1408, %v1360, 0.0
        %v1441 = vsel %vm1409, %v1361, 0.0
        %v1442 = vsel %vm1410, %v1362, 0.0
        %v1443 = vsel %vm1411, %v1363, 0.0
        %v1444 = vsel %vm1412, %v1364, 0.0
        %v1445 = vsel %vm1413, %v1349, 0.0
        %v1446 = vsel %vm1414, %v1350, 0.0
        %v1447 = vsel %vm1415, %v1351, 0.0
        %v1448 = vsel %vm1416, %v1352, 0.0
        %v1449 = vsel %vm1417, %v1353, 0.0
        %v1450 = vsel %vm1418, %v1354, 0.0
        %v1451 = vsel %vm1419, %v1355, 0.0
        %v1452 = vsel %vm1420, %v1356, 0.0
        %v1453 = vsel %vm1421, %v1357, 0.0
        %v1454 = vsel %vm1422, %v1358, 0.0
        %v1455 = vsel %vm1423, %v1359, 0.0
        %v1456 = vsel %vm1424, %v1360, 0.0
        %v1457 = vsel %vm1425, %v1361, 0.0
        %v1458 = vsel %vm1426, %v1362, 0.0
        %v1459 = vsel %vm1427, %v1363, 0.0
        %v1460 = vsel %vm1428, %v1364, 0.0
        %v1461 = vadd.s32 %v1301, 1
        %v1462 = vadd.s32 %v1302, 1
        %v1463 = vadd.s32 %v1303, 1
        %v1464 = vadd.s32 %v1304, 1
        %v1465 = vadd.s32 %v1305, 1
        %v1466 = vadd.s32 %v1306, 1
        %v1467 = vadd.s32 %v1307, 1
        %v1468 = vadd.s32 %v1308, 1
        %v1469 = vadd.s32 %v1309, 1
        %v1470 = vadd.s32 %v1310, 1
        %v1471 = vadd.s32 %v1311, 1
        %v1472 = vadd.s32 %v1312, 1
        %v1473 = vadd.s32 %v1313, 1
        %v1474 = vadd.s32 %v1314, 1
        %v1475 = vadd.s32 %v1315, 1
        %v1476 = vadd.s32 %v1316, 1
        %vm1477 = vcmp.eq.s32.totalorder %v511, %v1461
        %vm1478 = vcmp.eq.s32.totalorder %v511, %v1462
        %vm1479 = vcmp.eq.s32.totalorder %v511, %v1463
        %vm1480 = vcmp.eq.s32.totalorder %v511, %v1464
        %vm1481 = vcmp.eq.s32.totalorder %v511, %v1465
        %vm1482 = vcmp.eq.s32.totalorder %v511, %v1466
        %vm1483 = vcmp.eq.s32.totalorder %v511, %v1467
        %vm1484 = vcmp.eq.s32.totalorder %v511, %v1468
        %vm1485 = vcmp.eq.s32.totalorder %v511, %v1469
        %vm1486 = vcmp.eq.s32.totalorder %v511, %v1470
        %vm1487 = vcmp.eq.s32.totalorder %v511, %v1471
        %vm1488 = vcmp.eq.s32.totalorder %v511, %v1472
        %vm1489 = vcmp.eq.s32.totalorder %v511, %v1473
        %vm1490 = vcmp.eq.s32.totalorder %v511, %v1474
        %vm1491 = vcmp.eq.s32.totalorder %v511, %v1475
        %vm1492 = vcmp.eq.s32.totalorder %v511, %v1476
        %vm1493 = vcmp.eq.s32.totalorder %v512, %v1461
        %vm1494 = vcmp.eq.s32.totalorder %v512, %v1462
        %vm1495 = vcmp.eq.s32.totalorder %v512, %v1463
        %vm1496 = vcmp.eq.s32.totalorder %v512, %v1464
        %vm1497 = vcmp.eq.s32.totalorder %v512, %v1465
        %vm1498 = vcmp.eq.s32.totalorder %v512, %v1466
        %vm1499 = vcmp.eq.s32.totalorder %v512, %v1467
        %vm1500 = vcmp.eq.s32.totalorder %v512, %v1468
        %vm1501 = vcmp.eq.s32.totalorder %v512, %v1469
        %vm1502 = vcmp.eq.s32.totalorder %v512, %v1470
        %vm1503 = vcmp.eq.s32.totalorder %v512, %v1471
        %vm1504 = vcmp.eq.s32.totalorder %v512, %v1472
        %vm1505 = vcmp.eq.s32.totalorder %v512, %v1473
        %vm1506 = vcmp.eq.s32.totalorder %v512, %v1474
        %vm1507 = vcmp.eq.s32.totalorder %v512, %v1475
        %vm1508 = vcmp.eq.s32.totalorder %v512, %v1476
        %v1509 = vsel %vm1477, %v1365, 0.0
        %v1510 = vsel %vm1478, %v1366, 0.0
        %v1511 = vsel %vm1479, %v1367, 0.0
        %v1512 = vsel %vm1480, %v1368, 0.0
        %v1513 = vsel %vm1481, %v1369, 0.0
        %v1514 = vsel %vm1482, %v1370, 0.0
        %v1515 = vsel %vm1483, %v1371, 0.0
        %v1516 = vsel %vm1484, %v1372, 0.0
        %v1517 = vsel %vm1485, %v1373, 0.0
        %v1518 = vsel %vm1486, %v1374, 0.0
        %v1519 = vsel %vm1487, %v1375, 0.0
        %v1520 = vsel %vm1488, %v1376, 0.0
        %v1521 = vsel %vm1489, %v1377, 0.0
        %v1522 = vsel %vm1490, %v1378, 0.0
        %v1523 = vsel %vm1491, %v1379, 0.0
        %v1524 = vsel %vm1492, %v1380, 0.0
        %v1525 = vsel %vm1493, %v1365, 0.0
        %v1526 = vsel %vm1494, %v1366, 0.0
        %v1527 = vsel %vm1495, %v1367, 0.0
        %v1528 = vsel %vm1496, %v1368, 0.0
        %v1529 = vsel %vm1497, %v1369, 0.0
        %v1530 = vsel %vm1498, %v1370, 0.0
        %v1531 = vsel %vm1499, %v1371, 0.0
        %v1532 = vsel %vm1500, %v1372, 0.0
        %v1533 = vsel %vm1501, %v1373, 0.0
        %v1534 = vsel %vm1502, %v1374, 0.0
        %v1535 = vsel %vm1503, %v1375, 0.0
        %v1536 = vsel %vm1504, %v1376, 0.0
        %v1537 = vsel %vm1505, %v1377, 0.0
        %v1538 = vsel %vm1506, %v1378, 0.0
        %v1539 = vsel %vm1507, %v1379, 0.0
        %v1540 = vsel %vm1508, %v1380, 0.0
        %v1541 = vadd.f32 %v1429, %v1509
        %v1542 = vadd.f32 %v1430, %v1510
        %v1543 = vadd.f32 %v1431, %v1511
        %v1544 = vadd.f32 %v1432, %v1512
        %v1545 = vadd.f32 %v1433, %v1513
        %v1546 = vadd.f32 %v1434, %v1514
        %v1547 = vadd.f32 %v1435, %v1515
        %v1548 = vadd.f32 %v1436, %v1516
        %v1549 = vadd.f32 %v1437, %v1517
        %v1550 = vadd.f32 %v1438, %v1518
        %v1551 = vadd.f32 %v1439, %v1519
        %v1552 = vadd.f32 %v1440, %v1520
        %v1553 = vadd.f32 %v1441, %v1521
        %v1554 = vadd.f32 %v1442, %v1522
        %v1555 = vadd.f32 %v1443, %v1523
        %v1556 = vadd.f32 %v1444, %v1524
        %v1557 = vadd.f32 %v1445, %v1525
        %v1558 = vadd.f32 %v1446, %v1526
        %v1559 = vadd.f32 %v1447, %v1527
        %v1560 = vadd.f32 %v1448, %v1528
        %v1561 = vadd.f32 %v1449, %v1529
        %v1562 = vadd.f32 %v1450, %v1530
        %v1563 = vadd.f32 %v1451, %v1531
        %v1564 = vadd.f32 %v1452, %v1532
        %v1565 = vadd.f32 %v1453, %v1533
        %v1566 = vadd.f32 %v1454, %v1534
        %v1567 = vadd.f32 %v1455, %v1535
        %v1568 = vadd.f32 %v1456, %v1536
        %v1569 = vadd.f32 %v1457, %v1537
        %v1570 = vadd.f32 %v1458, %v1538
        %v1571 = vadd.f32 %v1459, %v1539
        %v1572 = vadd.f32 %v1460, %v1540
        %vm1573 = vcmp.eq.s32.totalorder %v511, %v1317
        %vm1574 = vcmp.eq.s32.totalorder %v511, %v1318
        %vm1575 = vcmp.eq.s32.totalorder %v511, %v1319
        %vm1576 = vcmp.eq.s32.totalorder %v511, %v1320
        %vm1577 = vcmp.eq.s32.totalorder %v511, %v1321
        %vm1578 = vcmp.eq.s32.totalorder %v511, %v1322
        %vm1579 = vcmp.eq.s32.totalorder %v511, %v1323
        %vm1580 = vcmp.eq.s32.totalorder %v511, %v1324
        %vm1581 = vcmp.eq.s32.totalorder %v511, %v1325
        %vm1582 = vcmp.eq.s32.totalorder %v511, %v1326
        %vm1583 = vcmp.eq.s32.totalorder %v511, %v1327
        %vm1584 = vcmp.eq.s32.totalorder %v511, %v1328
        %vm1585 = vcmp.eq.s32.totalorder %v511, %v1329
        %vm1586 = vcmp.eq.s32.totalorder %v511, %v1330
        %vm1587 = vcmp.eq.s32.totalorder %v511, %v1331
        %vm1588 = vcmp.eq.s32.totalorder %v511, %v1332
        %vm1589 = vcmp.eq.s32.totalorder %v512, %v1317
        %vm1590 = vcmp.eq.s32.totalorder %v512, %v1318
        %vm1591 = vcmp.eq.s32.totalorder %v512, %v1319
        %vm1592 = vcmp.eq.s32.totalorder %v512, %v1320
        %vm1593 = vcmp.eq.s32.totalorder %v512, %v1321
        %vm1594 = vcmp.eq.s32.totalorder %v512, %v1322
        %vm1595 = vcmp.eq.s32.totalorder %v512, %v1323
        %vm1596 = vcmp.eq.s32.totalorder %v512, %v1324
        %vm1597 = vcmp.eq.s32.totalorder %v512, %v1325
        %vm1598 = vcmp.eq.s32.totalorder %v512, %v1326
        %vm1599 = vcmp.eq.s32.totalorder %v512, %v1327
        %vm1600 = vcmp.eq.s32.totalorder %v512, %v1328
        %vm1601 = vcmp.eq.s32.totalorder %v512, %v1329
        %vm1602 = vcmp.eq.s32.totalorder %v512, %v1330
        %vm1603 = vcmp.eq.s32.totalorder %v512, %v1331
        %vm1604 = vcmp.eq.s32.totalorder %v512, %v1332
        %v1605 = vsel %vm1573, %v1381, 0.0
        %v1606 = vsel %vm1574, %v1382, 0.0
        %v1607 = vsel %vm1575, %v1383, 0.0
        %v1608 = vsel %vm1576, %v1384, 0.0
        %v1609 = vsel %vm1577, %v1385, 0.0
        %v1610 = vsel %vm1578, %v1386, 0.0
        %v1611 = vsel %vm1579, %v1387, 0.0
        %v1612 = vsel %vm1580, %v1388, 0.0
        %v1613 = vsel %vm1581, %v1389, 0.0
        %v1614 = vsel %vm1582, %v1390, 0.0
        %v1615 = vsel %vm1583, %v1391, 0.0
        %v1616 = vsel %vm1584, %v1392, 0.0
        %v1617 = vsel %vm1585, %v1393, 0.0
        %v1618 = vsel %vm1586, %v1394, 0.0
        %v1619 = vsel %vm1587, %v1395, 0.0
        %v1620 = vsel %vm1588, %v1396, 0.0
        %v1621 = vsel %vm1589, %v1381, 0.0
        %v1622 = vsel %vm1590, %v1382, 0.0
        %v1623 = vsel %vm1591, %v1383, 0.0
        %v1624 = vsel %vm1592, %v1384, 0.0
        %v1625 = vsel %vm1593, %v1385, 0.0
        %v1626 = vsel %vm1594, %v1386, 0.0
        %v1627 = vsel %vm1595, %v1387, 0.0
        %v1628 = vsel %vm1596, %v1388, 0.0
        %v1629 = vsel %vm1597, %v1389, 0.0
        %v1630 = vsel %vm1598, %v1390, 0.0
        %v1631 = vsel %vm1599, %v1391, 0.0
        %v1632 = vsel %vm1600, %v1392, 0.0
        %v1633 = vsel %vm1601, %v1393, 0.0
        %v1634 = vsel %vm1602, %v1394, 0.0
        %v1635 = vsel %vm1603, %v1395, 0.0
        %v1636 = vsel %vm1604, %v1396, 0.0
        %v1637 = vadd.s32 %v1317, 1
        %v1638 = vadd.s32 %v1318, 1
        %v1639 = vadd.s32 %v1319, 1
        %v1640 = vadd.s32 %v1320, 1
        %v1641 = vadd.s32 %v1321, 1
        %v1642 = vadd.s32 %v1322, 1
        %v1643 = vadd.s32 %v1323, 1
        %v1644 = vadd.s32 %v1324, 1
        %v1645 = vadd.s32 %v1325, 1
        %v1646 = vadd.s32 %v1326, 1
        %v1647 = vadd.s32 %v1327, 1
        %v1648 = vadd.s32 %v1328, 1
        %v1649 = vadd.s32 %v1329, 1
        %v1650 = vadd.s32 %v1330, 1
        %v1651 = vadd.s32 %v1331, 1
        %v1652 = vadd.s32 %v1332, 1
        %vm1653 = vcmp.eq.s32.totalorder %v511, %v1637
        %vm1654 = vcmp.eq.s32.totalorder %v511, %v1638
        %vm1655 = vcmp.eq.s32.totalorder %v511, %v1639
        %vm1656 = vcmp.eq.s32.totalorder %v511, %v1640
        %vm1657 = vcmp.eq.s32.totalorder %v511, %v1641
        %vm1658 = vcmp.eq.s32.totalorder %v511, %v1642
        %vm1659 = vcmp.eq.s32.totalorder %v511, %v1643
        %vm1660 = vcmp.eq.s32.totalorder %v511, %v1644
        %vm1661 = vcmp.eq.s32.totalorder %v511, %v1645
        %vm1662 = vcmp.eq.s32.totalorder %v511, %v1646
        %vm1663 = vcmp.eq.s32.totalorder %v511, %v1647
        %vm1664 = vcmp.eq.s32.totalorder %v511, %v1648
        %vm1665 = vcmp.eq.s32.totalorder %v511, %v1649
        %vm1666 = vcmp.eq.s32.totalorder %v511, %v1650
        %vm1667 = vcmp.eq.s32.totalorder %v511, %v1651
        %vm1668 = vcmp.eq.s32.totalorder %v511, %v1652
        %vm1669 = vcmp.eq.s32.totalorder %v512, %v1637
        %vm1670 = vcmp.eq.s32.totalorder %v512, %v1638
        %vm1671 = vcmp.eq.s32.totalorder %v512, %v1639
        %vm1672 = vcmp.eq.s32.totalorder %v512, %v1640
        %vm1673 = vcmp.eq.s32.totalorder %v512, %v1641
        %vm1674 = vcmp.eq.s32.totalorder %v512, %v1642
        %vm1675 = vcmp.eq.s32.totalorder %v512, %v1643
        %vm1676 = vcmp.eq.s32.totalorder %v512, %v1644
        %vm1677 = vcmp.eq.s32.totalorder %v512, %v1645
        %vm1678 = vcmp.eq.s32.totalorder %v512, %v1646
        %vm1679 = vcmp.eq.s32.totalorder %v512, %v1647
        %vm1680 = vcmp.eq.s32.totalorder %v512, %v1648
        %vm1681 = vcmp.eq.s32.totalorder %v512, %v1649
        %vm1682 = vcmp.eq.s32.totalorder %v512, %v1650
        %vm1683 = vcmp.eq.s32.totalorder %v512, %v1651
        %vm1684 = vcmp.eq.s32.totalorder %v512, %v1652
        %v1685 = vsel %vm1653, %v1077, 0.0
        %v1686 = vsel %vm1654, %v1078, 0.0
        %v1687 = vsel %vm1655, %v1079, 0.0
        %v1688 = vsel %vm1656, %v1080, 0.0
        %v1689 = vsel %vm1657, %v1081, 0.0
        %v1690 = vsel %vm1658, %v1082, 0.0
        %v1691 = vsel %vm1659, %v1083, 0.0
        %v1692 = vsel %vm1660, %v1084, 0.0
        %v1693 = vsel %vm1661, %v1085, 0.0
        %v1694 = vsel %vm1662, %v1086, 0.0
        %v1695 = vsel %vm1663, %v1087, 0.0
        %v1696 = vsel %vm1664, %v1088, 0.0
        %v1697 = vsel %vm1665, %v1089, 0.0
        %v1698 = vsel %vm1666, %v1090, 0.0
        %v1699 = vsel %vm1667, %v1091, 0.0
        %v1700 = vsel %vm1668, %v1092, 0.0
        %v1701 = vsel %vm1669, %v1077, 0.0
        %v1702 = vsel %vm1670, %v1078, 0.0
        %v1703 = vsel %vm1671, %v1079, 0.0
        %v1704 = vsel %vm1672, %v1080, 0.0
        %v1705 = vsel %vm1673, %v1081, 0.0
        %v1706 = vsel %vm1674, %v1082, 0.0
        %v1707 = vsel %vm1675, %v1083, 0.0
        %v1708 = vsel %vm1676, %v1084, 0.0
        %v1709 = vsel %vm1677, %v1085, 0.0
        %v1710 = vsel %vm1678, %v1086, 0.0
        %v1711 = vsel %vm1679, %v1087, 0.0
        %v1712 = vsel %vm1680, %v1088, 0.0
        %v1713 = vsel %vm1681, %v1089, 0.0
        %v1714 = vsel %vm1682, %v1090, 0.0
        %v1715 = vsel %vm1683, %v1091, 0.0
        %v1716 = vsel %vm1684, %v1092, 0.0
        %v1717 = vadd.f32 %v1605, %v1685
        %v1718 = vadd.f32 %v1606, %v1686
        %v1719 = vadd.f32 %v1607, %v1687
        %v1720 = vadd.f32 %v1608, %v1688
        %v1721 = vadd.f32 %v1609, %v1689
        %v1722 = vadd.f32 %v1610, %v1690
        %v1723 = vadd.f32 %v1611, %v1691
        %v1724 = vadd.f32 %v1612, %v1692
        %v1725 = vadd.f32 %v1613, %v1693
        %v1726 = vadd.f32 %v1614, %v1694
        %v1727 = vadd.f32 %v1615, %v1695
        %v1728 = vadd.f32 %v1616, %v1696
        %v1729 = vadd.f32 %v1617, %v1697
        %v1730 = vadd.f32 %v1618, %v1698
        %v1731 = vadd.f32 %v1619, %v1699
        %v1732 = vadd.f32 %v1620, %v1700
        %v1733 = vadd.f32 %v1621, %v1701
        %v1734 = vadd.f32 %v1622, %v1702
        %v1735 = vadd.f32 %v1623, %v1703
        %v1736 = vadd.f32 %v1624, %v1704
        %v1737 = vadd.f32 %v1625, %v1705
        %v1738 = vadd.f32 %v1626, %v1706
        %v1739 = vadd.f32 %v1627, %v1707
        %v1740 = vadd.f32 %v1628, %v1708
        %v1741 = vadd.f32 %v1629, %v1709
        %v1742 = vadd.f32 %v1630, %v1710
        %v1743 = vadd.f32 %v1631, %v1711
        %v1744 = vadd.f32 %v1632, %v1712
        %v1745 = vadd.f32 %v1633, %v1713
        %v1746 = vadd.f32 %v1634, %v1714
        %v1747 = vadd.f32 %v1635, %v1715
        %v1748 = vadd.f32 %v1636, %v1716
        %v1749 = vld [vmem:[%s169] sm:$0xff]
        %v1750 = vld [vmem:[%s169 + $0x8] sm:$0xff]
        %v1751 = vld [vmem:[%s169 + $0x10] sm:$0xff]
        %v1752 = vld [vmem:[%s169 + $0x18] sm:$0xff]
        %vm1753 = vcmask 130048
        %v1755 = vsel %vm1753, %v1749, 0
        %v1758 = vsel %vm1753, %v1750, 0
        %v1761 = vsel %vm1753, %v1751, 0
        %v1764 = vsel %vm1753, %v1752, 0
        %1766 = vmatpush.msra.mxu0 0.0
        %1767 = vmatpush.msra.mxu0 0.0
        %1768 = vmatpush.msra.mxu0 0.0
        %1769 = vmatpush.msra.mxu0 0.0
        %1770 = vmatpush.msra.mxu0 0.0
        %1771 = vmatpush.msra.mxu0 0.0
        %1772 = vmatpush.msra.mxu0 0.0
        %1773 = vmatpush.msra.mxu0 0.0
        %1774 = vmatpush.msra.mxu0 0.0
        %1775 = vmatpush.msra.mxu0 0.0
        %1776 = vmatpush.msra.mxu0 0.0
        %1777 = vmatpush.msra.mxu0 0.0
        %1778 = vmatpush.msra.mxu0 0.0
        %1779 = vmatpush.msra.mxu0 0.0
        %1780 = vmatpush.msra.mxu0 %v1557
        %1781 = vmatpush.msra.mxu0 %v1541
        %1782 = vmatmul.f32.gmra.mxu0 %v1755
        %v1783 = vpop.f32.mrf.mxu0
        %v1784 = vadd.f32 0.0, %v1783
        %1785 = vmatmul.f32.gmra.mxu0 %v1758
        %v1786 = vpop.f32.mrf.mxu0
        %v1787 = vadd.f32 0.0, %v1786
        %1788 = vmatmul.f32.gmra.mxu0 %v1761
        %v1789 = vpop.f32.mrf.mxu0
        %v1790 = vadd.f32 0.0, %v1789
        %1791 = vmatmul.f32.gmra.mxu0 %v1764
        %v1792 = vpop.f32.mrf.mxu0
        %v1793 = vadd.f32 0.0, %v1792
        %1794 = vdwg.mxu0
        %1795 = vmatpush.msra.mxu0 0.0
        %1796 = vmatpush.msra.mxu0 0.0
        %1797 = vmatpush.msra.mxu0 0.0
        %1798 = vmatpush.msra.mxu0 0.0
        %1799 = vmatpush.msra.mxu0 0.0
        %1800 = vmatpush.msra.mxu0 0.0
        %1801 = vmatpush.msra.mxu0 0.0
        %1802 = vmatpush.msra.mxu0 0.0
        %1803 = vmatpush.msra.mxu0 0.0
        %1804 = vmatpush.msra.mxu0 0.0
        %1805 = vmatpush.msra.mxu0 0.0
        %1806 = vmatpush.msra.mxu0 0.0
        %1807 = vmatpush.msra.mxu0 0.0
        %1808 = vmatpush.msra.mxu0 0.0
        %1809 = vmatpush.msra.mxu0 %v1558
        %1810 = vmatpush.msra.mxu0 %v1542
        %1811 = vmatmul.f32.gmra.mxu0 %v1755
        %v1812 = vpop.f32.mrf.mxu0
        %v1813 = vadd.f32 0.0, %v1812
        %1814 = vmatmul.f32.gmra.mxu0 %v1758
        %v1815 = vpop.f32.mrf.mxu0
        %v1816 = vadd.f32 0.0, %v1815
        %1817 = vmatmul.f32.gmra.mxu0 %v1761
        %v1818 = vpop.f32.mrf.mxu0
        %v1819 = vadd.f32 0.0, %v1818
        %1820 = vmatmul.f32.gmra.mxu0 %v1764
        %v1821 = vpop.f32.mrf.mxu0
        %v1822 = vadd.f32 0.0, %v1821
        %1823 = vdwg.mxu0
        %1824 = vmatpush.msra.mxu0 0.0
        %1825 = vmatpush.msra.mxu0 0.0
        %1826 = vmatpush.msra.mxu0 0.0
        %1827 = vmatpush.msra.mxu0 0.0
        %1828 = vmatpush.msra.mxu0 0.0
        %1829 = vmatpush.msra.mxu0 0.0
        %1830 = vmatpush.msra.mxu0 0.0
        %1831 = vmatpush.msra.mxu0 0.0
        %1832 = vmatpush.msra.mxu0 0.0
        %1833 = vmatpush.msra.mxu0 0.0
        %1834 = vmatpush.msra.mxu0 0.0
        %1835 = vmatpush.msra.mxu0 0.0
        %1836 = vmatpush.msra.mxu0 0.0
        %1837 = vmatpush.msra.mxu0 0.0
        %1838 = vmatpush.msra.mxu0 %v1559
        %1839 = vmatpush.msra.mxu0 %v1543
        %1840 = vmatmul.f32.gmra.mxu0 %v1755
        %v1841 = vpop.f32.mrf.mxu0
        %v1842 = vadd.f32 0.0, %v1841
        %1843 = vmatmul.f32.gmra.mxu0 %v1758
        %v1844 = vpop.f32.mrf.mxu0
        %v1845 = vadd.f32 0.0, %v1844
        %1846 = vmatmul.f32.gmra.mxu0 %v1761
        %v1847 = vpop.f32.mrf.mxu0
        %v1848 = vadd.f32 0.0, %v1847
        %1849 = vmatmul.f32.gmra.mxu0 %v1764
        %v1850 = vpop.f32.mrf.mxu0
        %v1851 = vadd.f32 0.0, %v1850
        %1852 = vdwg.mxu0
        %1853 = vmatpush.msra.mxu0 0.0
        %1854 = vmatpush.msra.mxu0 0.0
        %1855 = vmatpush.msra.mxu0 0.0
        %1856 = vmatpush.msra.mxu0 0.0
        %1857 = vmatpush.msra.mxu0 0.0
        %1858 = vmatpush.msra.mxu0 0.0
        %1859 = vmatpush.msra.mxu0 0.0
        %1860 = vmatpush.msra.mxu0 0.0
        %1861 = vmatpush.msra.mxu0 0.0
        %1862 = vmatpush.msra.mxu0 0.0
        %1863 = vmatpush.msra.mxu0 0.0
        %1864 = vmatpush.msra.mxu0 0.0
        %1865 = vmatpush.msra.mxu0 0.0
        %1866 = vmatpush.msra.mxu0 0.0
        %1867 = vmatpush.msra.mxu0 %v1560
        %1868 = vmatpush.msra.mxu0 %v1544
        %1869 = vmatmul.f32.gmra.mxu0 %v1755
        %v1870 = vpop.f32.mrf.mxu0
        %v1871 = vadd.f32 0.0, %v1870
        %1872 = vmatmul.f32.gmra.mxu0 %v1758
        %v1873 = vpop.f32.mrf.mxu0
        %v1874 = vadd.f32 0.0, %v1873
        %1875 = vmatmul.f32.gmra.mxu0 %v1761
        %v1876 = vpop.f32.mrf.mxu0
        %v1877 = vadd.f32 0.0, %v1876
        %1878 = vmatmul.f32.gmra.mxu0 %v1764
        %v1879 = vpop.f32.mrf.mxu0
        %v1880 = vadd.f32 0.0, %v1879
        %1881 = vdwg.mxu0
        %1882 = vmatpush.msra.mxu0 0.0
        %1883 = vmatpush.msra.mxu0 0.0
        %1884 = vmatpush.msra.mxu0 0.0
        %1885 = vmatpush.msra.mxu0 0.0
        %1886 = vmatpush.msra.mxu0 0.0
        %1887 = vmatpush.msra.mxu0 0.0
        %1888 = vmatpush.msra.mxu0 0.0
        %1889 = vmatpush.msra.mxu0 0.0
        %1890 = vmatpush.msra.mxu0 0.0
        %1891 = vmatpush.msra.mxu0 0.0
        %1892 = vmatpush.msra.mxu0 0.0
        %1893 = vmatpush.msra.mxu0 0.0
        %1894 = vmatpush.msra.mxu0 0.0
        %1895 = vmatpush.msra.mxu0 0.0
        %1896 = vmatpush.msra.mxu0 %v1561
        %1897 = vmatpush.msra.mxu0 %v1545
        %1898 = vmatmul.f32.gmra.mxu0 %v1755
        %v1899 = vpop.f32.mrf.mxu0
        %v1900 = vadd.f32 0.0, %v1899
        %1901 = vmatmul.f32.gmra.mxu0 %v1758
        %v1902 = vpop.f32.mrf.mxu0
        %v1903 = vadd.f32 0.0, %v1902
        %1904 = vmatmul.f32.gmra.mxu0 %v1761
        %v1905 = vpop.f32.mrf.mxu0
        %v1906 = vadd.f32 0.0, %v1905
        %1907 = vmatmul.f32.gmra.mxu0 %v1764
        %v1908 = vpop.f32.mrf.mxu0
        %v1909 = vadd.f32 0.0, %v1908
        %1910 = vdwg.mxu0
        %1911 = vmatpush.msra.mxu0 0.0
        %1912 = vmatpush.msra.mxu0 0.0
        %1913 = vmatpush.msra.mxu0 0.0
        %1914 = vmatpush.msra.mxu0 0.0
        %1915 = vmatpush.msra.mxu0 0.0
        %1916 = vmatpush.msra.mxu0 0.0
        %1917 = vmatpush.msra.mxu0 0.0
        %1918 = vmatpush.msra.mxu0 0.0
        %1919 = vmatpush.msra.mxu0 0.0
        %1920 = vmatpush.msra.mxu0 0.0
        %1921 = vmatpush.msra.mxu0 0.0
        %1922 = vmatpush.msra.mxu0 0.0
        %1923 = vmatpush.msra.mxu0 0.0
        %1924 = vmatpush.msra.mxu0 0.0
        %1925 = vmatpush.msra.mxu0 %v1562
        %1926 = vmatpush.msra.mxu0 %v1546
        %1927 = vmatmul.f32.gmra.mxu0 %v1755
        %v1928 = vpop.f32.mrf.mxu0
        %v1929 = vadd.f32 0.0, %v1928
        %1930 = vmatmul.f32.gmra.mxu0 %v1758
        %v1931 = vpop.f32.mrf.mxu0
        %v1932 = vadd.f32 0.0, %v1931
        %1933 = vmatmul.f32.gmra.mxu0 %v1761
        %v1934 = vpop.f32.mrf.mxu0
        %v1935 = vadd.f32 0.0, %v1934
        %1936 = vmatmul.f32.gmra.mxu0 %v1764
        %v1937 = vpop.f32.mrf.mxu0
        %v1938 = vadd.f32 0.0, %v1937
        %1939 = vdwg.mxu0
        %1940 = vmatpush.msra.mxu0 0.0
        %1941 = vmatpush.msra.mxu0 0.0
        %1942 = vmatpush.msra.mxu0 0.0
        %1943 = vmatpush.msra.mxu0 0.0
        %1944 = vmatpush.msra.mxu0 0.0
        %1945 = vmatpush.msra.mxu0 0.0
        %1946 = vmatpush.msra.mxu0 0.0
        %1947 = vmatpush.msra.mxu0 0.0
        %1948 = vmatpush.msra.mxu0 0.0
        %1949 = vmatpush.msra.mxu0 0.0
        %1950 = vmatpush.msra.mxu0 0.0
        %1951 = vmatpush.msra.mxu0 0.0
        %1952 = vmatpush.msra.mxu0 0.0
        %1953 = vmatpush.msra.mxu0 0.0
        %1954 = vmatpush.msra.mxu0 %v1563
        %1955 = vmatpush.msra.mxu0 %v1547
        %1956 = vmatmul.f32.gmra.mxu0 %v1755
        %v1957 = vpop.f32.mrf.mxu0
        %v1958 = vadd.f32 0.0, %v1957
        %1959 = vmatmul.f32.gmra.mxu0 %v1758
        %v1960 = vpop.f32.mrf.mxu0
        %v1961 = vadd.f32 0.0, %v1960
        %1962 = vmatmul.f32.gmra.mxu0 %v1761
        %v1963 = vpop.f32.mrf.mxu0
        %v1964 = vadd.f32 0.0, %v1963
        %1965 = vmatmul.f32.gmra.mxu0 %v1764
        %v1966 = vpop.f32.mrf.mxu0
        %v1967 = vadd.f32 0.0, %v1966
        %1968 = vdwg.mxu0
        %1969 = vmatpush.msra.mxu0 0.0
        %1970 = vmatpush.msra.mxu0 0.0
        %1971 = vmatpush.msra.mxu0 0.0
        %1972 = vmatpush.msra.mxu0 0.0
        %1973 = vmatpush.msra.mxu0 0.0
        %1974 = vmatpush.msra.mxu0 0.0
        %1975 = vmatpush.msra.mxu0 0.0
        %1976 = vmatpush.msra.mxu0 0.0
        %1977 = vmatpush.msra.mxu0 0.0
        %1978 = vmatpush.msra.mxu0 0.0
        %1979 = vmatpush.msra.mxu0 0.0
        %1980 = vmatpush.msra.mxu0 0.0
        %1981 = vmatpush.msra.mxu0 0.0
        %1982 = vmatpush.msra.mxu0 0.0
        %1983 = vmatpush.msra.mxu0 %v1564
        %1984 = vmatpush.msra.mxu0 %v1548
        %1985 = vmatmul.f32.gmra.mxu0 %v1755
        %v1986 = vpop.f32.mrf.mxu0
        %v1987 = vadd.f32 0.0, %v1986
        %1988 = vmatmul.f32.gmra.mxu0 %v1758
        %v1989 = vpop.f32.mrf.mxu0
        %v1990 = vadd.f32 0.0, %v1989
        %1991 = vmatmul.f32.gmra.mxu0 %v1761
        %v1992 = vpop.f32.mrf.mxu0
        %v1993 = vadd.f32 0.0, %v1992
        %1994 = vmatmul.f32.gmra.mxu0 %v1764
        %v1995 = vpop.f32.mrf.mxu0
        %v1996 = vadd.f32 0.0, %v1995
        %1997 = vdwg.mxu0
        %1998 = vmatpush.msra.mxu0 0.0
        %1999 = vmatpush.msra.mxu0 0.0
        %2000 = vmatpush.msra.mxu0 0.0
        %2001 = vmatpush.msra.mxu0 0.0
        %2002 = vmatpush.msra.mxu0 0.0
        %2003 = vmatpush.msra.mxu0 0.0
        %2004 = vmatpush.msra.mxu0 0.0
        %2005 = vmatpush.msra.mxu0 0.0
        %2006 = vmatpush.msra.mxu0 0.0
        %2007 = vmatpush.msra.mxu0 0.0
        %2008 = vmatpush.msra.mxu0 0.0
        %2009 = vmatpush.msra.mxu0 0.0
        %2010 = vmatpush.msra.mxu0 0.0
        %2011 = vmatpush.msra.mxu0 0.0
        %2012 = vmatpush.msra.mxu0 %v1565
        %2013 = vmatpush.msra.mxu0 %v1549
        %2014 = vmatmul.f32.gmra.mxu0 %v1755
        %v2015 = vpop.f32.mrf.mxu0
        %v2016 = vadd.f32 0.0, %v2015
        %2017 = vmatmul.f32.gmra.mxu0 %v1758
        %v2018 = vpop.f32.mrf.mxu0
        %v2019 = vadd.f32 0.0, %v2018
        %2020 = vmatmul.f32.gmra.mxu0 %v1761
        %v2021 = vpop.f32.mrf.mxu0
        %v2022 = vadd.f32 0.0, %v2021
        %2023 = vmatmul.f32.gmra.mxu0 %v1764
        %v2024 = vpop.f32.mrf.mxu0
        %v2025 = vadd.f32 0.0, %v2024
        %2026 = vdwg.mxu0
        %2027 = vmatpush.msra.mxu0 0.0
        %2028 = vmatpush.msra.mxu0 0.0
        %2029 = vmatpush.msra.mxu0 0.0
        %2030 = vmatpush.msra.mxu0 0.0
        %2031 = vmatpush.msra.mxu0 0.0
        %2032 = vmatpush.msra.mxu0 0.0
        %2033 = vmatpush.msra.mxu0 0.0
        %2034 = vmatpush.msra.mxu0 0.0
        %2035 = vmatpush.msra.mxu0 0.0
        %2036 = vmatpush.msra.mxu0 0.0
        %2037 = vmatpush.msra.mxu0 0.0
        %2038 = vmatpush.msra.mxu0 0.0
        %2039 = vmatpush.msra.mxu0 0.0
        %2040 = vmatpush.msra.mxu0 0.0
        %2041 = vmatpush.msra.mxu0 %v1566
        %2042 = vmatpush.msra.mxu0 %v1550
        %2043 = vmatmul.f32.gmra.mxu0 %v1755
        %v2044 = vpop.f32.mrf.mxu0
        %v2045 = vadd.f32 0.0, %v2044
        %2046 = vmatmul.f32.gmra.mxu0 %v1758
        %v2047 = vpop.f32.mrf.mxu0
        %v2048 = vadd.f32 0.0, %v2047
        %2049 = vmatmul.f32.gmra.mxu0 %v1761
        %v2050 = vpop.f32.mrf.mxu0
        %v2051 = vadd.f32 0.0, %v2050
        %2052 = vmatmul.f32.gmra.mxu0 %v1764
        %v2053 = vpop.f32.mrf.mxu0
        %v2054 = vadd.f32 0.0, %v2053
        %2055 = vdwg.mxu0
        %2056 = vmatpush.msra.mxu0 0.0
        %2057 = vmatpush.msra.mxu0 0.0
        %2058 = vmatpush.msra.mxu0 0.0
        %2059 = vmatpush.msra.mxu0 0.0
        %2060 = vmatpush.msra.mxu0 0.0
        %2061 = vmatpush.msra.mxu0 0.0
        %2062 = vmatpush.msra.mxu0 0.0
        %2063 = vmatpush.msra.mxu0 0.0
        %2064 = vmatpush.msra.mxu0 0.0
        %2065 = vmatpush.msra.mxu0 0.0
        %2066 = vmatpush.msra.mxu0 0.0
        %2067 = vmatpush.msra.mxu0 0.0
        %2068 = vmatpush.msra.mxu0 0.0
        %2069 = vmatpush.msra.mxu0 0.0
        %2070 = vmatpush.msra.mxu0 %v1567
        %2071 = vmatpush.msra.mxu0 %v1551
        %2072 = vmatmul.f32.gmra.mxu0 %v1755
        %v2073 = vpop.f32.mrf.mxu0
        %v2074 = vadd.f32 0.0, %v2073
        %2075 = vmatmul.f32.gmra.mxu0 %v1758
        %v2076 = vpop.f32.mrf.mxu0
        %v2077 = vadd.f32 0.0, %v2076
        %2078 = vmatmul.f32.gmra.mxu0 %v1761
        %v2079 = vpop.f32.mrf.mxu0
        %v2080 = vadd.f32 0.0, %v2079
        %2081 = vmatmul.f32.gmra.mxu0 %v1764
        %v2082 = vpop.f32.mrf.mxu0
        %v2083 = vadd.f32 0.0, %v2082
        %2084 = vdwg.mxu0
        %2085 = vmatpush.msra.mxu0 0.0
        %2086 = vmatpush.msra.mxu0 0.0
        %2087 = vmatpush.msra.mxu0 0.0
        %2088 = vmatpush.msra.mxu0 0.0
        %2089 = vmatpush.msra.mxu0 0.0
        %2090 = vmatpush.msra.mxu0 0.0
        %2091 = vmatpush.msra.mxu0 0.0
        %2092 = vmatpush.msra.mxu0 0.0
        %2093 = vmatpush.msra.mxu0 0.0
        %2094 = vmatpush.msra.mxu0 0.0
        %2095 = vmatpush.msra.mxu0 0.0
        %2096 = vmatpush.msra.mxu0 0.0
        %2097 = vmatpush.msra.mxu0 0.0
        %2098 = vmatpush.msra.mxu0 0.0
        %2099 = vmatpush.msra.mxu0 %v1568
        %2100 = vmatpush.msra.mxu0 %v1552
        %2101 = vmatmul.f32.gmra.mxu0 %v1755
        %v2102 = vpop.f32.mrf.mxu0
        %v2103 = vadd.f32 0.0, %v2102
        %2104 = vmatmul.f32.gmra.mxu0 %v1758
        %v2105 = vpop.f32.mrf.mxu0
        %v2106 = vadd.f32 0.0, %v2105
        %2107 = vmatmul.f32.gmra.mxu0 %v1761
        %v2108 = vpop.f32.mrf.mxu0
        %v2109 = vadd.f32 0.0, %v2108
        %2110 = vmatmul.f32.gmra.mxu0 %v1764
        %v2111 = vpop.f32.mrf.mxu0
        %v2112 = vadd.f32 0.0, %v2111
        %2113 = vdwg.mxu0
        %2114 = vmatpush.msra.mxu0 0.0
        %2115 = vmatpush.msra.mxu0 0.0
        %2116 = vmatpush.msra.mxu0 0.0
        %2117 = vmatpush.msra.mxu0 0.0
        %2118 = vmatpush.msra.mxu0 0.0
        %2119 = vmatpush.msra.mxu0 0.0
        %2120 = vmatpush.msra.mxu0 0.0
        %2121 = vmatpush.msra.mxu0 0.0
        %2122 = vmatpush.msra.mxu0 0.0
        %2123 = vmatpush.msra.mxu0 0.0
        %2124 = vmatpush.msra.mxu0 0.0
        %2125 = vmatpush.msra.mxu0 0.0
        %2126 = vmatpush.msra.mxu0 0.0
        %2127 = vmatpush.msra.mxu0 0.0
        %2128 = vmatpush.msra.mxu0 %v1569
        %2129 = vmatpush.msra.mxu0 %v1553
        %2130 = vmatmul.f32.gmra.mxu0 %v1755
        %v2131 = vpop.f32.mrf.mxu0
        %v2132 = vadd.f32 0.0, %v2131
        %2133 = vmatmul.f32.gmra.mxu0 %v1758
        %v2134 = vpop.f32.mrf.mxu0
        %v2135 = vadd.f32 0.0, %v2134
        %2136 = vmatmul.f32.gmra.mxu0 %v1761
        %v2137 = vpop.f32.mrf.mxu0
        %v2138 = vadd.f32 0.0, %v2137
        %2139 = vmatmul.f32.gmra.mxu0 %v1764
        %v2140 = vpop.f32.mrf.mxu0
        %v2141 = vadd.f32 0.0, %v2140
        %2142 = vdwg.mxu0
        %2143 = vmatpush.msra.mxu0 0.0
        %2144 = vmatpush.msra.mxu0 0.0
        %2145 = vmatpush.msra.mxu0 0.0
        %2146 = vmatpush.msra.mxu0 0.0
        %2147 = vmatpush.msra.mxu0 0.0
        %2148 = vmatpush.msra.mxu0 0.0
        %2149 = vmatpush.msra.mxu0 0.0
        %2150 = vmatpush.msra.mxu0 0.0
        %2151 = vmatpush.msra.mxu0 0.0
        %2152 = vmatpush.msra.mxu0 0.0
        %2153 = vmatpush.msra.mxu0 0.0
        %2154 = vmatpush.msra.mxu0 0.0
        %2155 = vmatpush.msra.mxu0 0.0
        %2156 = vmatpush.msra.mxu0 0.0
        %2157 = vmatpush.msra.mxu0 %v1570
        %2158 = vmatpush.msra.mxu0 %v1554
        %2159 = vmatmul.f32.gmra.mxu0 %v1755
        %v2160 = vpop.f32.mrf.mxu0
        %v2161 = vadd.f32 0.0, %v2160
        %2162 = vmatmul.f32.gmra.mxu0 %v1758
        %v2163 = vpop.f32.mrf.mxu0
        %v2164 = vadd.f32 0.0, %v2163
        %2165 = vmatmul.f32.gmra.mxu0 %v1761
        %v2166 = vpop.f32.mrf.mxu0
        %v2167 = vadd.f32 0.0, %v2166
        %2168 = vmatmul.f32.gmra.mxu0 %v1764
        %v2169 = vpop.f32.mrf.mxu0
        %v2170 = vadd.f32 0.0, %v2169
        %2171 = vdwg.mxu0
        %2172 = vmatpush.msra.mxu0 0.0
        %2173 = vmatpush.msra.mxu0 0.0
        %2174 = vmatpush.msra.mxu0 0.0
        %2175 = vmatpush.msra.mxu0 0.0
        %2176 = vmatpush.msra.mxu0 0.0
        %2177 = vmatpush.msra.mxu0 0.0
        %2178 = vmatpush.msra.mxu0 0.0
        %2179 = vmatpush.msra.mxu0 0.0
        %2180 = vmatpush.msra.mxu0 0.0
        %2181 = vmatpush.msra.mxu0 0.0
        %2182 = vmatpush.msra.mxu0 0.0
        %2183 = vmatpush.msra.mxu0 0.0
        %2184 = vmatpush.msra.mxu0 0.0
        %2185 = vmatpush.msra.mxu0 0.0
        %2186 = vmatpush.msra.mxu0 %v1571
        %2187 = vmatpush.msra.mxu0 %v1555
        %2188 = vmatmul.f32.gmra.mxu0 %v1755
        %v2189 = vpop.f32.mrf.mxu0
        %v2190 = vadd.f32 0.0, %v2189
        %2191 = vmatmul.f32.gmra.mxu0 %v1758
        %v2192 = vpop.f32.mrf.mxu0
        %v2193 = vadd.f32 0.0, %v2192
        %2194 = vmatmul.f32.gmra.mxu0 %v1761
        %v2195 = vpop.f32.mrf.mxu0
        %v2196 = vadd.f32 0.0, %v2195
        %2197 = vmatmul.f32.gmra.mxu0 %v1764
        %v2198 = vpop.f32.mrf.mxu0
        %v2199 = vadd.f32 0.0, %v2198
        %2200 = vdwg.mxu0
        %2201 = vmatpush.msra.mxu0 0.0
        %2202 = vmatpush.msra.mxu0 0.0
        %2203 = vmatpush.msra.mxu0 0.0
        %2204 = vmatpush.msra.mxu0 0.0
        %2205 = vmatpush.msra.mxu0 0.0
        %2206 = vmatpush.msra.mxu0 0.0
        %2207 = vmatpush.msra.mxu0 0.0
        %2208 = vmatpush.msra.mxu0 0.0
        %2209 = vmatpush.msra.mxu0 0.0
        %2210 = vmatpush.msra.mxu0 0.0
        %2211 = vmatpush.msra.mxu0 0.0
        %2212 = vmatpush.msra.mxu0 0.0
        %2213 = vmatpush.msra.mxu0 0.0
        %2214 = vmatpush.msra.mxu0 0.0
        %2215 = vmatpush.msra.mxu0 %v1572
        %2216 = vmatpush.msra.mxu0 %v1556
        %2217 = vmatmul.f32.gmra.mxu0 %v1755
        %v2218 = vpop.f32.mrf.mxu0
        %v2219 = vadd.f32 0.0, %v2218
        %2220 = vmatmul.f32.gmra.mxu0 %v1758
        %v2221 = vpop.f32.mrf.mxu0
        %v2222 = vadd.f32 0.0, %v2221
        %2223 = vmatmul.f32.gmra.mxu0 %v1761
        %v2224 = vpop.f32.mrf.mxu0
        %v2225 = vadd.f32 0.0, %v2224
        %2226 = vmatmul.f32.gmra.mxu0 %v1764
        %v2227 = vpop.f32.mrf.mxu0
        %v2228 = vadd.f32 0.0, %v2227
        %2229 = vdwg.mxu0
        %v2230 = vmul.f32 %v1784, %v1717
        %v2231 = vmul.f32 %v1813, %v1718
        %v2232 = vmul.f32 %v1842, %v1719
        %v2233 = vmul.f32 %v1871, %v1720
        %v2234 = vmul.f32 %v1900, %v1721
        %v2235 = vmul.f32 %v1929, %v1722
        %v2236 = vmul.f32 %v1958, %v1723
        %v2237 = vmul.f32 %v1987, %v1724
        %v2238 = vmul.f32 %v2016, %v1725
        %v2239 = vmul.f32 %v2045, %v1726
        %v2240 = vmul.f32 %v2074, %v1727
        %v2241 = vmul.f32 %v2103, %v1728
        %v2242 = vmul.f32 %v2132, %v1729
        %v2243 = vmul.f32 %v2161, %v1730
        %v2244 = vmul.f32 %v2190, %v1731
        %v2245 = vmul.f32 %v2219, %v1732
        %v2246 = vmul.f32 %v1787, %v1733
        %v2247 = vmul.f32 %v1816, %v1734
        %v2248 = vmul.f32 %v1845, %v1735
        %v2249 = vmul.f32 %v1874, %v1736
        %v2250 = vmul.f32 %v1903, %v1737
        %v2251 = vmul.f32 %v1932, %v1738
        %v2252 = vmul.f32 %v1961, %v1739
        %v2253 = vmul.f32 %v1990, %v1740
        %v2254 = vmul.f32 %v2019, %v1741
        %v2255 = vmul.f32 %v2048, %v1742
        %v2256 = vmul.f32 %v2077, %v1743
        %v2257 = vmul.f32 %v2106, %v1744
        %v2258 = vmul.f32 %v2135, %v1745
        %v2259 = vmul.f32 %v2164, %v1746
        %v2260 = vmul.f32 %v2193, %v1747
        %v2261 = vmul.f32 %v2222, %v1748
        %v2262 = vadd.f32 %v2230, %v2246
        %v2263 = vrot.slane %v2262, 4
        %v2264 = vadd.f32 %v2262, %v2263
        %v2265 = vrot.slane %v2264, 2
        %v2266 = vadd.f32 %v2264, %v2265
        %v2267 = vrot.slane %v2266, 1
        %v2268 = vadd.f32 %v2266, %v2267
        %v2269 = vadd.f32 %v2231, %v2247
        %v2270 = vrot.slane %v2269, 4
        %v2271 = vadd.f32 %v2269, %v2270
        %v2272 = vrot.slane %v2271, 2
        %v2273 = vadd.f32 %v2271, %v2272
        %v2274 = vrot.slane %v2273, 1
        %v2275 = vadd.f32 %v2273, %v2274
        %v2276 = vadd.f32 %v2232, %v2248
        %v2277 = vrot.slane %v2276, 4
        %v2278 = vadd.f32 %v2276, %v2277
        %v2279 = vrot.slane %v2278, 2
        %v2280 = vadd.f32 %v2278, %v2279
        %v2281 = vrot.slane %v2280, 1
        %v2282 = vadd.f32 %v2280, %v2281
        %v2283 = vadd.f32 %v2233, %v2249
        %v2284 = vrot.slane %v2283, 4
        %v2285 = vadd.f32 %v2283, %v2284
        %v2286 = vrot.slane %v2285, 2
        %v2287 = vadd.f32 %v2285, %v2286
        %v2288 = vrot.slane %v2287, 1
        %v2289 = vadd.f32 %v2287, %v2288
        %v2290 = vadd.f32 %v2234, %v2250
        %v2291 = vrot.slane %v2290, 4
        %v2292 = vadd.f32 %v2290, %v2291
        %v2293 = vrot.slane %v2292, 2
        %v2294 = vadd.f32 %v2292, %v2293
        %v2295 = vrot.slane %v2294, 1
        %v2296 = vadd.f32 %v2294, %v2295
        %v2297 = vadd.f32 %v2235, %v2251
        %v2298 = vrot.slane %v2297, 4
        %v2299 = vadd.f32 %v2297, %v2298
        %v2300 = vrot.slane %v2299, 2
        %v2301 = vadd.f32 %v2299, %v2300
        %v2302 = vrot.slane %v2301, 1
        %v2303 = vadd.f32 %v2301, %v2302
        %v2304 = vadd.f32 %v2236, %v2252
        %v2305 = vrot.slane %v2304, 4
        %v2306 = vadd.f32 %v2304, %v2305
        %v2307 = vrot.slane %v2306, 2
        %v2308 = vadd.f32 %v2306, %v2307
        %v2309 = vrot.slane %v2308, 1
        %v2310 = vadd.f32 %v2308, %v2309
        %v2311 = vadd.f32 %v2237, %v2253
        %v2312 = vrot.slane %v2311, 4
        %v2313 = vadd.f32 %v2311, %v2312
        %v2314 = vrot.slane %v2313, 2
        %v2315 = vadd.f32 %v2313, %v2314
        %v2316 = vrot.slane %v2315, 1
        %v2317 = vadd.f32 %v2315, %v2316
        %v2318 = vadd.f32 %v2238, %v2254
        %v2319 = vrot.slane %v2318, 4
        %v2320 = vadd.f32 %v2318, %v2319
        %v2321 = vrot.slane %v2320, 2
        %v2322 = vadd.f32 %v2320, %v2321
        %v2323 = vrot.slane %v2322, 1
        %v2324 = vadd.f32 %v2322, %v2323
        %v2325 = vadd.f32 %v2239, %v2255
        %v2326 = vrot.slane %v2325, 4
        %v2327 = vadd.f32 %v2325, %v2326
        %v2328 = vrot.slane %v2327, 2
        %v2329 = vadd.f32 %v2327, %v2328
        %v2330 = vrot.slane %v2329, 1
        %v2331 = vadd.f32 %v2329, %v2330
        %v2332 = vadd.f32 %v2240, %v2256
        %v2333 = vrot.slane %v2332, 4
        %v2334 = vadd.f32 %v2332, %v2333
        %v2335 = vrot.slane %v2334, 2
        %v2336 = vadd.f32 %v2334, %v2335
        %v2337 = vrot.slane %v2336, 1
        %v2338 = vadd.f32 %v2336, %v2337
        %v2339 = vadd.f32 %v2241, %v2257
        %v2340 = vrot.slane %v2339, 4
        %v2341 = vadd.f32 %v2339, %v2340
        %v2342 = vrot.slane %v2341, 2
        %v2343 = vadd.f32 %v2341, %v2342
        %v2344 = vrot.slane %v2343, 1
        %v2345 = vadd.f32 %v2343, %v2344
        %v2346 = vadd.f32 %v2242, %v2258
        %v2347 = vrot.slane %v2346, 4
        %v2348 = vadd.f32 %v2346, %v2347
        %v2349 = vrot.slane %v2348, 2
        %v2350 = vadd.f32 %v2348, %v2349
        %v2351 = vrot.slane %v2350, 1
        %v2352 = vadd.f32 %v2350, %v2351
        %v2353 = vadd.f32 %v2243, %v2259
        %v2354 = vrot.slane %v2353, 4
        %v2355 = vadd.f32 %v2353, %v2354
        %v2356 = vrot.slane %v2355, 2
        %v2357 = vadd.f32 %v2355, %v2356
        %v2358 = vrot.slane %v2357, 1
        %v2359 = vadd.f32 %v2357, %v2358
        %v2360 = vadd.f32 %v2244, %v2260
        %v2361 = vrot.slane %v2360, 4
        %v2362 = vadd.f32 %v2360, %v2361
        %v2363 = vrot.slane %v2362, 2
        %v2364 = vadd.f32 %v2362, %v2363
        %v2365 = vrot.slane %v2364, 1
        %v2366 = vadd.f32 %v2364, %v2365
        %v2367 = vadd.f32 %v2245, %v2261
        %v2368 = vrot.slane %v2367, 4
        %v2369 = vadd.f32 %v2367, %v2368
        %v2370 = vrot.slane %v2369, 2
        %v2371 = vadd.f32 %v2369, %v2370
        %v2372 = vrot.slane %v2371, 1
        %v2373 = vadd.f32 %v2371, %v2372
        %v2390 = vrot.slane %v2275, 7
        %v2391 = vrot.slane %v2282, 6
        %v2392 = vrot.slane %v2289, 5
        %v2393 = vrot.slane %v2296, 4
        %v2394 = vrot.slane %v2303, 3
        %v2395 = vrot.slane %v2310, 2
        %v2396 = vrot.slane %v2317, 1
        %v2397 = vrot.slane %v2331, 7
        %v2398 = vrot.slane %v2338, 6
        %v2399 = vrot.slane %v2345, 5
        %v2400 = vrot.slane %v2352, 4
        %v2401 = vrot.slane %v2359, 3
        %v2402 = vrot.slane %v2366, 2
        %v2403 = vrot.slane %v2373, 1
        %vm2404 = vcmask 1040384
        %v2405 = vsel %vm2404, %v2268, %v2390
        %vm2406 = vcmask 1042434
        %v2407 = vsel %vm2406, %v2391, %v2392
        %vm2408 = vcmask 1041408
        %v2409 = vsel %vm2408, %v2405, %v2407
        %vm2410 = vcmask 1044484
        %v2411 = vsel %vm2410, %v2393, %v2394
        %vm2412 = vcmask 1046534
        %v2413 = vsel %vm2412, %v2395, %v2396
        %vm2414 = vcmask 1045508
        %v2415 = vsel %vm2414, %v2411, %v2413
        %vm2416 = vcmask 1043456
        %v2417 = vsel %vm2416, %v2409, %v2415
        %v2418 = vsel %vm2404, %v2324, %v2397
        %v2419 = vsel %vm2406, %v2398, %v2399
        %v2420 = vsel %vm2408, %v2418, %v2419
        %v2421 = vsel %vm2410, %v2400, %v2401
        %v2422 = vsel %vm2412, %v2402, %v2403
        %v2423 = vsel %vm2414, %v2421, %v2422
        %v2424 = vsel %vm2416, %v2420, %v2423
        %2427 = vst [vmem:[%s164] ss:$4 sm:$0xff] %v2417
        %s2428 = scalar_lea.vmem %s164, 32 [#allocation5]
        %2429 = vst [vmem:[%s2428] ss:$4 sm:$0xff] %v2424
        %v2430 = vmul.f32 %v1790, %v1717
        %v2431 = vmul.f32 %v1819, %v1718
        %v2432 = vmul.f32 %v1848, %v1719
        %v2433 = vmul.f32 %v1877, %v1720
        %v2434 = vmul.f32 %v1906, %v1721
        %v2435 = vmul.f32 %v1935, %v1722
        %v2436 = vmul.f32 %v1964, %v1723
        %v2437 = vmul.f32 %v1993, %v1724
        %v2438 = vmul.f32 %v2022, %v1725
        %v2439 = vmul.f32 %v2051, %v1726
        %v2440 = vmul.f32 %v2080, %v1727
        %v2441 = vmul.f32 %v2109, %v1728
        %v2442 = vmul.f32 %v2138, %v1729
        %v2443 = vmul.f32 %v2167, %v1730
        %v2444 = vmul.f32 %v2196, %v1731
        %v2445 = vmul.f32 %v2225, %v1732
        %v2446 = vmul.f32 %v1793, %v1733
        %v2447 = vmul.f32 %v1822, %v1734
        %v2448 = vmul.f32 %v1851, %v1735
        %v2449 = vmul.f32 %v1880, %v1736
        %v2450 = vmul.f32 %v1909, %v1737
        %v2451 = vmul.f32 %v1938, %v1738
        %v2452 = vmul.f32 %v1967, %v1739
        %v2453 = vmul.f32 %v1996, %v1740
        %v2454 = vmul.f32 %v2025, %v1741
        %v2455 = vmul.f32 %v2054, %v1742
        %v2456 = vmul.f32 %v2083, %v1743
        %v2457 = vmul.f32 %v2112, %v1744
        %v2458 = vmul.f32 %v2141, %v1745
        %v2459 = vmul.f32 %v2170, %v1746
        %v2460 = vmul.f32 %v2199, %v1747
        %v2461 = vmul.f32 %v2228, %v1748
        %v2462 = vadd.f32 %v2430, %v2446
        %v2463 = vrot.slane %v2462, 4
        %v2464 = vadd.f32 %v2462, %v2463
        %v2465 = vrot.slane %v2464, 2
        %v2466 = vadd.f32 %v2464, %v2465
        %v2467 = vrot.slane %v2466, 1
        %v2468 = vadd.f32 %v2466, %v2467
        %v2469 = vadd.f32 %v2431, %v2447
        %v2470 = vrot.slane %v2469, 4
        %v2471 = vadd.f32 %v2469, %v2470
        %v2472 = vrot.slane %v2471, 2
        %v2473 = vadd.f32 %v2471, %v2472
        %v2474 = vrot.slane %v2473, 1
        %v2475 = vadd.f32 %v2473, %v2474
        %v2476 = vadd.f32 %v2432, %v2448
        %v2477 = vrot.slane %v2476, 4
        %v2478 = vadd.f32 %v2476, %v2477
        %v2479 = vrot.slane %v2478, 2
        %v2480 = vadd.f32 %v2478, %v2479
        %v2481 = vrot.slane %v2480, 1
        %v2482 = vadd.f32 %v2480, %v2481
        %v2483 = vadd.f32 %v2433, %v2449
        %v2484 = vrot.slane %v2483, 4
        %v2485 = vadd.f32 %v2483, %v2484
        %v2486 = vrot.slane %v2485, 2
        %v2487 = vadd.f32 %v2485, %v2486
        %v2488 = vrot.slane %v2487, 1
        %v2489 = vadd.f32 %v2487, %v2488
        %v2490 = vadd.f32 %v2434, %v2450
        %v2491 = vrot.slane %v2490, 4
        %v2492 = vadd.f32 %v2490, %v2491
        %v2493 = vrot.slane %v2492, 2
        %v2494 = vadd.f32 %v2492, %v2493
        %v2495 = vrot.slane %v2494, 1
        %v2496 = vadd.f32 %v2494, %v2495
        %v2497 = vadd.f32 %v2435, %v2451
        %v2498 = vrot.slane %v2497, 4
        %v2499 = vadd.f32 %v2497, %v2498
        %v2500 = vrot.slane %v2499, 2
        %v2501 = vadd.f32 %v2499, %v2500
        %v2502 = vrot.slane %v2501, 1
        %v2503 = vadd.f32 %v2501, %v2502
        %v2504 = vadd.f32 %v2436, %v2452
        %v2505 = vrot.slane %v2504, 4
        %v2506 = vadd.f32 %v2504, %v2505
        %v2507 = vrot.slane %v2506, 2
        %v2508 = vadd.f32 %v2506, %v2507
        %v2509 = vrot.slane %v2508, 1
        %v2510 = vadd.f32 %v2508, %v2509
        %v2511 = vadd.f32 %v2437, %v2453
        %v2512 = vrot.slane %v2511, 4
        %v2513 = vadd.f32 %v2511, %v2512
        %v2514 = vrot.slane %v2513, 2
        %v2515 = vadd.f32 %v2513, %v2514
        %v2516 = vrot.slane %v2515, 1
        %v2517 = vadd.f32 %v2515, %v2516
        %v2518 = vadd.f32 %v2438, %v2454
        %v2519 = vrot.slane %v2518, 4
        %v2520 = vadd.f32 %v2518, %v2519
        %v2521 = vrot.slane %v2520, 2
        %v2522 = vadd.f32 %v2520, %v2521
        %v2523 = vrot.slane %v2522, 1
        %v2524 = vadd.f32 %v2522, %v2523
        %v2525 = vadd.f32 %v2439, %v2455
        %v2526 = vrot.slane %v2525, 4
        %v2527 = vadd.f32 %v2525, %v2526
        %v2528 = vrot.slane %v2527, 2
        %v2529 = vadd.f32 %v2527, %v2528
        %v2530 = vrot.slane %v2529, 1
        %v2531 = vadd.f32 %v2529, %v2530
        %v2532 = vadd.f32 %v2440, %v2456
        %v2533 = vrot.slane %v2532, 4
        %v2534 = vadd.f32 %v2532, %v2533
        %v2535 = vrot.slane %v2534, 2
        %v2536 = vadd.f32 %v2534, %v2535
        %v2537 = vrot.slane %v2536, 1
        %v2538 = vadd.f32 %v2536, %v2537
        %v2539 = vadd.f32 %v2441, %v2457
        %v2540 = vrot.slane %v2539, 4
        %v2541 = vadd.f32 %v2539, %v2540
        %v2542 = vrot.slane %v2541, 2
        %v2543 = vadd.f32 %v2541, %v2542
        %v2544 = vrot.slane %v2543, 1
        %v2545 = vadd.f32 %v2543, %v2544
        %v2546 = vadd.f32 %v2442, %v2458
        %v2547 = vrot.slane %v2546, 4
        %v2548 = vadd.f32 %v2546, %v2547
        %v2549 = vrot.slane %v2548, 2
        %v2550 = vadd.f32 %v2548, %v2549
        %v2551 = vrot.slane %v2550, 1
        %v2552 = vadd.f32 %v2550, %v2551
        %v2553 = vadd.f32 %v2443, %v2459
        %v2554 = vrot.slane %v2553, 4
        %v2555 = vadd.f32 %v2553, %v2554
        %v2556 = vrot.slane %v2555, 2
        %v2557 = vadd.f32 %v2555, %v2556
        %v2558 = vrot.slane %v2557, 1
        %v2559 = vadd.f32 %v2557, %v2558
        %v2560 = vadd.f32 %v2444, %v2460
        %v2561 = vrot.slane %v2560, 4
        %v2562 = vadd.f32 %v2560, %v2561
        %v2563 = vrot.slane %v2562, 2
        %v2564 = vadd.f32 %v2562, %v2563
        %v2565 = vrot.slane %v2564, 1
        %v2566 = vadd.f32 %v2564, %v2565
        %v2567 = vadd.f32 %v2445, %v2461
        %v2568 = vrot.slane %v2567, 4
        %v2569 = vadd.f32 %v2567, %v2568
        %v2570 = vrot.slane %v2569, 2
        %v2571 = vadd.f32 %v2569, %v2570
        %v2572 = vrot.slane %v2571, 1
        %v2573 = vadd.f32 %v2571, %v2572
        %v2590 = vrot.slane %v2475, 7
        %v2591 = vrot.slane %v2482, 6
        %v2592 = vrot.slane %v2489, 5
        %v2593 = vrot.slane %v2496, 4
        %v2594 = vrot.slane %v2503, 3
        %v2595 = vrot.slane %v2510, 2
        %v2596 = vrot.slane %v2517, 1
        %v2597 = vrot.slane %v2531, 7
        %v2598 = vrot.slane %v2538, 6
        %v2599 = vrot.slane %v2545, 5
        %v2600 = vrot.slane %v2552, 4
        %v2601 = vrot.slane %v2559, 3
        %v2602 = vrot.slane %v2566, 2
        %v2603 = vrot.slane %v2573, 1
        %v2604 = vsel %vm2404, %v2468, %v2590
        %v2605 = vsel %vm2406, %v2591, %v2592
        %v2606 = vsel %vm2408, %v2604, %v2605
        %v2607 = vsel %vm2410, %v2593, %v2594
        %v2608 = vsel %vm2412, %v2595, %v2596
        %v2609 = vsel %vm2414, %v2607, %v2608
        %v2610 = vsel %vm2416, %v2606, %v2609
        %v2611 = vsel %vm2404, %v2524, %v2597
        %v2612 = vsel %vm2406, %v2598, %v2599
        %v2613 = vsel %vm2408, %v2611, %v2612
        %v2614 = vsel %vm2410, %v2600, %v2601
        %v2615 = vsel %vm2412, %v2602, %v2603
        %v2616 = vsel %vm2414, %v2614, %v2615
        %v2617 = vsel %vm2416, %v2613, %v2616
        %s2620 = scalar_lea.vmem %s164, 1 [#allocation5]
        %2621 = vst [vmem:[%s2620] ss:$4 sm:$0xff] %v2610
        %s2622 = scalar_lea.vmem %s164, 33 [#allocation5]
        %2623 = vst [vmem:[%s2622] ss:$4 sm:$0xff] %v2617
        %s2624 = sadd.s32 %s21, 2
        %s2625 = smul.u32 %s2624, 12
        %s2626 = sld [smem:[#allocation2 + %s2625]]
        %s2627 = sadd.s32 %s2625, 1
        %s2628 = sld [smem:[#allocation2 + %s2627]]
        %s2629 = sadd.s32 %s2625, 2
        %s2630 = sld [smem:[#allocation2 + %s2629]]
        %s2631 = sadd.s32 %s2625, 3
        %s2632 = sld [smem:[#allocation2 + %s2631]]
        %s2633 = sadd.s32 %s2625, 4
        %s2634 = sld [smem:[#allocation2 + %s2633]]
        %s2635 = sadd.s32 %s2625, 5
        %s2636 = sld [smem:[#allocation2 + %s2635]]
        %s2637 = sadd.s32 %s2625, 6
        %s2638 = sld [smem:[#allocation2 + %s2637]]
        %s2639 = sadd.s32 %s2625, 7
        %s2640 = sld [smem:[#allocation2 + %s2639]]
        %s2641 = sadd.s32 %s2625, 8
        %s2642 = sld [smem:[#allocation2 + %s2641]]
        %s2643 = sadd.s32 %s2625, 9
        %s2644 = sld [smem:[#allocation2 + %s2643]]
        %s2645 = sadd.s32 %s2625, 10
        %s2646 = sld [smem:[#allocation2 + %s2645]]
        %s2647 = sadd.s32 %s2625, 11
        %s2648 = sld [smem:[#allocation2 + %s2647]]
        %v2649 = vstv %s2626
        %v2650 = vmul.f32 %v2649, %v366
        %v2651 = vmul.f32 %v2649, %v367
        %v2652 = vmul.f32 %v2649, %v368
        %v2653 = vmul.f32 %v2649, %v369
        %v2654 = vmul.f32 %v2649, %v370
        %v2655 = vmul.f32 %v2649, %v371
        %v2656 = vmul.f32 %v2649, %v372
        %v2657 = vmul.f32 %v2649, %v373
        %v2658 = vmul.f32 %v2649, %v374
        %v2659 = vmul.f32 %v2649, %v375
        %v2660 = vmul.f32 %v2649, %v376
        %v2661 = vmul.f32 %v2649, %v377
        %v2662 = vmul.f32 %v2649, %v378
        %v2663 = vmul.f32 %v2649, %v379
        %v2664 = vmul.f32 %v2649, %v380
        %v2665 = vmul.f32 %v2649, %v381
        %v2666 = vstv %s2628
        %v2667 = vmul.f32 %v2666, %v430
        %v2668 = vmul.f32 %v2666, %v431
        %v2669 = vmul.f32 %v2666, %v432
        %v2670 = vmul.f32 %v2666, %v433
        %v2671 = vmul.f32 %v2666, %v434
        %v2672 = vmul.f32 %v2666, %v435
        %v2673 = vmul.f32 %v2666, %v436
        %v2674 = vmul.f32 %v2666, %v437
        %v2675 = vmul.f32 %v2666, %v438
        %v2676 = vmul.f32 %v2666, %v439
        %v2677 = vmul.f32 %v2666, %v440
        %v2678 = vmul.f32 %v2666, %v441
        %v2679 = vmul.f32 %v2666, %v442
        %v2680 = vmul.f32 %v2666, %v443
        %v2681 = vmul.f32 %v2666, %v444
        %v2682 = vmul.f32 %v2666, %v445
        %v2683 = vadd.f32 %v2650, %v2667
        %v2684 = vadd.f32 %v2651, %v2668
        %v2685 = vadd.f32 %v2652, %v2669
        %v2686 = vadd.f32 %v2653, %v2670
        %v2687 = vadd.f32 %v2654, %v2671
        %v2688 = vadd.f32 %v2655, %v2672
        %v2689 = vadd.f32 %v2656, %v2673
        %v2690 = vadd.f32 %v2657, %v2674
        %v2691 = vadd.f32 %v2658, %v2675
        %v2692 = vadd.f32 %v2659, %v2676
        %v2693 = vadd.f32 %v2660, %v2677
        %v2694 = vadd.f32 %v2661, %v2678
        %v2695 = vadd.f32 %v2662, %v2679
        %v2696 = vadd.f32 %v2663, %v2680
        %v2697 = vadd.f32 %v2664, %v2681
        %v2698 = vadd.f32 %v2665, %v2682
        %v2699 = vstv %s2630
        %v2700 = vmul.f32 %v2699, %v494
        %v2701 = vmul.f32 %v2699, %v495
        %v2702 = vmul.f32 %v2699, %v496
        %v2703 = vmul.f32 %v2699, %v497
        %v2704 = vmul.f32 %v2699, %v498
        %v2705 = vmul.f32 %v2699, %v499
        %v2706 = vmul.f32 %v2699, %v500
        %v2707 = vmul.f32 %v2699, %v501
        %v2708 = vmul.f32 %v2699, %v502
        %v2709 = vmul.f32 %v2699, %v503
        %v2710 = vmul.f32 %v2699, %v504
        %v2711 = vmul.f32 %v2699, %v505
        %v2712 = vmul.f32 %v2699, %v506
        %v2713 = vmul.f32 %v2699, %v507
        %v2714 = vmul.f32 %v2699, %v508
        %v2715 = vmul.f32 %v2699, %v509
        %v2716 = vadd.f32 %v2683, %v2700
        %v2717 = vadd.f32 %v2684, %v2701
        %v2718 = vadd.f32 %v2685, %v2702
        %v2719 = vadd.f32 %v2686, %v2703
        %v2720 = vadd.f32 %v2687, %v2704
        %v2721 = vadd.f32 %v2688, %v2705
        %v2722 = vadd.f32 %v2689, %v2706
        %v2723 = vadd.f32 %v2690, %v2707
        %v2724 = vadd.f32 %v2691, %v2708
        %v2725 = vadd.f32 %v2692, %v2709
        %v2726 = vadd.f32 %v2693, %v2710
        %v2727 = vadd.f32 %v2694, %v2711
        %v2728 = vadd.f32 %v2695, %v2712
        %v2729 = vadd.f32 %v2696, %v2713
        %v2730 = vadd.f32 %v2697, %v2714
        %v2731 = vadd.f32 %v2698, %v2715
        %v2732 = vstv %s2632
        %v2733 = vadd.f32 %v2716, %v2732
        %v2734 = vadd.f32 %v2717, %v2732
        %v2735 = vadd.f32 %v2718, %v2732
        %v2736 = vadd.f32 %v2719, %v2732
        %v2737 = vadd.f32 %v2720, %v2732
        %v2738 = vadd.f32 %v2721, %v2732
        %v2739 = vadd.f32 %v2722, %v2732
        %v2740 = vadd.f32 %v2723, %v2732
        %v2741 = vadd.f32 %v2724, %v2732
        %v2742 = vadd.f32 %v2725, %v2732
        %v2743 = vadd.f32 %v2726, %v2732
        %v2744 = vadd.f32 %v2727, %v2732
        %v2745 = vadd.f32 %v2728, %v2732
        %v2746 = vadd.f32 %v2729, %v2732
        %v2747 = vadd.f32 %v2730, %v2732
        %v2748 = vadd.f32 %v2731, %v2732
        %v2749 = vstv %s2634
        %v2750 = vmul.f32 %v2749, %v366
        %v2751 = vmul.f32 %v2749, %v367
        %v2752 = vmul.f32 %v2749, %v368
        %v2753 = vmul.f32 %v2749, %v369
        %v2754 = vmul.f32 %v2749, %v370
        %v2755 = vmul.f32 %v2749, %v371
        %v2756 = vmul.f32 %v2749, %v372
        %v2757 = vmul.f32 %v2749, %v373
        %v2758 = vmul.f32 %v2749, %v374
        %v2759 = vmul.f32 %v2749, %v375
        %v2760 = vmul.f32 %v2749, %v376
        %v2761 = vmul.f32 %v2749, %v377
        %v2762 = vmul.f32 %v2749, %v378
        %v2763 = vmul.f32 %v2749, %v379
        %v2764 = vmul.f32 %v2749, %v380
        %v2765 = vmul.f32 %v2749, %v381
        %v2766 = vstv %s2636
        %v2767 = vmul.f32 %v2766, %v430
        %v2768 = vmul.f32 %v2766, %v431
        %v2769 = vmul.f32 %v2766, %v432
        %v2770 = vmul.f32 %v2766, %v433
        %v2771 = vmul.f32 %v2766, %v434
        %v2772 = vmul.f32 %v2766, %v435
        %v2773 = vmul.f32 %v2766, %v436
        %v2774 = vmul.f32 %v2766, %v437
        %v2775 = vmul.f32 %v2766, %v438
        %v2776 = vmul.f32 %v2766, %v439
        %v2777 = vmul.f32 %v2766, %v440
        %v2778 = vmul.f32 %v2766, %v441
        %v2779 = vmul.f32 %v2766, %v442
        %v2780 = vmul.f32 %v2766, %v443
        %v2781 = vmul.f32 %v2766, %v444
        %v2782 = vmul.f32 %v2766, %v445
        %v2783 = vadd.f32 %v2750, %v2767
        %v2784 = vadd.f32 %v2751, %v2768
        %v2785 = vadd.f32 %v2752, %v2769
        %v2786 = vadd.f32 %v2753, %v2770
        %v2787 = vadd.f32 %v2754, %v2771
        %v2788 = vadd.f32 %v2755, %v2772
        %v2789 = vadd.f32 %v2756, %v2773
        %v2790 = vadd.f32 %v2757, %v2774
        %v2791 = vadd.f32 %v2758, %v2775
        %v2792 = vadd.f32 %v2759, %v2776
        %v2793 = vadd.f32 %v2760, %v2777
        %v2794 = vadd.f32 %v2761, %v2778
        %v2795 = vadd.f32 %v2762, %v2779
        %v2796 = vadd.f32 %v2763, %v2780
        %v2797 = vadd.f32 %v2764, %v2781
        %v2798 = vadd.f32 %v2765, %v2782
        %v2799 = vstv %s2638
        %v2800 = vmul.f32 %v2799, %v494
        %v2801 = vmul.f32 %v2799, %v495
        %v2802 = vmul.f32 %v2799, %v496
        %v2803 = vmul.f32 %v2799, %v497
        %v2804 = vmul.f32 %v2799, %v498
        %v2805 = vmul.f32 %v2799, %v499
        %v2806 = vmul.f32 %v2799, %v500
        %v2807 = vmul.f32 %v2799, %v501
        %v2808 = vmul.f32 %v2799, %v502
        %v2809 = vmul.f32 %v2799, %v503
        %v2810 = vmul.f32 %v2799, %v504
        %v2811 = vmul.f32 %v2799, %v505
        %v2812 = vmul.f32 %v2799, %v506
        %v2813 = vmul.f32 %v2799, %v507
        %v2814 = vmul.f32 %v2799, %v508
        %v2815 = vmul.f32 %v2799, %v509
        %v2816 = vadd.f32 %v2783, %v2800
        %v2817 = vadd.f32 %v2784, %v2801
        %v2818 = vadd.f32 %v2785, %v2802
        %v2819 = vadd.f32 %v2786, %v2803
        %v2820 = vadd.f32 %v2787, %v2804
        %v2821 = vadd.f32 %v2788, %v2805
        %v2822 = vadd.f32 %v2789, %v2806
        %v2823 = vadd.f32 %v2790, %v2807
        %v2824 = vadd.f32 %v2791, %v2808
        %v2825 = vadd.f32 %v2792, %v2809
        %v2826 = vadd.f32 %v2793, %v2810
        %v2827 = vadd.f32 %v2794, %v2811
        %v2828 = vadd.f32 %v2795, %v2812
        %v2829 = vadd.f32 %v2796, %v2813
        %v2830 = vadd.f32 %v2797, %v2814
        %v2831 = vadd.f32 %v2798, %v2815
        %v2832 = vstv %s2640
        %v2833 = vadd.f32 %v2816, %v2832
        %v2834 = vadd.f32 %v2817, %v2832
        %v2835 = vadd.f32 %v2818, %v2832
        %v2836 = vadd.f32 %v2819, %v2832
        %v2837 = vadd.f32 %v2820, %v2832
        %v2838 = vadd.f32 %v2821, %v2832
        %v2839 = vadd.f32 %v2822, %v2832
        %v2840 = vadd.f32 %v2823, %v2832
        %v2841 = vadd.f32 %v2824, %v2832
        %v2842 = vadd.f32 %v2825, %v2832
        %v2843 = vadd.f32 %v2826, %v2832
        %v2844 = vadd.f32 %v2827, %v2832
        %v2845 = vadd.f32 %v2828, %v2832
        %v2846 = vadd.f32 %v2829, %v2832
        %v2847 = vadd.f32 %v2830, %v2832
        %v2848 = vadd.f32 %v2831, %v2832
        %v2849 = vstv %s2642
        %v2850 = vmul.f32 %v2849, %v366
        %v2851 = vmul.f32 %v2849, %v367
        %v2852 = vmul.f32 %v2849, %v368
        %v2853 = vmul.f32 %v2849, %v369
        %v2854 = vmul.f32 %v2849, %v370
        %v2855 = vmul.f32 %v2849, %v371
        %v2856 = vmul.f32 %v2849, %v372
        %v2857 = vmul.f32 %v2849, %v373
        %v2858 = vmul.f32 %v2849, %v374
        %v2859 = vmul.f32 %v2849, %v375
        %v2860 = vmul.f32 %v2849, %v376
        %v2861 = vmul.f32 %v2849, %v377
        %v2862 = vmul.f32 %v2849, %v378
        %v2863 = vmul.f32 %v2849, %v379
        %v2864 = vmul.f32 %v2849, %v380
        %v2865 = vmul.f32 %v2849, %v381
        %v2866 = vstv %s2644
        %v2867 = vmul.f32 %v2866, %v430
        %v2868 = vmul.f32 %v2866, %v431
        %v2869 = vmul.f32 %v2866, %v432
        %v2870 = vmul.f32 %v2866, %v433
        %v2871 = vmul.f32 %v2866, %v434
        %v2872 = vmul.f32 %v2866, %v435
        %v2873 = vmul.f32 %v2866, %v436
        %v2874 = vmul.f32 %v2866, %v437
        %v2875 = vmul.f32 %v2866, %v438
        %v2876 = vmul.f32 %v2866, %v439
        %v2877 = vmul.f32 %v2866, %v440
        %v2878 = vmul.f32 %v2866, %v441
        %v2879 = vmul.f32 %v2866, %v442
        %v2880 = vmul.f32 %v2866, %v443
        %v2881 = vmul.f32 %v2866, %v444
        %v2882 = vmul.f32 %v2866, %v445
        %v2883 = vadd.f32 %v2850, %v2867
        %v2884 = vadd.f32 %v2851, %v2868
        %v2885 = vadd.f32 %v2852, %v2869
        %v2886 = vadd.f32 %v2853, %v2870
        %v2887 = vadd.f32 %v2854, %v2871
        %v2888 = vadd.f32 %v2855, %v2872
        %v2889 = vadd.f32 %v2856, %v2873
        %v2890 = vadd.f32 %v2857, %v2874
        %v2891 = vadd.f32 %v2858, %v2875
        %v2892 = vadd.f32 %v2859, %v2876
        %v2893 = vadd.f32 %v2860, %v2877
        %v2894 = vadd.f32 %v2861, %v2878
        %v2895 = vadd.f32 %v2862, %v2879
        %v2896 = vadd.f32 %v2863, %v2880
        %v2897 = vadd.f32 %v2864, %v2881
        %v2898 = vadd.f32 %v2865, %v2882
        %v2899 = vstv %s2646
        %v2900 = vmul.f32 %v2899, %v494
        %v2901 = vmul.f32 %v2899, %v495
        %v2902 = vmul.f32 %v2899, %v496
        %v2903 = vmul.f32 %v2899, %v497
        %v2904 = vmul.f32 %v2899, %v498
        %v2905 = vmul.f32 %v2899, %v499
        %v2906 = vmul.f32 %v2899, %v500
        %v2907 = vmul.f32 %v2899, %v501
        %v2908 = vmul.f32 %v2899, %v502
        %v2909 = vmul.f32 %v2899, %v503
        %v2910 = vmul.f32 %v2899, %v504
        %v2911 = vmul.f32 %v2899, %v505
        %v2912 = vmul.f32 %v2899, %v506
        %v2913 = vmul.f32 %v2899, %v507
        %v2914 = vmul.f32 %v2899, %v508
        %v2915 = vmul.f32 %v2899, %v509
        %v2916 = vadd.f32 %v2883, %v2900
        %v2917 = vadd.f32 %v2884, %v2901
        %v2918 = vadd.f32 %v2885, %v2902
        %v2919 = vadd.f32 %v2886, %v2903
        %v2920 = vadd.f32 %v2887, %v2904
        %v2921 = vadd.f32 %v2888, %v2905
        %v2922 = vadd.f32 %v2889, %v2906
        %v2923 = vadd.f32 %v2890, %v2907
        %v2924 = vadd.f32 %v2891, %v2908
        %v2925 = vadd.f32 %v2892, %v2909
        %v2926 = vadd.f32 %v2893, %v2910
        %v2927 = vadd.f32 %v2894, %v2911
        %v2928 = vadd.f32 %v2895, %v2912
        %v2929 = vadd.f32 %v2896, %v2913
        %v2930 = vadd.f32 %v2897, %v2914
        %v2931 = vadd.f32 %v2898, %v2915
        %v2932 = vstv %s2648
        %v2933 = vadd.f32 %v2916, %v2932
        %v2934 = vadd.f32 %v2917, %v2932
        %v2935 = vadd.f32 %v2918, %v2932
        %v2936 = vadd.f32 %v2919, %v2932
        %v2937 = vadd.f32 %v2920, %v2932
        %v2938 = vadd.f32 %v2921, %v2932
        %v2939 = vadd.f32 %v2922, %v2932
        %v2940 = vadd.f32 %v2923, %v2932
        %v2941 = vadd.f32 %v2924, %v2932
        %v2942 = vadd.f32 %v2925, %v2932
        %v2943 = vadd.f32 %v2926, %v2932
        %v2944 = vadd.f32 %v2927, %v2932
        %v2945 = vadd.f32 %v2928, %v2932
        %v2946 = vadd.f32 %v2929, %v2932
        %v2947 = vadd.f32 %v2930, %v2932
        %v2948 = vadd.f32 %v2931, %v2932
        %v2949 = vadd.f32 %v2733, 1.0
        %v2950 = vadd.f32 %v2734, 1.0
        %v2951 = vadd.f32 %v2735, 1.0
        %v2952 = vadd.f32 %v2736, 1.0
        %v2953 = vadd.f32 %v2737, 1.0
        %v2954 = vadd.f32 %v2738, 1.0
        %v2955 = vadd.f32 %v2739, 1.0
        %v2956 = vadd.f32 %v2740, 1.0
        %v2957 = vadd.f32 %v2741, 1.0
        %v2958 = vadd.f32 %v2742, 1.0
        %v2959 = vadd.f32 %v2743, 1.0
        %v2960 = vadd.f32 %v2744, 1.0
        %v2961 = vadd.f32 %v2745, 1.0
        %v2962 = vadd.f32 %v2746, 1.0
        %v2963 = vadd.f32 %v2747, 1.0
        %v2964 = vadd.f32 %v2748, 1.0
        %v2965 = vmul.f32 %v2949, 16.0
        %v2966 = vmul.f32 %v2950, 16.0
        %v2967 = vmul.f32 %v2951, 16.0
        %v2968 = vmul.f32 %v2952, 16.0
        %v2969 = vmul.f32 %v2953, 16.0
        %v2970 = vmul.f32 %v2954, 16.0
        %v2971 = vmul.f32 %v2955, 16.0
        %v2972 = vmul.f32 %v2956, 16.0
        %v2973 = vmul.f32 %v2957, 16.0
        %v2974 = vmul.f32 %v2958, 16.0
        %v2975 = vmul.f32 %v2959, 16.0
        %v2976 = vmul.f32 %v2960, 16.0
        %v2977 = vmul.f32 %v2961, 16.0
        %v2978 = vmul.f32 %v2962, 16.0
        %v2979 = vmul.f32 %v2963, 16.0
        %v2980 = vmul.f32 %v2964, 16.0
        %v2981 = vsub.f32 %v2965, 1.0
        %v2982 = vsub.f32 %v2966, 1.0
        %v2983 = vsub.f32 %v2967, 1.0
        %v2984 = vsub.f32 %v2968, 1.0
        %v2985 = vsub.f32 %v2969, 1.0
        %v2986 = vsub.f32 %v2970, 1.0
        %v2987 = vsub.f32 %v2971, 1.0
        %v2988 = vsub.f32 %v2972, 1.0
        %v2989 = vsub.f32 %v2973, 1.0
        %v2990 = vsub.f32 %v2974, 1.0
        %v2991 = vsub.f32 %v2975, 1.0
        %v2992 = vsub.f32 %v2976, 1.0
        %v2993 = vsub.f32 %v2977, 1.0
        %v2994 = vsub.f32 %v2978, 1.0
        %v2995 = vsub.f32 %v2979, 1.0
        %v2996 = vsub.f32 %v2980, 1.0
        %v2997 = vmul.f32 %v2981, 0.5
        %v2998 = vmul.f32 %v2982, 0.5
        %v2999 = vmul.f32 %v2983, 0.5
        %v3000 = vmul.f32 %v2984, 0.5
        %v3001 = vmul.f32 %v2985, 0.5
        %v3002 = vmul.f32 %v2986, 0.5
        %v3003 = vmul.f32 %v2987, 0.5
        %v3004 = vmul.f32 %v2988, 0.5
        %v3005 = vmul.f32 %v2989, 0.5
        %v3006 = vmul.f32 %v2990, 0.5
        %v3007 = vmul.f32 %v2991, 0.5
        %v3008 = vmul.f32 %v2992, 0.5
        %v3009 = vmul.f32 %v2993, 0.5
        %v3010 = vmul.f32 %v2994, 0.5
        %v3011 = vmul.f32 %v2995, 0.5
        %v3012 = vmul.f32 %v2996, 0.5
        %v3013 = vadd.f32 %v2833, 1.0
        %v3014 = vadd.f32 %v2834, 1.0
        %v3015 = vadd.f32 %v2835, 1.0
        %v3016 = vadd.f32 %v2836, 1.0
        %v3017 = vadd.f32 %v2837, 1.0
        %v3018 = vadd.f32 %v2838, 1.0
        %v3019 = vadd.f32 %v2839, 1.0
        %v3020 = vadd.f32 %v2840, 1.0
        %v3021 = vadd.f32 %v2841, 1.0
        %v3022 = vadd.f32 %v2842, 1.0
        %v3023 = vadd.f32 %v2843, 1.0
        %v3024 = vadd.f32 %v2844, 1.0
        %v3025 = vadd.f32 %v2845, 1.0
        %v3026 = vadd.f32 %v2846, 1.0
        %v3027 = vadd.f32 %v2847, 1.0
        %v3028 = vadd.f32 %v2848, 1.0
        %v3029 = vmul.f32 %v3013, 16.0
        %v3030 = vmul.f32 %v3014, 16.0
        %v3031 = vmul.f32 %v3015, 16.0
        %v3032 = vmul.f32 %v3016, 16.0
        %v3033 = vmul.f32 %v3017, 16.0
        %v3034 = vmul.f32 %v3018, 16.0
        %v3035 = vmul.f32 %v3019, 16.0
        %v3036 = vmul.f32 %v3020, 16.0
        %v3037 = vmul.f32 %v3021, 16.0
        %v3038 = vmul.f32 %v3022, 16.0
        %v3039 = vmul.f32 %v3023, 16.0
        %v3040 = vmul.f32 %v3024, 16.0
        %v3041 = vmul.f32 %v3025, 16.0
        %v3042 = vmul.f32 %v3026, 16.0
        %v3043 = vmul.f32 %v3027, 16.0
        %v3044 = vmul.f32 %v3028, 16.0
        %v3045 = vsub.f32 %v3029, 1.0
        %v3046 = vsub.f32 %v3030, 1.0
        %v3047 = vsub.f32 %v3031, 1.0
        %v3048 = vsub.f32 %v3032, 1.0
        %v3049 = vsub.f32 %v3033, 1.0
        %v3050 = vsub.f32 %v3034, 1.0
        %v3051 = vsub.f32 %v3035, 1.0
        %v3052 = vsub.f32 %v3036, 1.0
        %v3053 = vsub.f32 %v3037, 1.0
        %v3054 = vsub.f32 %v3038, 1.0
        %v3055 = vsub.f32 %v3039, 1.0
        %v3056 = vsub.f32 %v3040, 1.0
        %v3057 = vsub.f32 %v3041, 1.0
        %v3058 = vsub.f32 %v3042, 1.0
        %v3059 = vsub.f32 %v3043, 1.0
        %v3060 = vsub.f32 %v3044, 1.0
        %v3061 = vmul.f32 %v3045, 0.5
        %v3062 = vmul.f32 %v3046, 0.5
        %v3063 = vmul.f32 %v3047, 0.5
        %v3064 = vmul.f32 %v3048, 0.5
        %v3065 = vmul.f32 %v3049, 0.5
        %v3066 = vmul.f32 %v3050, 0.5
        %v3067 = vmul.f32 %v3051, 0.5
        %v3068 = vmul.f32 %v3052, 0.5
        %v3069 = vmul.f32 %v3053, 0.5
        %v3070 = vmul.f32 %v3054, 0.5
        %v3071 = vmul.f32 %v3055, 0.5
        %v3072 = vmul.f32 %v3056, 0.5
        %v3073 = vmul.f32 %v3057, 0.5
        %v3074 = vmul.f32 %v3058, 0.5
        %v3075 = vmul.f32 %v3059, 0.5
        %v3076 = vmul.f32 %v3060, 0.5
        %v3077 = vadd.f32 %v2933, 1.0
        %v3078 = vadd.f32 %v2934, 1.0
        %v3079 = vadd.f32 %v2935, 1.0
        %v3080 = vadd.f32 %v2936, 1.0
        %v3081 = vadd.f32 %v2937, 1.0
        %v3082 = vadd.f32 %v2938, 1.0
        %v3083 = vadd.f32 %v2939, 1.0
        %v3084 = vadd.f32 %v2940, 1.0
        %v3085 = vadd.f32 %v2941, 1.0
        %v3086 = vadd.f32 %v2942, 1.0
        %v3087 = vadd.f32 %v2943, 1.0
        %v3088 = vadd.f32 %v2944, 1.0
        %v3089 = vadd.f32 %v2945, 1.0
        %v3090 = vadd.f32 %v2946, 1.0
        %v3091 = vadd.f32 %v2947, 1.0
        %v3092 = vadd.f32 %v2948, 1.0
        %v3093 = vmul.f32 %v3077, 16.0
        %v3094 = vmul.f32 %v3078, 16.0
        %v3095 = vmul.f32 %v3079, 16.0
        %v3096 = vmul.f32 %v3080, 16.0
        %v3097 = vmul.f32 %v3081, 16.0
        %v3098 = vmul.f32 %v3082, 16.0
        %v3099 = vmul.f32 %v3083, 16.0
        %v3100 = vmul.f32 %v3084, 16.0
        %v3101 = vmul.f32 %v3085, 16.0
        %v3102 = vmul.f32 %v3086, 16.0
        %v3103 = vmul.f32 %v3087, 16.0
        %v3104 = vmul.f32 %v3088, 16.0
        %v3105 = vmul.f32 %v3089, 16.0
        %v3106 = vmul.f32 %v3090, 16.0
        %v3107 = vmul.f32 %v3091, 16.0
        %v3108 = vmul.f32 %v3092, 16.0
        %v3109 = vsub.f32 %v3093, 1.0
        %v3110 = vsub.f32 %v3094, 1.0
        %v3111 = vsub.f32 %v3095, 1.0
        %v3112 = vsub.f32 %v3096, 1.0
        %v3113 = vsub.f32 %v3097, 1.0
        %v3114 = vsub.f32 %v3098, 1.0
        %v3115 = vsub.f32 %v3099, 1.0
        %v3116 = vsub.f32 %v3100, 1.0
        %v3117 = vsub.f32 %v3101, 1.0
        %v3118 = vsub.f32 %v3102, 1.0
        %v3119 = vsub.f32 %v3103, 1.0
        %v3120 = vsub.f32 %v3104, 1.0
        %v3121 = vsub.f32 %v3105, 1.0
        %v3122 = vsub.f32 %v3106, 1.0
        %v3123 = vsub.f32 %v3107, 1.0
        %v3124 = vsub.f32 %v3108, 1.0
        %v3125 = vmul.f32 %v3109, 0.5
        %v3126 = vmul.f32 %v3110, 0.5
        %v3127 = vmul.f32 %v3111, 0.5
        %v3128 = vmul.f32 %v3112, 0.5
        %v3129 = vmul.f32 %v3113, 0.5
        %v3130 = vmul.f32 %v3114, 0.5
        %v3131 = vmul.f32 %v3115, 0.5
        %v3132 = vmul.f32 %v3116, 0.5
        %v3133 = vmul.f32 %v3117, 0.5
        %v3134 = vmul.f32 %v3118, 0.5
        %v3135 = vmul.f32 %v3119, 0.5
        %v3136 = vmul.f32 %v3120, 0.5
        %v3137 = vmul.f32 %v3121, 0.5
        %v3138 = vmul.f32 %v3122, 0.5
        %v3139 = vmul.f32 %v3123, 0.5
        %v3140 = vmul.f32 %v3124, 0.5
        %v3141 = vfloor.f32 %v2997
        %v3142 = vfloor.f32 %v2998
        %v3143 = vfloor.f32 %v2999
        %v3144 = vfloor.f32 %v3000
        %v3145 = vfloor.f32 %v3001
        %v3146 = vfloor.f32 %v3002
        %v3147 = vfloor.f32 %v3003
        %v3148 = vfloor.f32 %v3004
        %v3149 = vfloor.f32 %v3005
        %v3150 = vfloor.f32 %v3006
        %v3151 = vfloor.f32 %v3007
        %v3152 = vfloor.f32 %v3008
        %v3153 = vfloor.f32 %v3009
        %v3154 = vfloor.f32 %v3010
        %v3155 = vfloor.f32 %v3011
        %v3156 = vfloor.f32 %v3012
        %v3157 = vsub.f32 %v2997, %v3141
        %v3158 = vsub.f32 %v2998, %v3142
        %v3159 = vsub.f32 %v2999, %v3143
        %v3160 = vsub.f32 %v3000, %v3144
        %v3161 = vsub.f32 %v3001, %v3145
        %v3162 = vsub.f32 %v3002, %v3146
        %v3163 = vsub.f32 %v3003, %v3147
        %v3164 = vsub.f32 %v3004, %v3148
        %v3165 = vsub.f32 %v3005, %v3149
        %v3166 = vsub.f32 %v3006, %v3150
        %v3167 = vsub.f32 %v3007, %v3151
        %v3168 = vsub.f32 %v3008, %v3152
        %v3169 = vsub.f32 %v3009, %v3153
        %v3170 = vsub.f32 %v3010, %v3154
        %v3171 = vsub.f32 %v3011, %v3155
        %v3172 = vsub.f32 %v3012, %v3156
        %v3173 = vfloor.f32 %v3061
        %v3174 = vfloor.f32 %v3062
        %v3175 = vfloor.f32 %v3063
        %v3176 = vfloor.f32 %v3064
        %v3177 = vfloor.f32 %v3065
        %v3178 = vfloor.f32 %v3066
        %v3179 = vfloor.f32 %v3067
        %v3180 = vfloor.f32 %v3068
        %v3181 = vfloor.f32 %v3069
        %v3182 = vfloor.f32 %v3070
        %v3183 = vfloor.f32 %v3071
        %v3184 = vfloor.f32 %v3072
        %v3185 = vfloor.f32 %v3073
        %v3186 = vfloor.f32 %v3074
        %v3187 = vfloor.f32 %v3075
        %v3188 = vfloor.f32 %v3076
        %v3189 = vsub.f32 %v3061, %v3173
        %v3190 = vsub.f32 %v3062, %v3174
        %v3191 = vsub.f32 %v3063, %v3175
        %v3192 = vsub.f32 %v3064, %v3176
        %v3193 = vsub.f32 %v3065, %v3177
        %v3194 = vsub.f32 %v3066, %v3178
        %v3195 = vsub.f32 %v3067, %v3179
        %v3196 = vsub.f32 %v3068, %v3180
        %v3197 = vsub.f32 %v3069, %v3181
        %v3198 = vsub.f32 %v3070, %v3182
        %v3199 = vsub.f32 %v3071, %v3183
        %v3200 = vsub.f32 %v3072, %v3184
        %v3201 = vsub.f32 %v3073, %v3185
        %v3202 = vsub.f32 %v3074, %v3186
        %v3203 = vsub.f32 %v3075, %v3187
        %v3204 = vsub.f32 %v3076, %v3188
        %v3205 = vfloor.f32 %v3125
        %v3206 = vfloor.f32 %v3126
        %v3207 = vfloor.f32 %v3127
        %v3208 = vfloor.f32 %v3128
        %v3209 = vfloor.f32 %v3129
        %v3210 = vfloor.f32 %v3130
        %v3211 = vfloor.f32 %v3131
        %v3212 = vfloor.f32 %v3132
        %v3213 = vfloor.f32 %v3133
        %v3214 = vfloor.f32 %v3134
        %v3215 = vfloor.f32 %v3135
        %v3216 = vfloor.f32 %v3136
        %v3217 = vfloor.f32 %v3137
        %v3218 = vfloor.f32 %v3138
        %v3219 = vfloor.f32 %v3139
        %v3220 = vfloor.f32 %v3140
        %v3221 = vsub.f32 %v3125, %v3205
        %v3222 = vsub.f32 %v3126, %v3206
        %v3223 = vsub.f32 %v3127, %v3207
        %v3224 = vsub.f32 %v3128, %v3208
        %v3225 = vsub.f32 %v3129, %v3209
        %v3226 = vsub.f32 %v3130, %v3210
        %v3227 = vsub.f32 %v3131, %v3211
        %v3228 = vsub.f32 %v3132, %v3212
        %v3229 = vsub.f32 %v3133, %v3213
        %v3230 = vsub.f32 %v3134, %v3214
        %v3231 = vsub.f32 %v3135, %v3215
        %v3232 = vsub.f32 %v3136, %v3216
        %v3233 = vsub.f32 %v3137, %v3217
        %v3234 = vsub.f32 %v3138, %v3218
        %v3235 = vsub.f32 %v3139, %v3219
        %v3236 = vsub.f32 %v3140, %v3220
        %v3237 = vsub.f32 1.0, %v3157
        %v3238 = vsub.f32 1.0, %v3158
        %v3239 = vsub.f32 1.0, %v3159
        %v3240 = vsub.f32 1.0, %v3160
        %v3241 = vsub.f32 1.0, %v3161
        %v3242 = vsub.f32 1.0, %v3162
        %v3243 = vsub.f32 1.0, %v3163
        %v3244 = vsub.f32 1.0, %v3164
        %v3245 = vsub.f32 1.0, %v3165
        %v3246 = vsub.f32 1.0, %v3166
        %v3247 = vsub.f32 1.0, %v3167
        %v3248 = vsub.f32 1.0, %v3168
        %v3249 = vsub.f32 1.0, %v3169
        %v3250 = vsub.f32 1.0, %v3170
        %v3251 = vsub.f32 1.0, %v3171
        %v3252 = vsub.f32 1.0, %v3172
        %vm3253 = vcmp.eq.f32.partialorder %v3141, 8.0
        %vm3254 = vcmp.eq.f32.partialorder %v3142, 8.0
        %vm3255 = vcmp.eq.f32.partialorder %v3143, 8.0
        %vm3256 = vcmp.eq.f32.partialorder %v3144, 8.0
        %vm3257 = vcmp.eq.f32.partialorder %v3145, 8.0
        %vm3258 = vcmp.eq.f32.partialorder %v3146, 8.0
        %vm3259 = vcmp.eq.f32.partialorder %v3147, 8.0
        %vm3260 = vcmp.eq.f32.partialorder %v3148, 8.0
        %vm3261 = vcmp.eq.f32.partialorder %v3149, 8.0
        %vm3262 = vcmp.eq.f32.partialorder %v3150, 8.0
        %vm3263 = vcmp.eq.f32.partialorder %v3151, 8.0
        %vm3264 = vcmp.eq.f32.partialorder %v3152, 8.0
        %vm3265 = vcmp.eq.f32.partialorder %v3153, 8.0
        %vm3266 = vcmp.eq.f32.partialorder %v3154, 8.0
        %vm3267 = vcmp.eq.f32.partialorder %v3155, 8.0
        %vm3268 = vcmp.eq.f32.partialorder %v3156, 8.0
        %v3269 = vsel %vm3253, 1, 0
        %v3270 = vsel %vm3254, 1, 0
        %v3271 = vsel %vm3255, 1, 0
        %v3272 = vsel %vm3256, 1, 0
        %v3273 = vsel %vm3257, 1, 0
        %v3274 = vsel %vm3258, 1, 0
        %v3275 = vsel %vm3259, 1, 0
        %v3276 = vsel %vm3260, 1, 0
        %v3277 = vsel %vm3261, 1, 0
        %v3278 = vsel %vm3262, 1, 0
        %v3279 = vsel %vm3263, 1, 0
        %v3280 = vsel %vm3264, 1, 0
        %v3281 = vsel %vm3265, 1, 0
        %v3282 = vsel %vm3266, 1, 0
        %v3283 = vsel %vm3267, 1, 0
        %v3284 = vsel %vm3268, 1, 0
        %v3285 = vcvt.s32.f32 %v3269
        %v3286 = vcvt.s32.f32 %v3270
        %v3287 = vcvt.s32.f32 %v3271
        %v3288 = vcvt.s32.f32 %v3272
        %v3289 = vcvt.s32.f32 %v3273
        %v3290 = vcvt.s32.f32 %v3274
        %v3291 = vcvt.s32.f32 %v3275
        %v3292 = vcvt.s32.f32 %v3276
        %v3293 = vcvt.s32.f32 %v3277
        %v3294 = vcvt.s32.f32 %v3278
        %v3295 = vcvt.s32.f32 %v3279
        %v3296 = vcvt.s32.f32 %v3280
        %v3297 = vcvt.s32.f32 %v3281
        %v3298 = vcvt.s32.f32 %v3282
        %v3299 = vcvt.s32.f32 %v3283
        %v3300 = vcvt.s32.f32 %v3284
        %v3301 = vmul.f32 %v3237, %v3285
        %v3302 = vmul.f32 %v3238, %v3286
        %v3303 = vmul.f32 %v3239, %v3287
        %v3304 = vmul.f32 %v3240, %v3288
        %v3305 = vmul.f32 %v3241, %v3289
        %v3306 = vmul.f32 %v3242, %v3290
        %v3307 = vmul.f32 %v3243, %v3291
        %v3308 = vmul.f32 %v3244, %v3292
        %v3309 = vmul.f32 %v3245, %v3293
        %v3310 = vmul.f32 %v3246, %v3294
        %v3311 = vmul.f32 %v3247, %v3295
        %v3312 = vmul.f32 %v3248, %v3296
        %v3313 = vmul.f32 %v3249, %v3297
        %v3314 = vmul.f32 %v3250, %v3298
        %v3315 = vmul.f32 %v3251, %v3299
        %v3316 = vmul.f32 %v3252, %v3300
        %v3317 = vadd.f32 %v3141, 1.0
        %v3318 = vadd.f32 %v3142, 1.0
        %v3319 = vadd.f32 %v3143, 1.0
        %v3320 = vadd.f32 %v3144, 1.0
        %v3321 = vadd.f32 %v3145, 1.0
        %v3322 = vadd.f32 %v3146, 1.0
        %v3323 = vadd.f32 %v3147, 1.0
        %v3324 = vadd.f32 %v3148, 1.0
        %v3325 = vadd.f32 %v3149, 1.0
        %v3326 = vadd.f32 %v3150, 1.0
        %v3327 = vadd.f32 %v3151, 1.0
        %v3328 = vadd.f32 %v3152, 1.0
        %v3329 = vadd.f32 %v3153, 1.0
        %v3330 = vadd.f32 %v3154, 1.0
        %v3331 = vadd.f32 %v3155, 1.0
        %v3332 = vadd.f32 %v3156, 1.0
        %vm3333 = vcmp.eq.f32.partialorder %v3317, 8.0
        %vm3334 = vcmp.eq.f32.partialorder %v3318, 8.0
        %vm3335 = vcmp.eq.f32.partialorder %v3319, 8.0
        %vm3336 = vcmp.eq.f32.partialorder %v3320, 8.0
        %vm3337 = vcmp.eq.f32.partialorder %v3321, 8.0
        %vm3338 = vcmp.eq.f32.partialorder %v3322, 8.0
        %vm3339 = vcmp.eq.f32.partialorder %v3323, 8.0
        %vm3340 = vcmp.eq.f32.partialorder %v3324, 8.0
        %vm3341 = vcmp.eq.f32.partialorder %v3325, 8.0
        %vm3342 = vcmp.eq.f32.partialorder %v3326, 8.0
        %vm3343 = vcmp.eq.f32.partialorder %v3327, 8.0
        %vm3344 = vcmp.eq.f32.partialorder %v3328, 8.0
        %vm3345 = vcmp.eq.f32.partialorder %v3329, 8.0
        %vm3346 = vcmp.eq.f32.partialorder %v3330, 8.0
        %vm3347 = vcmp.eq.f32.partialorder %v3331, 8.0
        %vm3348 = vcmp.eq.f32.partialorder %v3332, 8.0
        %v3349 = vsel %vm3333, 1, 0
        %v3350 = vsel %vm3334, 1, 0
        %v3351 = vsel %vm3335, 1, 0
        %v3352 = vsel %vm3336, 1, 0
        %v3353 = vsel %vm3337, 1, 0
        %v3354 = vsel %vm3338, 1, 0
        %v3355 = vsel %vm3339, 1, 0
        %v3356 = vsel %vm3340, 1, 0
        %v3357 = vsel %vm3341, 1, 0
        %v3358 = vsel %vm3342, 1, 0
        %v3359 = vsel %vm3343, 1, 0
        %v3360 = vsel %vm3344, 1, 0
        %v3361 = vsel %vm3345, 1, 0
        %v3362 = vsel %vm3346, 1, 0
        %v3363 = vsel %vm3347, 1, 0
        %v3364 = vsel %vm3348, 1, 0
        %v3365 = vcvt.s32.f32 %v3349
        %v3366 = vcvt.s32.f32 %v3350
        %v3367 = vcvt.s32.f32 %v3351
        %v3368 = vcvt.s32.f32 %v3352
        %v3369 = vcvt.s32.f32 %v3353
        %v3370 = vcvt.s32.f32 %v3354
        %v3371 = vcvt.s32.f32 %v3355
        %v3372 = vcvt.s32.f32 %v3356
        %v3373 = vcvt.s32.f32 %v3357
        %v3374 = vcvt.s32.f32 %v3358
        %v3375 = vcvt.s32.f32 %v3359
        %v3376 = vcvt.s32.f32 %v3360
        %v3377 = vcvt.s32.f32 %v3361
        %v3378 = vcvt.s32.f32 %v3362
        %v3379 = vcvt.s32.f32 %v3363
        %v3380 = vcvt.s32.f32 %v3364
        %v3381 = vmul.f32 %v3157, %v3365
        %v3382 = vmul.f32 %v3158, %v3366
        %v3383 = vmul.f32 %v3159, %v3367
        %v3384 = vmul.f32 %v3160, %v3368
        %v3385 = vmul.f32 %v3161, %v3369
        %v3386 = vmul.f32 %v3162, %v3370
        %v3387 = vmul.f32 %v3163, %v3371
        %v3388 = vmul.f32 %v3164, %v3372
        %v3389 = vmul.f32 %v3165, %v3373
        %v3390 = vmul.f32 %v3166, %v3374
        %v3391 = vmul.f32 %v3167, %v3375
        %v3392 = vmul.f32 %v3168, %v3376
        %v3393 = vmul.f32 %v3169, %v3377
        %v3394 = vmul.f32 %v3170, %v3378
        %v3395 = vmul.f32 %v3171, %v3379
        %v3396 = vmul.f32 %v3172, %v3380
        %v3397 = vadd.f32 %v3301, %v3381
        %v3398 = vadd.f32 %v3302, %v3382
        %v3399 = vadd.f32 %v3303, %v3383
        %v3400 = vadd.f32 %v3304, %v3384
        %v3401 = vadd.f32 %v3305, %v3385
        %v3402 = vadd.f32 %v3306, %v3386
        %v3403 = vadd.f32 %v3307, %v3387
        %v3404 = vadd.f32 %v3308, %v3388
        %v3405 = vadd.f32 %v3309, %v3389
        %v3406 = vadd.f32 %v3310, %v3390
        %v3407 = vadd.f32 %v3311, %v3391
        %v3408 = vadd.f32 %v3312, %v3392
        %v3409 = vadd.f32 %v3313, %v3393
        %v3410 = vadd.f32 %v3314, %v3394
        %v3411 = vadd.f32 %v3315, %v3395
        %v3412 = vadd.f32 %v3316, %v3396
        %v3413 = vcvt.f32.s32.to.zero.pseudo %v3205
        %v3414 = vcvt.f32.s32.to.zero.pseudo %v3206
        %v3415 = vcvt.f32.s32.to.zero.pseudo %v3207
        %v3416 = vcvt.f32.s32.to.zero.pseudo %v3208
        %v3417 = vcvt.f32.s32.to.zero.pseudo %v3209
        %v3418 = vcvt.f32.s32.to.zero.pseudo %v3210
        %v3419 = vcvt.f32.s32.to.zero.pseudo %v3211
        %v3420 = vcvt.f32.s32.to.zero.pseudo %v3212
        %v3421 = vcvt.f32.s32.to.zero.pseudo %v3213
        %v3422 = vcvt.f32.s32.to.zero.pseudo %v3214
        %v3423 = vcvt.f32.s32.to.zero.pseudo %v3215
        %v3424 = vcvt.f32.s32.to.zero.pseudo %v3216
        %v3425 = vcvt.f32.s32.to.zero.pseudo %v3217
        %v3426 = vcvt.f32.s32.to.zero.pseudo %v3218
        %v3427 = vcvt.f32.s32.to.zero.pseudo %v3219
        %v3428 = vcvt.f32.s32.to.zero.pseudo %v3220
        %v3429 = vcvt.f32.s32.to.zero.pseudo %v3173
        %v3430 = vcvt.f32.s32.to.zero.pseudo %v3174
        %v3431 = vcvt.f32.s32.to.zero.pseudo %v3175
        %v3432 = vcvt.f32.s32.to.zero.pseudo %v3176
        %v3433 = vcvt.f32.s32.to.zero.pseudo %v3177
        %v3434 = vcvt.f32.s32.to.zero.pseudo %v3178
        %v3435 = vcvt.f32.s32.to.zero.pseudo %v3179
        %v3436 = vcvt.f32.s32.to.zero.pseudo %v3180
        %v3437 = vcvt.f32.s32.to.zero.pseudo %v3181
        %v3438 = vcvt.f32.s32.to.zero.pseudo %v3182
        %v3439 = vcvt.f32.s32.to.zero.pseudo %v3183
        %v3440 = vcvt.f32.s32.to.zero.pseudo %v3184
        %v3441 = vcvt.f32.s32.to.zero.pseudo %v3185
        %v3442 = vcvt.f32.s32.to.zero.pseudo %v3186
        %v3443 = vcvt.f32.s32.to.zero.pseudo %v3187
        %v3444 = vcvt.f32.s32.to.zero.pseudo %v3188
        %v3445 = vsub.f32 1.0, %v3221
        %v3446 = vsub.f32 1.0, %v3222
        %v3447 = vsub.f32 1.0, %v3223
        %v3448 = vsub.f32 1.0, %v3224
        %v3449 = vsub.f32 1.0, %v3225
        %v3450 = vsub.f32 1.0, %v3226
        %v3451 = vsub.f32 1.0, %v3227
        %v3452 = vsub.f32 1.0, %v3228
        %v3453 = vsub.f32 1.0, %v3229
        %v3454 = vsub.f32 1.0, %v3230
        %v3455 = vsub.f32 1.0, %v3231
        %v3456 = vsub.f32 1.0, %v3232
        %v3457 = vsub.f32 1.0, %v3233
        %v3458 = vsub.f32 1.0, %v3234
        %v3459 = vsub.f32 1.0, %v3235
        %v3460 = vsub.f32 1.0, %v3236
        %v3461 = vmul.f32 %v3397, %v3445
        %v3462 = vmul.f32 %v3398, %v3446
        %v3463 = vmul.f32 %v3399, %v3447
        %v3464 = vmul.f32 %v3400, %v3448
        %v3465 = vmul.f32 %v3401, %v3449
        %v3466 = vmul.f32 %v3402, %v3450
        %v3467 = vmul.f32 %v3403, %v3451
        %v3468 = vmul.f32 %v3404, %v3452
        %v3469 = vmul.f32 %v3405, %v3453
        %v3470 = vmul.f32 %v3406, %v3454
        %v3471 = vmul.f32 %v3407, %v3455
        %v3472 = vmul.f32 %v3408, %v3456
        %v3473 = vmul.f32 %v3409, %v3457
        %v3474 = vmul.f32 %v3410, %v3458
        %v3475 = vmul.f32 %v3411, %v3459
        %v3476 = vmul.f32 %v3412, %v3460
        %v3477 = vmul.f32 %v3397, %v3221
        %v3478 = vmul.f32 %v3398, %v3222
        %v3479 = vmul.f32 %v3399, %v3223
        %v3480 = vmul.f32 %v3400, %v3224
        %v3481 = vmul.f32 %v3401, %v3225
        %v3482 = vmul.f32 %v3402, %v3226
        %v3483 = vmul.f32 %v3403, %v3227
        %v3484 = vmul.f32 %v3404, %v3228
        %v3485 = vmul.f32 %v3405, %v3229
        %v3486 = vmul.f32 %v3406, %v3230
        %v3487 = vmul.f32 %v3407, %v3231
        %v3488 = vmul.f32 %v3408, %v3232
        %v3489 = vmul.f32 %v3409, %v3233
        %v3490 = vmul.f32 %v3410, %v3234
        %v3491 = vmul.f32 %v3411, %v3235
        %v3492 = vmul.f32 %v3412, %v3236
        %v3493 = vsub.f32 1.0, %v3189
        %v3494 = vsub.f32 1.0, %v3190
        %v3495 = vsub.f32 1.0, %v3191
        %v3496 = vsub.f32 1.0, %v3192
        %v3497 = vsub.f32 1.0, %v3193
        %v3498 = vsub.f32 1.0, %v3194
        %v3499 = vsub.f32 1.0, %v3195
        %v3500 = vsub.f32 1.0, %v3196
        %v3501 = vsub.f32 1.0, %v3197
        %v3502 = vsub.f32 1.0, %v3198
        %v3503 = vsub.f32 1.0, %v3199
        %v3504 = vsub.f32 1.0, %v3200
        %v3505 = vsub.f32 1.0, %v3201
        %v3506 = vsub.f32 1.0, %v3202
        %v3507 = vsub.f32 1.0, %v3203
        %v3508 = vsub.f32 1.0, %v3204
        %vm3509 = vcmp.eq.s32.totalorder %v511, %v3413
        %vm3510 = vcmp.eq.s32.totalorder %v511, %v3414
        %vm3511 = vcmp.eq.s32.totalorder %v511, %v3415
        %vm3512 = vcmp.eq.s32.totalorder %v511, %v3416
        %vm3513 = vcmp.eq.s32.totalorder %v511, %v3417
        %vm3514 = vcmp.eq.s32.totalorder %v511, %v3418
        %vm3515 = vcmp.eq.s32.totalorder %v511, %v3419
        %vm3516 = vcmp.eq.s32.totalorder %v511, %v3420
        %vm3517 = vcmp.eq.s32.totalorder %v511, %v3421
        %vm3518 = vcmp.eq.s32.totalorder %v511, %v3422
        %vm3519 = vcmp.eq.s32.totalorder %v511, %v3423
        %vm3520 = vcmp.eq.s32.totalorder %v511, %v3424
        %vm3521 = vcmp.eq.s32.totalorder %v511, %v3425
        %vm3522 = vcmp.eq.s32.totalorder %v511, %v3426
        %vm3523 = vcmp.eq.s32.totalorder %v511, %v3427
        %vm3524 = vcmp.eq.s32.totalorder %v511, %v3428
        %vm3525 = vcmp.eq.s32.totalorder %v512, %v3413
        %vm3526 = vcmp.eq.s32.totalorder %v512, %v3414
        %vm3527 = vcmp.eq.s32.totalorder %v512, %v3415
        %vm3528 = vcmp.eq.s32.totalorder %v512, %v3416
        %vm3529 = vcmp.eq.s32.totalorder %v512, %v3417
        %vm3530 = vcmp.eq.s32.totalorder %v512, %v3418
        %vm3531 = vcmp.eq.s32.totalorder %v512, %v3419
        %vm3532 = vcmp.eq.s32.totalorder %v512, %v3420
        %vm3533 = vcmp.eq.s32.totalorder %v512, %v3421
        %vm3534 = vcmp.eq.s32.totalorder %v512, %v3422
        %vm3535 = vcmp.eq.s32.totalorder %v512, %v3423
        %vm3536 = vcmp.eq.s32.totalorder %v512, %v3424
        %vm3537 = vcmp.eq.s32.totalorder %v512, %v3425
        %vm3538 = vcmp.eq.s32.totalorder %v512, %v3426
        %vm3539 = vcmp.eq.s32.totalorder %v512, %v3427
        %vm3540 = vcmp.eq.s32.totalorder %v512, %v3428
        %v3541 = vsel %vm3509, %v3461, 0.0
        %v3542 = vsel %vm3510, %v3462, 0.0
        %v3543 = vsel %vm3511, %v3463, 0.0
        %v3544 = vsel %vm3512, %v3464, 0.0
        %v3545 = vsel %vm3513, %v3465, 0.0
        %v3546 = vsel %vm3514, %v3466, 0.0
        %v3547 = vsel %vm3515, %v3467, 0.0
        %v3548 = vsel %vm3516, %v3468, 0.0
        %v3549 = vsel %vm3517, %v3469, 0.0
        %v3550 = vsel %vm3518, %v3470, 0.0
        %v3551 = vsel %vm3519, %v3471, 0.0
        %v3552 = vsel %vm3520, %v3472, 0.0
        %v3553 = vsel %vm3521, %v3473, 0.0
        %v3554 = vsel %vm3522, %v3474, 0.0
        %v3555 = vsel %vm3523, %v3475, 0.0
        %v3556 = vsel %vm3524, %v3476, 0.0
        %v3557 = vsel %vm3525, %v3461, 0.0
        %v3558 = vsel %vm3526, %v3462, 0.0
        %v3559 = vsel %vm3527, %v3463, 0.0
        %v3560 = vsel %vm3528, %v3464, 0.0
        %v3561 = vsel %vm3529, %v3465, 0.0
        %v3562 = vsel %vm3530, %v3466, 0.0
        %v3563 = vsel %vm3531, %v3467, 0.0
        %v3564 = vsel %vm3532, %v3468, 0.0
        %v3565 = vsel %vm3533, %v3469, 0.0
        %v3566 = vsel %vm3534, %v3470, 0.0
        %v3567 = vsel %vm3535, %v3471, 0.0
        %v3568 = vsel %vm3536, %v3472, 0.0
        %v3569 = vsel %vm3537, %v3473, 0.0
        %v3570 = vsel %vm3538, %v3474, 0.0
        %v3571 = vsel %vm3539, %v3475, 0.0
        %v3572 = vsel %vm3540, %v3476, 0.0
        %v3573 = vadd.s32 %v3413, 1
        %v3574 = vadd.s32 %v3414, 1
        %v3575 = vadd.s32 %v3415, 1
        %v3576 = vadd.s32 %v3416, 1
        %v3577 = vadd.s32 %v3417, 1
        %v3578 = vadd.s32 %v3418, 1
        %v3579 = vadd.s32 %v3419, 1
        %v3580 = vadd.s32 %v3420, 1
        %v3581 = vadd.s32 %v3421, 1
        %v3582 = vadd.s32 %v3422, 1
        %v3583 = vadd.s32 %v3423, 1
        %v3584 = vadd.s32 %v3424, 1
        %v3585 = vadd.s32 %v3425, 1
        %v3586 = vadd.s32 %v3426, 1
        %v3587 = vadd.s32 %v3427, 1
        %v3588 = vadd.s32 %v3428, 1
        %vm3589 = vcmp.eq.s32.totalorder %v511, %v3573
        %vm3590 = vcmp.eq.s32.totalorder %v511, %v3574
        %vm3591 = vcmp.eq.s32.totalorder %v511, %v3575
        %vm3592 = vcmp.eq.s32.totalorder %v511, %v3576
        %vm3593 = vcmp.eq.s32.totalorder %v511, %v3577
        %vm3594 = vcmp.eq.s32.totalorder %v511, %v3578
        %vm3595 = vcmp.eq.s32.totalorder %v511, %v3579
        %vm3596 = vcmp.eq.s32.totalorder %v511, %v3580
        %vm3597 = vcmp.eq.s32.totalorder %v511, %v3581
        %vm3598 = vcmp.eq.s32.totalorder %v511, %v3582
        %vm3599 = vcmp.eq.s32.totalorder %v511, %v3583
        %vm3600 = vcmp.eq.s32.totalorder %v511, %v3584
        %vm3601 = vcmp.eq.s32.totalorder %v511, %v3585
        %vm3602 = vcmp.eq.s32.totalorder %v511, %v3586
        %vm3603 = vcmp.eq.s32.totalorder %v511, %v3587
        %vm3604 = vcmp.eq.s32.totalorder %v511, %v3588
        %vm3605 = vcmp.eq.s32.totalorder %v512, %v3573
        %vm3606 = vcmp.eq.s32.totalorder %v512, %v3574
        %vm3607 = vcmp.eq.s32.totalorder %v512, %v3575
        %vm3608 = vcmp.eq.s32.totalorder %v512, %v3576
        %vm3609 = vcmp.eq.s32.totalorder %v512, %v3577
        %vm3610 = vcmp.eq.s32.totalorder %v512, %v3578
        %vm3611 = vcmp.eq.s32.totalorder %v512, %v3579
        %vm3612 = vcmp.eq.s32.totalorder %v512, %v3580
        %vm3613 = vcmp.eq.s32.totalorder %v512, %v3581
        %vm3614 = vcmp.eq.s32.totalorder %v512, %v3582
        %vm3615 = vcmp.eq.s32.totalorder %v512, %v3583
        %vm3616 = vcmp.eq.s32.totalorder %v512, %v3584
        %vm3617 = vcmp.eq.s32.totalorder %v512, %v3585
        %vm3618 = vcmp.eq.s32.totalorder %v512, %v3586
        %vm3619 = vcmp.eq.s32.totalorder %v512, %v3587
        %vm3620 = vcmp.eq.s32.totalorder %v512, %v3588
        %v3621 = vsel %vm3589, %v3477, 0.0
        %v3622 = vsel %vm3590, %v3478, 0.0
        %v3623 = vsel %vm3591, %v3479, 0.0
        %v3624 = vsel %vm3592, %v3480, 0.0
        %v3625 = vsel %vm3593, %v3481, 0.0
        %v3626 = vsel %vm3594, %v3482, 0.0
        %v3627 = vsel %vm3595, %v3483, 0.0
        %v3628 = vsel %vm3596, %v3484, 0.0
        %v3629 = vsel %vm3597, %v3485, 0.0
        %v3630 = vsel %vm3598, %v3486, 0.0
        %v3631 = vsel %vm3599, %v3487, 0.0
        %v3632 = vsel %vm3600, %v3488, 0.0
        %v3633 = vsel %vm3601, %v3489, 0.0
        %v3634 = vsel %vm3602, %v3490, 0.0
        %v3635 = vsel %vm3603, %v3491, 0.0
        %v3636 = vsel %vm3604, %v3492, 0.0
        %v3637 = vsel %vm3605, %v3477, 0.0
        %v3638 = vsel %vm3606, %v3478, 0.0
        %v3639 = vsel %vm3607, %v3479, 0.0
        %v3640 = vsel %vm3608, %v3480, 0.0
        %v3641 = vsel %vm3609, %v3481, 0.0
        %v3642 = vsel %vm3610, %v3482, 0.0
        %v3643 = vsel %vm3611, %v3483, 0.0
        %v3644 = vsel %vm3612, %v3484, 0.0
        %v3645 = vsel %vm3613, %v3485, 0.0
        %v3646 = vsel %vm3614, %v3486, 0.0
        %v3647 = vsel %vm3615, %v3487, 0.0
        %v3648 = vsel %vm3616, %v3488, 0.0
        %v3649 = vsel %vm3617, %v3489, 0.0
        %v3650 = vsel %vm3618, %v3490, 0.0
        %v3651 = vsel %vm3619, %v3491, 0.0
        %v3652 = vsel %vm3620, %v3492, 0.0
        %v3653 = vadd.f32 %v3541, %v3621
        %v3654 = vadd.f32 %v3542, %v3622
        %v3655 = vadd.f32 %v3543, %v3623
        %v3656 = vadd.f32 %v3544, %v3624
        %v3657 = vadd.f32 %v3545, %v3625
        %v3658 = vadd.f32 %v3546, %v3626
        %v3659 = vadd.f32 %v3547, %v3627
        %v3660 = vadd.f32 %v3548, %v3628
        %v3661 = vadd.f32 %v3549, %v3629
        %v3662 = vadd.f32 %v3550, %v3630
        %v3663 = vadd.f32 %v3551, %v3631
        %v3664 = vadd.f32 %v3552, %v3632
        %v3665 = vadd.f32 %v3553, %v3633
        %v3666 = vadd.f32 %v3554, %v3634
        %v3667 = vadd.f32 %v3555, %v3635
        %v3668 = vadd.f32 %v3556, %v3636
        %v3669 = vadd.f32 %v3557, %v3637
        %v3670 = vadd.f32 %v3558, %v3638
        %v3671 = vadd.f32 %v3559, %v3639
        %v3672 = vadd.f32 %v3560, %v3640
        %v3673 = vadd.f32 %v3561, %v3641
        %v3674 = vadd.f32 %v3562, %v3642
        %v3675 = vadd.f32 %v3563, %v3643
        %v3676 = vadd.f32 %v3564, %v3644
        %v3677 = vadd.f32 %v3565, %v3645
        %v3678 = vadd.f32 %v3566, %v3646
        %v3679 = vadd.f32 %v3567, %v3647
        %v3680 = vadd.f32 %v3568, %v3648
        %v3681 = vadd.f32 %v3569, %v3649
        %v3682 = vadd.f32 %v3570, %v3650
        %v3683 = vadd.f32 %v3571, %v3651
        %v3684 = vadd.f32 %v3572, %v3652
        %vm3685 = vcmp.eq.s32.totalorder %v511, %v3429
        %vm3686 = vcmp.eq.s32.totalorder %v511, %v3430
        %vm3687 = vcmp.eq.s32.totalorder %v511, %v3431
        %vm3688 = vcmp.eq.s32.totalorder %v511, %v3432
        %vm3689 = vcmp.eq.s32.totalorder %v511, %v3433
        %vm3690 = vcmp.eq.s32.totalorder %v511, %v3434
        %vm3691 = vcmp.eq.s32.totalorder %v511, %v3435
        %vm3692 = vcmp.eq.s32.totalorder %v511, %v3436
        %vm3693 = vcmp.eq.s32.totalorder %v511, %v3437
        %vm3694 = vcmp.eq.s32.totalorder %v511, %v3438
        %vm3695 = vcmp.eq.s32.totalorder %v511, %v3439
        %vm3696 = vcmp.eq.s32.totalorder %v511, %v3440
        %vm3697 = vcmp.eq.s32.totalorder %v511, %v3441
        %vm3698 = vcmp.eq.s32.totalorder %v511, %v3442
        %vm3699 = vcmp.eq.s32.totalorder %v511, %v3443
        %vm3700 = vcmp.eq.s32.totalorder %v511, %v3444
        %vm3701 = vcmp.eq.s32.totalorder %v512, %v3429
        %vm3702 = vcmp.eq.s32.totalorder %v512, %v3430
        %vm3703 = vcmp.eq.s32.totalorder %v512, %v3431
        %vm3704 = vcmp.eq.s32.totalorder %v512, %v3432
        %vm3705 = vcmp.eq.s32.totalorder %v512, %v3433
        %vm3706 = vcmp.eq.s32.totalorder %v512, %v3434
        %vm3707 = vcmp.eq.s32.totalorder %v512, %v3435
        %vm3708 = vcmp.eq.s32.totalorder %v512, %v3436
        %vm3709 = vcmp.eq.s32.totalorder %v512, %v3437
        %vm3710 = vcmp.eq.s32.totalorder %v512, %v3438
        %vm3711 = vcmp.eq.s32.totalorder %v512, %v3439
        %vm3712 = vcmp.eq.s32.totalorder %v512, %v3440
        %vm3713 = vcmp.eq.s32.totalorder %v512, %v3441
        %vm3714 = vcmp.eq.s32.totalorder %v512, %v3442
        %vm3715 = vcmp.eq.s32.totalorder %v512, %v3443
        %vm3716 = vcmp.eq.s32.totalorder %v512, %v3444
        %v3717 = vsel %vm3685, %v3493, 0.0
        %v3718 = vsel %vm3686, %v3494, 0.0
        %v3719 = vsel %vm3687, %v3495, 0.0
        %v3720 = vsel %vm3688, %v3496, 0.0
        %v3721 = vsel %vm3689, %v3497, 0.0
        %v3722 = vsel %vm3690, %v3498, 0.0
        %v3723 = vsel %vm3691, %v3499, 0.0
        %v3724 = vsel %vm3692, %v3500, 0.0
        %v3725 = vsel %vm3693, %v3501, 0.0
        %v3726 = vsel %vm3694, %v3502, 0.0
        %v3727 = vsel %vm3695, %v3503, 0.0
        %v3728 = vsel %vm3696, %v3504, 0.0
        %v3729 = vsel %vm3697, %v3505, 0.0
        %v3730 = vsel %vm3698, %v3506, 0.0
        %v3731 = vsel %vm3699, %v3507, 0.0
        %v3732 = vsel %vm3700, %v3508, 0.0
        %v3733 = vsel %vm3701, %v3493, 0.0
        %v3734 = vsel %vm3702, %v3494, 0.0
        %v3735 = vsel %vm3703, %v3495, 0.0
        %v3736 = vsel %vm3704, %v3496, 0.0
        %v3737 = vsel %vm3705, %v3497, 0.0
        %v3738 = vsel %vm3706, %v3498, 0.0
        %v3739 = vsel %vm3707, %v3499, 0.0
        %v3740 = vsel %vm3708, %v3500, 0.0
        %v3741 = vsel %vm3709, %v3501, 0.0
        %v3742 = vsel %vm3710, %v3502, 0.0
        %v3743 = vsel %vm3711, %v3503, 0.0
        %v3744 = vsel %vm3712, %v3504, 0.0
        %v3745 = vsel %vm3713, %v3505, 0.0
        %v3746 = vsel %vm3714, %v3506, 0.0
        %v3747 = vsel %vm3715, %v3507, 0.0
        %v3748 = vsel %vm3716, %v3508, 0.0
        %v3749 = vadd.s32 %v3429, 1
        %v3750 = vadd.s32 %v3430, 1
        %v3751 = vadd.s32 %v3431, 1
        %v3752 = vadd.s32 %v3432, 1
        %v3753 = vadd.s32 %v3433, 1
        %v3754 = vadd.s32 %v3434, 1
        %v3755 = vadd.s32 %v3435, 1
        %v3756 = vadd.s32 %v3436, 1
        %v3757 = vadd.s32 %v3437, 1
        %v3758 = vadd.s32 %v3438, 1
        %v3759 = vadd.s32 %v3439, 1
        %v3760 = vadd.s32 %v3440, 1
        %v3761 = vadd.s32 %v3441, 1
        %v3762 = vadd.s32 %v3442, 1
        %v3763 = vadd.s32 %v3443, 1
        %v3764 = vadd.s32 %v3444, 1
        %vm3765 = vcmp.eq.s32.totalorder %v511, %v3749
        %vm3766 = vcmp.eq.s32.totalorder %v511, %v3750
        %vm3767 = vcmp.eq.s32.totalorder %v511, %v3751
        %vm3768 = vcmp.eq.s32.totalorder %v511, %v3752
        %vm3769 = vcmp.eq.s32.totalorder %v511, %v3753
        %vm3770 = vcmp.eq.s32.totalorder %v511, %v3754
        %vm3771 = vcmp.eq.s32.totalorder %v511, %v3755
        %vm3772 = vcmp.eq.s32.totalorder %v511, %v3756
        %vm3773 = vcmp.eq.s32.totalorder %v511, %v3757
        %vm3774 = vcmp.eq.s32.totalorder %v511, %v3758
        %vm3775 = vcmp.eq.s32.totalorder %v511, %v3759
        %vm3776 = vcmp.eq.s32.totalorder %v511, %v3760
        %vm3777 = vcmp.eq.s32.totalorder %v511, %v3761
        %vm3778 = vcmp.eq.s32.totalorder %v511, %v3762
        %vm3779 = vcmp.eq.s32.totalorder %v511, %v3763
        %vm3780 = vcmp.eq.s32.totalorder %v511, %v3764
        %vm3781 = vcmp.eq.s32.totalorder %v512, %v3749
        %vm3782 = vcmp.eq.s32.totalorder %v512, %v3750
        %vm3783 = vcmp.eq.s32.totalorder %v512, %v3751
        %vm3784 = vcmp.eq.s32.totalorder %v512, %v3752
        %vm3785 = vcmp.eq.s32.totalorder %v512, %v3753
        %vm3786 = vcmp.eq.s32.totalorder %v512, %v3754
        %vm3787 = vcmp.eq.s32.totalorder %v512, %v3755
        %vm3788 = vcmp.eq.s32.totalorder %v512, %v3756
        %vm3789 = vcmp.eq.s32.totalorder %v512, %v3757
        %vm3790 = vcmp.eq.s32.totalorder %v512, %v3758
        %vm3791 = vcmp.eq.s32.totalorder %v512, %v3759
        %vm3792 = vcmp.eq.s32.totalorder %v512, %v3760
        %vm3793 = vcmp.eq.s32.totalorder %v512, %v3761
        %vm3794 = vcmp.eq.s32.totalorder %v512, %v3762
        %vm3795 = vcmp.eq.s32.totalorder %v512, %v3763
        %vm3796 = vcmp.eq.s32.totalorder %v512, %v3764
        %v3797 = vsel %vm3765, %v3189, 0.0
        %v3798 = vsel %vm3766, %v3190, 0.0
        %v3799 = vsel %vm3767, %v3191, 0.0
        %v3800 = vsel %vm3768, %v3192, 0.0
        %v3801 = vsel %vm3769, %v3193, 0.0
        %v3802 = vsel %vm3770, %v3194, 0.0
        %v3803 = vsel %vm3771, %v3195, 0.0
        %v3804 = vsel %vm3772, %v3196, 0.0
        %v3805 = vsel %vm3773, %v3197, 0.0
        %v3806 = vsel %vm3774, %v3198, 0.0
        %v3807 = vsel %vm3775, %v3199, 0.0
        %v3808 = vsel %vm3776, %v3200, 0.0
        %v3809 = vsel %vm3777, %v3201, 0.0
        %v3810 = vsel %vm3778, %v3202, 0.0
        %v3811 = vsel %vm3779, %v3203, 0.0
        %v3812 = vsel %vm3780, %v3204, 0.0
        %v3813 = vsel %vm3781, %v3189, 0.0
        %v3814 = vsel %vm3782, %v3190, 0.0
        %v3815 = vsel %vm3783, %v3191, 0.0
        %v3816 = vsel %vm3784, %v3192, 0.0
        %v3817 = vsel %vm3785, %v3193, 0.0
        %v3818 = vsel %vm3786, %v3194, 0.0
        %v3819 = vsel %vm3787, %v3195, 0.0
        %v3820 = vsel %vm3788, %v3196, 0.0
        %v3821 = vsel %vm3789, %v3197, 0.0
        %v3822 = vsel %vm3790, %v3198, 0.0
        %v3823 = vsel %vm3791, %v3199, 0.0
        %v3824 = vsel %vm3792, %v3200, 0.0
        %v3825 = vsel %vm3793, %v3201, 0.0
        %v3826 = vsel %vm3794, %v3202, 0.0
        %v3827 = vsel %vm3795, %v3203, 0.0
        %v3828 = vsel %vm3796, %v3204, 0.0
        %v3829 = vadd.f32 %v3717, %v3797
        %v3830 = vadd.f32 %v3718, %v3798
        %v3831 = vadd.f32 %v3719, %v3799
        %v3832 = vadd.f32 %v3720, %v3800
        %v3833 = vadd.f32 %v3721, %v3801
        %v3834 = vadd.f32 %v3722, %v3802
        %v3835 = vadd.f32 %v3723, %v3803
        %v3836 = vadd.f32 %v3724, %v3804
        %v3837 = vadd.f32 %v3725, %v3805
        %v3838 = vadd.f32 %v3726, %v3806
        %v3839 = vadd.f32 %v3727, %v3807
        %v3840 = vadd.f32 %v3728, %v3808
        %v3841 = vadd.f32 %v3729, %v3809
        %v3842 = vadd.f32 %v3730, %v3810
        %v3843 = vadd.f32 %v3731, %v3811
        %v3844 = vadd.f32 %v3732, %v3812
        %v3845 = vadd.f32 %v3733, %v3813
        %v3846 = vadd.f32 %v3734, %v3814
        %v3847 = vadd.f32 %v3735, %v3815
        %v3848 = vadd.f32 %v3736, %v3816
        %v3849 = vadd.f32 %v3737, %v3817
        %v3850 = vadd.f32 %v3738, %v3818
        %v3851 = vadd.f32 %v3739, %v3819
        %v3852 = vadd.f32 %v3740, %v3820
        %v3853 = vadd.f32 %v3741, %v3821
        %v3854 = vadd.f32 %v3742, %v3822
        %v3855 = vadd.f32 %v3743, %v3823
        %v3856 = vadd.f32 %v3744, %v3824
        %v3857 = vadd.f32 %v3745, %v3825
        %v3858 = vadd.f32 %v3746, %v3826
        %v3859 = vadd.f32 %v3747, %v3827
        %v3860 = vadd.f32 %v3748, %v3828
        %v3861 = vld [vmem:[%s169 + $0x20] sm:$0xff]
        %v3862 = vld [vmem:[%s169 + $0x28] sm:$0xff]
        %v3863 = vld [vmem:[%s169 + $0x30] sm:$0xff]
        %v3864 = vld [vmem:[%s169 + $0x38] sm:$0xff]
        %v3866 = vsel %vm1753, %v3861, 0
        %v3869 = vsel %vm1753, %v3862, 0
        %v3872 = vsel %vm1753, %v3863, 0
        %v3875 = vsel %vm1753, %v3864, 0
        %3877 = vmatpush.msra.mxu0 0.0
        %3878 = vmatpush.msra.mxu0 0.0
        %3879 = vmatpush.msra.mxu0 0.0
        %3880 = vmatpush.msra.mxu0 0.0
        %3881 = vmatpush.msra.mxu0 0.0
        %3882 = vmatpush.msra.mxu0 0.0
        %3883 = vmatpush.msra.mxu0 0.0
        %3884 = vmatpush.msra.mxu0 0.0
        %3885 = vmatpush.msra.mxu0 0.0
        %3886 = vmatpush.msra.mxu0 0.0
        %3887 = vmatpush.msra.mxu0 0.0
        %3888 = vmatpush.msra.mxu0 0.0
        %3889 = vmatpush.msra.mxu0 0.0
        %3890 = vmatpush.msra.mxu0 0.0
        %3891 = vmatpush.msra.mxu0 %v3669
        %3892 = vmatpush.msra.mxu0 %v3653
        %3893 = vmatmul.f32.gmra.mxu0 %v3866
        %v3894 = vpop.f32.mrf.mxu0
        %v3895 = vadd.f32 0.0, %v3894
        %3896 = vmatmul.f32.gmra.mxu0 %v3869
        %v3897 = vpop.f32.mrf.mxu0
        %v3898 = vadd.f32 0.0, %v3897
        %3899 = vmatmul.f32.gmra.mxu0 %v3872
        %v3900 = vpop.f32.mrf.mxu0
        %v3901 = vadd.f32 0.0, %v3900
        %3902 = vmatmul.f32.gmra.mxu0 %v3875
        %v3903 = vpop.f32.mrf.mxu0
        %v3904 = vadd.f32 0.0, %v3903
        %3905 = vdwg.mxu0
        %3906 = vmatpush.msra.mxu0 0.0
        %3907 = vmatpush.msra.mxu0 0.0
        %3908 = vmatpush.msra.mxu0 0.0
        %3909 = vmatpush.msra.mxu0 0.0
        %3910 = vmatpush.msra.mxu0 0.0
        %3911 = vmatpush.msra.mxu0 0.0
        %3912 = vmatpush.msra.mxu0 0.0
        %3913 = vmatpush.msra.mxu0 0.0
        %3914 = vmatpush.msra.mxu0 0.0
        %3915 = vmatpush.msra.mxu0 0.0
        %3916 = vmatpush.msra.mxu0 0.0
        %3917 = vmatpush.msra.mxu0 0.0
        %3918 = vmatpush.msra.mxu0 0.0
        %3919 = vmatpush.msra.mxu0 0.0
        %3920 = vmatpush.msra.mxu0 %v3670
        %3921 = vmatpush.msra.mxu0 %v3654
        %3922 = vmatmul.f32.gmra.mxu0 %v3866
        %v3923 = vpop.f32.mrf.mxu0
        %v3924 = vadd.f32 0.0, %v3923
        %3925 = vmatmul.f32.gmra.mxu0 %v3869
        %v3926 = vpop.f32.mrf.mxu0
        %v3927 = vadd.f32 0.0, %v3926
        %3928 = vmatmul.f32.gmra.mxu0 %v3872
        %v3929 = vpop.f32.mrf.mxu0
        %v3930 = vadd.f32 0.0, %v3929
        %3931 = vmatmul.f32.gmra.mxu0 %v3875
        %v3932 = vpop.f32.mrf.mxu0
        %v3933 = vadd.f32 0.0, %v3932
        %3934 = vdwg.mxu0
        %3935 = vmatpush.msra.mxu0 0.0
        %3936 = vmatpush.msra.mxu0 0.0
        %3937 = vmatpush.msra.mxu0 0.0
        %3938 = vmatpush.msra.mxu0 0.0
        %3939 = vmatpush.msra.mxu0 0.0
        %3940 = vmatpush.msra.mxu0 0.0
        %3941 = vmatpush.msra.mxu0 0.0
        %3942 = vmatpush.msra.mxu0 0.0
        %3943 = vmatpush.msra.mxu0 0.0
        %3944 = vmatpush.msra.mxu0 0.0
        %3945 = vmatpush.msra.mxu0 0.0
        %3946 = vmatpush.msra.mxu0 0.0
        %3947 = vmatpush.msra.mxu0 0.0
        %3948 = vmatpush.msra.mxu0 0.0
        %3949 = vmatpush.msra.mxu0 %v3671
        %3950 = vmatpush.msra.mxu0 %v3655
        %3951 = vmatmul.f32.gmra.mxu0 %v3866
        %v3952 = vpop.f32.mrf.mxu0
        %v3953 = vadd.f32 0.0, %v3952
        %3954 = vmatmul.f32.gmra.mxu0 %v3869
        %v3955 = vpop.f32.mrf.mxu0
        %v3956 = vadd.f32 0.0, %v3955
        %3957 = vmatmul.f32.gmra.mxu0 %v3872
        %v3958 = vpop.f32.mrf.mxu0
        %v3959 = vadd.f32 0.0, %v3958
        %3960 = vmatmul.f32.gmra.mxu0 %v3875
        %v3961 = vpop.f32.mrf.mxu0
        %v3962 = vadd.f32 0.0, %v3961
        %3963 = vdwg.mxu0
        %3964 = vmatpush.msra.mxu0 0.0
        %3965 = vmatpush.msra.mxu0 0.0
        %3966 = vmatpush.msra.mxu0 0.0
        %3967 = vmatpush.msra.mxu0 0.0
        %3968 = vmatpush.msra.mxu0 0.0
        %3969 = vmatpush.msra.mxu0 0.0
        %3970 = vmatpush.msra.mxu0 0.0
        %3971 = vmatpush.msra.mxu0 0.0
        %3972 = vmatpush.msra.mxu0 0.0
        %3973 = vmatpush.msra.mxu0 0.0
        %3974 = vmatpush.msra.mxu0 0.0
        %3975 = vmatpush.msra.mxu0 0.0
        %3976 = vmatpush.msra.mxu0 0.0
        %3977 = vmatpush.msra.mxu0 0.0
        %3978 = vmatpush.msra.mxu0 %v3672
        %3979 = vmatpush.msra.mxu0 %v3656
        %3980 = vmatmul.f32.gmra.mxu0 %v3866
        %v3981 = vpop.f32.mrf.mxu0
        %v3982 = vadd.f32 0.0, %v3981
        %3983 = vmatmul.f32.gmra.mxu0 %v3869
        %v3984 = vpop.f32.mrf.mxu0
        %v3985 = vadd.f32 0.0, %v3984
        %3986 = vmatmul.f32.gmra.mxu0 %v3872
        %v3987 = vpop.f32.mrf.mxu0
        %v3988 = vadd.f32 0.0, %v3987
        %3989 = vmatmul.f32.gmra.mxu0 %v3875
        %v3990 = vpop.f32.mrf.mxu0
        %v3991 = vadd.f32 0.0, %v3990
        %3992 = vdwg.mxu0
        %3993 = vmatpush.msra.mxu0 0.0
        %3994 = vmatpush.msra.mxu0 0.0
        %3995 = vmatpush.msra.mxu0 0.0
        %3996 = vmatpush.msra.mxu0 0.0
        %3997 = vmatpush.msra.mxu0 0.0
        %3998 = vmatpush.msra.mxu0 0.0
        %3999 = vmatpush.msra.mxu0 0.0
        %4000 = vmatpush.msra.mxu0 0.0
        %4001 = vmatpush.msra.mxu0 0.0
        %4002 = vmatpush.msra.mxu0 0.0
        %4003 = vmatpush.msra.mxu0 0.0
        %4004 = vmatpush.msra.mxu0 0.0
        %4005 = vmatpush.msra.mxu0 0.0
        %4006 = vmatpush.msra.mxu0 0.0
        %4007 = vmatpush.msra.mxu0 %v3673
        %4008 = vmatpush.msra.mxu0 %v3657
        %4009 = vmatmul.f32.gmra.mxu0 %v3866
        %v4010 = vpop.f32.mrf.mxu0
        %v4011 = vadd.f32 0.0, %v4010
        %4012 = vmatmul.f32.gmra.mxu0 %v3869
        %v4013 = vpop.f32.mrf.mxu0
        %v4014 = vadd.f32 0.0, %v4013
        %4015 = vmatmul.f32.gmra.mxu0 %v3872
        %v4016 = vpop.f32.mrf.mxu0
        %v4017 = vadd.f32 0.0, %v4016
        %4018 = vmatmul.f32.gmra.mxu0 %v3875
        %v4019 = vpop.f32.mrf.mxu0
        %v4020 = vadd.f32 0.0, %v4019
        %4021 = vdwg.mxu0
        %4022 = vmatpush.msra.mxu0 0.0
        %4023 = vmatpush.msra.mxu0 0.0
        %4024 = vmatpush.msra.mxu0 0.0
        %4025 = vmatpush.msra.mxu0 0.0
        %4026 = vmatpush.msra.mxu0 0.0
        %4027 = vmatpush.msra.mxu0 0.0
        %4028 = vmatpush.msra.mxu0 0.0
        %4029 = vmatpush.msra.mxu0 0.0
        %4030 = vmatpush.msra.mxu0 0.0
        %4031 = vmatpush.msra.mxu0 0.0
        %4032 = vmatpush.msra.mxu0 0.0
        %4033 = vmatpush.msra.mxu0 0.0
        %4034 = vmatpush.msra.mxu0 0.0
        %4035 = vmatpush.msra.mxu0 0.0
        %4036 = vmatpush.msra.mxu0 %v3674
        %4037 = vmatpush.msra.mxu0 %v3658
        %4038 = vmatmul.f32.gmra.mxu0 %v3866
        %v4039 = vpop.f32.mrf.mxu0
        %v4040 = vadd.f32 0.0, %v4039
        %4041 = vmatmul.f32.gmra.mxu0 %v3869
        %v4042 = vpop.f32.mrf.mxu0
        %v4043 = vadd.f32 0.0, %v4042
        %4044 = vmatmul.f32.gmra.mxu0 %v3872
        %v4045 = vpop.f32.mrf.mxu0
        %v4046 = vadd.f32 0.0, %v4045
        %4047 = vmatmul.f32.gmra.mxu0 %v3875
        %v4048 = vpop.f32.mrf.mxu0
        %v4049 = vadd.f32 0.0, %v4048
        %4050 = vdwg.mxu0
        %4051 = vmatpush.msra.mxu0 0.0
        %4052 = vmatpush.msra.mxu0 0.0
        %4053 = vmatpush.msra.mxu0 0.0
        %4054 = vmatpush.msra.mxu0 0.0
        %4055 = vmatpush.msra.mxu0 0.0
        %4056 = vmatpush.msra.mxu0 0.0
        %4057 = vmatpush.msra.mxu0 0.0
        %4058 = vmatpush.msra.mxu0 0.0
        %4059 = vmatpush.msra.mxu0 0.0
        %4060 = vmatpush.msra.mxu0 0.0
        %4061 = vmatpush.msra.mxu0 0.0
        %4062 = vmatpush.msra.mxu0 0.0
        %4063 = vmatpush.msra.mxu0 0.0
        %4064 = vmatpush.msra.mxu0 0.0
        %4065 = vmatpush.msra.mxu0 %v3675
        %4066 = vmatpush.msra.mxu0 %v3659
        %4067 = vmatmul.f32.gmra.mxu0 %v3866
        %v4068 = vpop.f32.mrf.mxu0
        %v4069 = vadd.f32 0.0, %v4068
        %4070 = vmatmul.f32.gmra.mxu0 %v3869
        %v4071 = vpop.f32.mrf.mxu0
        %v4072 = vadd.f32 0.0, %v4071
        %4073 = vmatmul.f32.gmra.mxu0 %v3872
        %v4074 = vpop.f32.mrf.mxu0
        %v4075 = vadd.f32 0.0, %v4074
        %4076 = vmatmul.f32.gmra.mxu0 %v3875
        %v4077 = vpop.f32.mrf.mxu0
        %v4078 = vadd.f32 0.0, %v4077
        %4079 = vdwg.mxu0
        %4080 = vmatpush.msra.mxu0 0.0
        %4081 = vmatpush.msra.mxu0 0.0
        %4082 = vmatpush.msra.mxu0 0.0
        %4083 = vmatpush.msra.mxu0 0.0
        %4084 = vmatpush.msra.mxu0 0.0
        %4085 = vmatpush.msra.mxu0 0.0
        %4086 = vmatpush.msra.mxu0 0.0
        %4087 = vmatpush.msra.mxu0 0.0
        %4088 = vmatpush.msra.mxu0 0.0
        %4089 = vmatpush.msra.mxu0 0.0
        %4090 = vmatpush.msra.mxu0 0.0
        %4091 = vmatpush.msra.mxu0 0.0
        %4092 = vmatpush.msra.mxu0 0.0
        %4093 = vmatpush.msra.mxu0 0.0
        %4094 = vmatpush.msra.mxu0 %v3676
        %4095 = vmatpush.msra.mxu0 %v3660
        %4096 = vmatmul.f32.gmra.mxu0 %v3866
        %v4097 = vpop.f32.mrf.mxu0
        %v4098 = vadd.f32 0.0, %v4097
        %4099 = vmatmul.f32.gmra.mxu0 %v3869
        %v4100 = vpop.f32.mrf.mxu0
        %v4101 = vadd.f32 0.0, %v4100
        %4102 = vmatmul.f32.gmra.mxu0 %v3872
        %v4103 = vpop.f32.mrf.mxu0
        %v4104 = vadd.f32 0.0, %v4103
        %4105 = vmatmul.f32.gmra.mxu0 %v3875
        %v4106 = vpop.f32.mrf.mxu0
        %v4107 = vadd.f32 0.0, %v4106
        %4108 = vdwg.mxu0
        %4109 = vmatpush.msra.mxu0 0.0
        %4110 = vmatpush.msra.mxu0 0.0
        %4111 = vmatpush.msra.mxu0 0.0
        %4112 = vmatpush.msra.mxu0 0.0
        %4113 = vmatpush.msra.mxu0 0.0
        %4114 = vmatpush.msra.mxu0 0.0
        %4115 = vmatpush.msra.mxu0 0.0
        %4116 = vmatpush.msra.mxu0 0.0
        %4117 = vmatpush.msra.mxu0 0.0
        %4118 = vmatpush.msra.mxu0 0.0
        %4119 = vmatpush.msra.mxu0 0.0
        %4120 = vmatpush.msra.mxu0 0.0
        %4121 = vmatpush.msra.mxu0 0.0
        %4122 = vmatpush.msra.mxu0 0.0
        %4123 = vmatpush.msra.mxu0 %v3677
        %4124 = vmatpush.msra.mxu0 %v3661
        %4125 = vmatmul.f32.gmra.mxu0 %v3866
        %v4126 = vpop.f32.mrf.mxu0
        %v4127 = vadd.f32 0.0, %v4126
        %4128 = vmatmul.f32.gmra.mxu0 %v3869
        %v4129 = vpop.f32.mrf.mxu0
        %v4130 = vadd.f32 0.0, %v4129
        %4131 = vmatmul.f32.gmra.mxu0 %v3872
        %v4132 = vpop.f32.mrf.mxu0
        %v4133 = vadd.f32 0.0, %v4132
        %4134 = vmatmul.f32.gmra.mxu0 %v3875
        %v4135 = vpop.f32.mrf.mxu0
        %v4136 = vadd.f32 0.0, %v4135
        %4137 = vdwg.mxu0
        %4138 = vmatpush.msra.mxu0 0.0
        %4139 = vmatpush.msra.mxu0 0.0
        %4140 = vmatpush.msra.mxu0 0.0
        %4141 = vmatpush.msra.mxu0 0.0
        %4142 = vmatpush.msra.mxu0 0.0
        %4143 = vmatpush.msra.mxu0 0.0
        %4144 = vmatpush.msra.mxu0 0.0
        %4145 = vmatpush.msra.mxu0 0.0
        %4146 = vmatpush.msra.mxu0 0.0
        %4147 = vmatpush.msra.mxu0 0.0
        %4148 = vmatpush.msra.mxu0 0.0
        %4149 = vmatpush.msra.mxu0 0.0
        %4150 = vmatpush.msra.mxu0 0.0
        %4151 = vmatpush.msra.mxu0 0.0
        %4152 = vmatpush.msra.mxu0 %v3678
        %4153 = vmatpush.msra.mxu0 %v3662
        %4154 = vmatmul.f32.gmra.mxu0 %v3866
        %v4155 = vpop.f32.mrf.mxu0
        %v4156 = vadd.f32 0.0, %v4155
        %4157 = vmatmul.f32.gmra.mxu0 %v3869
        %v4158 = vpop.f32.mrf.mxu0
        %v4159 = vadd.f32 0.0, %v4158
        %4160 = vmatmul.f32.gmra.mxu0 %v3872
        %v4161 = vpop.f32.mrf.mxu0
        %v4162 = vadd.f32 0.0, %v4161
        %4163 = vmatmul.f32.gmra.mxu0 %v3875
        %v4164 = vpop.f32.mrf.mxu0
        %v4165 = vadd.f32 0.0, %v4164
        %4166 = vdwg.mxu0
        %4167 = vmatpush.msra.mxu0 0.0
        %4168 = vmatpush.msra.mxu0 0.0
        %4169 = vmatpush.msra.mxu0 0.0
        %4170 = vmatpush.msra.mxu0 0.0
        %4171 = vmatpush.msra.mxu0 0.0
        %4172 = vmatpush.msra.mxu0 0.0
        %4173 = vmatpush.msra.mxu0 0.0
        %4174 = vmatpush.msra.mxu0 0.0
        %4175 = vmatpush.msra.mxu0 0.0
        %4176 = vmatpush.msra.mxu0 0.0
        %4177 = vmatpush.msra.mxu0 0.0
        %4178 = vmatpush.msra.mxu0 0.0
        %4179 = vmatpush.msra.mxu0 0.0
        %4180 = vmatpush.msra.mxu0 0.0
        %4181 = vmatpush.msra.mxu0 %v3679
        %4182 = vmatpush.msra.mxu0 %v3663
        %4183 = vmatmul.f32.gmra.mxu0 %v3866
        %v4184 = vpop.f32.mrf.mxu0
        %v4185 = vadd.f32 0.0, %v4184
        %4186 = vmatmul.f32.gmra.mxu0 %v3869
        %v4187 = vpop.f32.mrf.mxu0
        %v4188 = vadd.f32 0.0, %v4187
        %4189 = vmatmul.f32.gmra.mxu0 %v3872
        %v4190 = vpop.f32.mrf.mxu0
        %v4191 = vadd.f32 0.0, %v4190
        %4192 = vmatmul.f32.gmra.mxu0 %v3875
        %v4193 = vpop.f32.mrf.mxu0
        %v4194 = vadd.f32 0.0, %v4193
        %4195 = vdwg.mxu0
        %4196 = vmatpush.msra.mxu0 0.0
        %4197 = vmatpush.msra.mxu0 0.0
        %4198 = vmatpush.msra.mxu0 0.0
        %4199 = vmatpush.msra.mxu0 0.0
        %4200 = vmatpush.msra.mxu0 0.0
        %4201 = vmatpush.msra.mxu0 0.0
        %4202 = vmatpush.msra.mxu0 0.0
        %4203 = vmatpush.msra.mxu0 0.0
        %4204 = vmatpush.msra.mxu0 0.0
        %4205 = vmatpush.msra.mxu0 0.0
        %4206 = vmatpush.msra.mxu0 0.0
        %4207 = vmatpush.msra.mxu0 0.0
        %4208 = vmatpush.msra.mxu0 0.0
        %4209 = vmatpush.msra.mxu0 0.0
        %4210 = vmatpush.msra.mxu0 %v3680
        %4211 = vmatpush.msra.mxu0 %v3664
        %4212 = vmatmul.f32.gmra.mxu0 %v3866
        %v4213 = vpop.f32.mrf.mxu0
        %v4214 = vadd.f32 0.0, %v4213
        %4215 = vmatmul.f32.gmra.mxu0 %v3869
        %v4216 = vpop.f32.mrf.mxu0
        %v4217 = vadd.f32 0.0, %v4216
        %4218 = vmatmul.f32.gmra.mxu0 %v3872
        %v4219 = vpop.f32.mrf.mxu0
        %v4220 = vadd.f32 0.0, %v4219
        %4221 = vmatmul.f32.gmra.mxu0 %v3875
        %v4222 = vpop.f32.mrf.mxu0
        %v4223 = vadd.f32 0.0, %v4222
        %4224 = vdwg.mxu0
        %4225 = vmatpush.msra.mxu0 0.0
        %4226 = vmatpush.msra.mxu0 0.0
        %4227 = vmatpush.msra.mxu0 0.0
        %4228 = vmatpush.msra.mxu0 0.0
        %4229 = vmatpush.msra.mxu0 0.0
        %4230 = vmatpush.msra.mxu0 0.0
        %4231 = vmatpush.msra.mxu0 0.0
        %4232 = vmatpush.msra.mxu0 0.0
        %4233 = vmatpush.msra.mxu0 0.0
        %4234 = vmatpush.msra.mxu0 0.0
        %4235 = vmatpush.msra.mxu0 0.0
        %4236 = vmatpush.msra.mxu0 0.0
        %4237 = vmatpush.msra.mxu0 0.0
        %4238 = vmatpush.msra.mxu0 0.0
        %4239 = vmatpush.msra.mxu0 %v3681
        %4240 = vmatpush.msra.mxu0 %v3665
        %4241 = vmatmul.f32.gmra.mxu0 %v3866
        %v4242 = vpop.f32.mrf.mxu0
        %v4243 = vadd.f32 0.0, %v4242
        %4244 = vmatmul.f32.gmra.mxu0 %v3869
        %v4245 = vpop.f32.mrf.mxu0
        %v4246 = vadd.f32 0.0, %v4245
        %4247 = vmatmul.f32.gmra.mxu0 %v3872
        %v4248 = vpop.f32.mrf.mxu0
        %v4249 = vadd.f32 0.0, %v4248
        %4250 = vmatmul.f32.gmra.mxu0 %v3875
        %v4251 = vpop.f32.mrf.mxu0
        %v4252 = vadd.f32 0.0, %v4251
        %4253 = vdwg.mxu0
        %4254 = vmatpush.msra.mxu0 0.0
        %4255 = vmatpush.msra.mxu0 0.0
        %4256 = vmatpush.msra.mxu0 0.0
        %4257 = vmatpush.msra.mxu0 0.0
        %4258 = vmatpush.msra.mxu0 0.0
        %4259 = vmatpush.msra.mxu0 0.0
        %4260 = vmatpush.msra.mxu0 0.0
        %4261 = vmatpush.msra.mxu0 0.0
        %4262 = vmatpush.msra.mxu0 0.0
        %4263 = vmatpush.msra.mxu0 0.0
        %4264 = vmatpush.msra.mxu0 0.0
        %4265 = vmatpush.msra.mxu0 0.0
        %4266 = vmatpush.msra.mxu0 0.0
        %4267 = vmatpush.msra.mxu0 0.0
        %4268 = vmatpush.msra.mxu0 %v3682
        %4269 = vmatpush.msra.mxu0 %v3666
        %4270 = vmatmul.f32.gmra.mxu0 %v3866
        %v4271 = vpop.f32.mrf.mxu0
        %v4272 = vadd.f32 0.0, %v4271
        %4273 = vmatmul.f32.gmra.mxu0 %v3869
        %v4274 = vpop.f32.mrf.mxu0
        %v4275 = vadd.f32 0.0, %v4274
        %4276 = vmatmul.f32.gmra.mxu0 %v3872
        %v4277 = vpop.f32.mrf.mxu0
        %v4278 = vadd.f32 0.0, %v4277
        %4279 = vmatmul.f32.gmra.mxu0 %v3875
        %v4280 = vpop.f32.mrf.mxu0
        %v4281 = vadd.f32 0.0, %v4280
        %4282 = vdwg.mxu0
        %4283 = vmatpush.msra.mxu0 0.0
        %4284 = vmatpush.msra.mxu0 0.0
        %4285 = vmatpush.msra.mxu0 0.0
        %4286 = vmatpush.msra.mxu0 0.0
        %4287 = vmatpush.msra.mxu0 0.0
        %4288 = vmatpush.msra.mxu0 0.0
        %4289 = vmatpush.msra.mxu0 0.0
        %4290 = vmatpush.msra.mxu0 0.0
        %4291 = vmatpush.msra.mxu0 0.0
        %4292 = vmatpush.msra.mxu0 0.0
        %4293 = vmatpush.msra.mxu0 0.0
        %4294 = vmatpush.msra.mxu0 0.0
        %4295 = vmatpush.msra.mxu0 0.0
        %4296 = vmatpush.msra.mxu0 0.0
        %4297 = vmatpush.msra.mxu0 %v3683
        %4298 = vmatpush.msra.mxu0 %v3667
        %4299 = vmatmul.f32.gmra.mxu0 %v3866
        %v4300 = vpop.f32.mrf.mxu0
        %v4301 = vadd.f32 0.0, %v4300
        %4302 = vmatmul.f32.gmra.mxu0 %v3869
        %v4303 = vpop.f32.mrf.mxu0
        %v4304 = vadd.f32 0.0, %v4303
        %4305 = vmatmul.f32.gmra.mxu0 %v3872
        %v4306 = vpop.f32.mrf.mxu0
        %v4307 = vadd.f32 0.0, %v4306
        %4308 = vmatmul.f32.gmra.mxu0 %v3875
        %v4309 = vpop.f32.mrf.mxu0
        %v4310 = vadd.f32 0.0, %v4309
        %4311 = vdwg.mxu0
        %4312 = vmatpush.msra.mxu0 0.0
        %4313 = vmatpush.msra.mxu0 0.0
        %4314 = vmatpush.msra.mxu0 0.0
        %4315 = vmatpush.msra.mxu0 0.0
        %4316 = vmatpush.msra.mxu0 0.0
        %4317 = vmatpush.msra.mxu0 0.0
        %4318 = vmatpush.msra.mxu0 0.0
        %4319 = vmatpush.msra.mxu0 0.0
        %4320 = vmatpush.msra.mxu0 0.0
        %4321 = vmatpush.msra.mxu0 0.0
        %4322 = vmatpush.msra.mxu0 0.0
        %4323 = vmatpush.msra.mxu0 0.0
        %4324 = vmatpush.msra.mxu0 0.0
        %4325 = vmatpush.msra.mxu0 0.0
        %4326 = vmatpush.msra.mxu0 %v3684
        %4327 = vmatpush.msra.mxu0 %v3668
        %4328 = vmatmul.f32.gmra.mxu0 %v3866
        %v4329 = vpop.f32.mrf.mxu0
        %v4330 = vadd.f32 0.0, %v4329
        %4331 = vmatmul.f32.gmra.mxu0 %v3869
        %v4332 = vpop.f32.mrf.mxu0
        %v4333 = vadd.f32 0.0, %v4332
        %4334 = vmatmul.f32.gmra.mxu0 %v3872
        %v4335 = vpop.f32.mrf.mxu0
        %v4336 = vadd.f32 0.0, %v4335
        %4337 = vmatmul.f32.gmra.mxu0 %v3875
        %v4338 = vpop.f32.mrf.mxu0
        %v4339 = vadd.f32 0.0, %v4338
        %4340 = vdwg.mxu0
        %v4341 = vmul.f32 %v3895, %v3829
        %v4342 = vmul.f32 %v3924, %v3830
        %v4343 = vmul.f32 %v3953, %v3831
        %v4344 = vmul.f32 %v3982, %v3832
        %v4345 = vmul.f32 %v4011, %v3833
        %v4346 = vmul.f32 %v4040, %v3834
        %v4347 = vmul.f32 %v4069, %v3835
        %v4348 = vmul.f32 %v4098, %v3836
        %v4349 = vmul.f32 %v4127, %v3837
        %v4350 = vmul.f32 %v4156, %v3838
        %v4351 = vmul.f32 %v4185, %v3839
        %v4352 = vmul.f32 %v4214, %v3840
        %v4353 = vmul.f32 %v4243, %v3841
        %v4354 = vmul.f32 %v4272, %v3842
        %v4355 = vmul.f32 %v4301, %v3843
        %v4356 = vmul.f32 %v4330, %v3844
        %v4357 = vmul.f32 %v3898, %v3845
        %v4358 = vmul.f32 %v3927, %v3846
        %v4359 = vmul.f32 %v3956, %v3847
        %v4360 = vmul.f32 %v3985, %v3848
        %v4361 = vmul.f32 %v4014, %v3849
        %v4362 = vmul.f32 %v4043, %v3850
        %v4363 = vmul.f32 %v4072, %v3851
        %v4364 = vmul.f32 %v4101, %v3852
        %v4365 = vmul.f32 %v4130, %v3853
        %v4366 = vmul.f32 %v4159, %v3854
        %v4367 = vmul.f32 %v4188, %v3855
        %v4368 = vmul.f32 %v4217, %v3856
        %v4369 = vmul.f32 %v4246, %v3857
        %v4370 = vmul.f32 %v4275, %v3858
        %v4371 = vmul.f32 %v4304, %v3859
        %v4372 = vmul.f32 %v4333, %v3860
        %v4373 = vadd.f32 %v4341, %v4357
        %v4374 = vrot.slane %v4373, 4
        %v4375 = vadd.f32 %v4373, %v4374
        %v4376 = vrot.slane %v4375, 2
        %v4377 = vadd.f32 %v4375, %v4376
        %v4378 = vrot.slane %v4377, 1
        %v4379 = vadd.f32 %v4377, %v4378
        %v4380 = vadd.f32 %v4342, %v4358
        %v4381 = vrot.slane %v4380, 4
        %v4382 = vadd.f32 %v4380, %v4381
        %v4383 = vrot.slane %v4382, 2
        %v4384 = vadd.f32 %v4382, %v4383
        %v4385 = vrot.slane %v4384, 1
        %v4386 = vadd.f32 %v4384, %v4385
        %v4387 = vadd.f32 %v4343, %v4359
        %v4388 = vrot.slane %v4387, 4
        %v4389 = vadd.f32 %v4387, %v4388
        %v4390 = vrot.slane %v4389, 2
        %v4391 = vadd.f32 %v4389, %v4390
        %v4392 = vrot.slane %v4391, 1
        %v4393 = vadd.f32 %v4391, %v4392
        %v4394 = vadd.f32 %v4344, %v4360
        %v4395 = vrot.slane %v4394, 4
        %v4396 = vadd.f32 %v4394, %v4395
        %v4397 = vrot.slane %v4396, 2
        %v4398 = vadd.f32 %v4396, %v4397
        %v4399 = vrot.slane %v4398, 1
        %v4400 = vadd.f32 %v4398, %v4399
        %v4401 = vadd.f32 %v4345, %v4361
        %v4402 = vrot.slane %v4401, 4
        %v4403 = vadd.f32 %v4401, %v4402
        %v4404 = vrot.slane %v4403, 2
        %v4405 = vadd.f32 %v4403, %v4404
        %v4406 = vrot.slane %v4405, 1
        %v4407 = vadd.f32 %v4405, %v4406
        %v4408 = vadd.f32 %v4346, %v4362
        %v4409 = vrot.slane %v4408, 4
        %v4410 = vadd.f32 %v4408, %v4409
        %v4411 = vrot.slane %v4410, 2
        %v4412 = vadd.f32 %v4410, %v4411
        %v4413 = vrot.slane %v4412, 1
        %v4414 = vadd.f32 %v4412, %v4413
        %v4415 = vadd.f32 %v4347, %v4363
        %v4416 = vrot.slane %v4415, 4
        %v4417 = vadd.f32 %v4415, %v4416
        %v4418 = vrot.slane %v4417, 2
        %v4419 = vadd.f32 %v4417, %v4418
        %v4420 = vrot.slane %v4419, 1
        %v4421 = vadd.f32 %v4419, %v4420
        %v4422 = vadd.f32 %v4348, %v4364
        %v4423 = vrot.slane %v4422, 4
        %v4424 = vadd.f32 %v4422, %v4423
        %v4425 = vrot.slane %v4424, 2
        %v4426 = vadd.f32 %v4424, %v4425
        %v4427 = vrot.slane %v4426, 1
        %v4428 = vadd.f32 %v4426, %v4427
        %v4429 = vadd.f32 %v4349, %v4365
        %v4430 = vrot.slane %v4429, 4
        %v4431 = vadd.f32 %v4429, %v4430
        %v4432 = vrot.slane %v4431, 2
        %v4433 = vadd.f32 %v4431, %v4432
        %v4434 = vrot.slane %v4433, 1
        %v4435 = vadd.f32 %v4433, %v4434
        %v4436 = vadd.f32 %v4350, %v4366
        %v4437 = vrot.slane %v4436, 4
        %v4438 = vadd.f32 %v4436, %v4437
        %v4439 = vrot.slane %v4438, 2
        %v4440 = vadd.f32 %v4438, %v4439
        %v4441 = vrot.slane %v4440, 1
        %v4442 = vadd.f32 %v4440, %v4441
        %v4443 = vadd.f32 %v4351, %v4367
        %v4444 = vrot.slane %v4443, 4
        %v4445 = vadd.f32 %v4443, %v4444
        %v4446 = vrot.slane %v4445, 2
        %v4447 = vadd.f32 %v4445, %v4446
        %v4448 = vrot.slane %v4447, 1
        %v4449 = vadd.f32 %v4447, %v4448
        %v4450 = vadd.f32 %v4352, %v4368
        %v4451 = vrot.slane %v4450, 4
        %v4452 = vadd.f32 %v4450, %v4451
        %v4453 = vrot.slane %v4452, 2
        %v4454 = vadd.f32 %v4452, %v4453
        %v4455 = vrot.slane %v4454, 1
        %v4456 = vadd.f32 %v4454, %v4455
        %v4457 = vadd.f32 %v4353, %v4369
        %v4458 = vrot.slane %v4457, 4
        %v4459 = vadd.f32 %v4457, %v4458
        %v4460 = vrot.slane %v4459, 2
        %v4461 = vadd.f32 %v4459, %v4460
        %v4462 = vrot.slane %v4461, 1
        %v4463 = vadd.f32 %v4461, %v4462
        %v4464 = vadd.f32 %v4354, %v4370
        %v4465 = vrot.slane %v4464, 4
        %v4466 = vadd.f32 %v4464, %v4465
        %v4467 = vrot.slane %v4466, 2
        %v4468 = vadd.f32 %v4466, %v4467
        %v4469 = vrot.slane %v4468, 1
        %v4470 = vadd.f32 %v4468, %v4469
        %v4471 = vadd.f32 %v4355, %v4371
        %v4472 = vrot.slane %v4471, 4
        %v4473 = vadd.f32 %v4471, %v4472
        %v4474 = vrot.slane %v4473, 2
        %v4475 = vadd.f32 %v4473, %v4474
        %v4476 = vrot.slane %v4475, 1
        %v4477 = vadd.f32 %v4475, %v4476
        %v4478 = vadd.f32 %v4356, %v4372
        %v4479 = vrot.slane %v4478, 4
        %v4480 = vadd.f32 %v4478, %v4479
        %v4481 = vrot.slane %v4480, 2
        %v4482 = vadd.f32 %v4480, %v4481
        %v4483 = vrot.slane %v4482, 1
        %v4484 = vadd.f32 %v4482, %v4483
        %v4501 = vrot.slane %v4386, 7
        %v4502 = vrot.slane %v4393, 6
        %v4503 = vrot.slane %v4400, 5
        %v4504 = vrot.slane %v4407, 4
        %v4505 = vrot.slane %v4414, 3
        %v4506 = vrot.slane %v4421, 2
        %v4507 = vrot.slane %v4428, 1
        %v4508 = vrot.slane %v4442, 7
        %v4509 = vrot.slane %v4449, 6
        %v4510 = vrot.slane %v4456, 5
        %v4511 = vrot.slane %v4463, 4
        %v4512 = vrot.slane %v4470, 3
        %v4513 = vrot.slane %v4477, 2
        %v4514 = vrot.slane %v4484, 1
        %v4515 = vsel %vm2404, %v4379, %v4501
        %v4516 = vsel %vm2406, %v4502, %v4503
        %v4517 = vsel %vm2408, %v4515, %v4516
        %v4518 = vsel %vm2410, %v4504, %v4505
        %v4519 = vsel %vm2412, %v4506, %v4507
        %v4520 = vsel %vm2414, %v4518, %v4519
        %v4521 = vsel %vm2416, %v4517, %v4520
        %v4522 = vsel %vm2404, %v4435, %v4508
        %v4523 = vsel %vm2406, %v4509, %v4510
        %v4524 = vsel %vm2408, %v4522, %v4523
        %v4525 = vsel %vm2410, %v4511, %v4512
        %v4526 = vsel %vm2412, %v4513, %v4514
        %v4527 = vsel %vm2414, %v4525, %v4526
        %v4528 = vsel %vm2416, %v4524, %v4527
        %s4531 = scalar_lea.vmem %s164, 2 [#allocation5]
        %4532 = vst [vmem:[%s4531] ss:$4 sm:$0xff] %v4521
        %s4533 = scalar_lea.vmem %s164, 34 [#allocation5]
        %4534 = vst [vmem:[%s4533] ss:$4 sm:$0xff] %v4528
        %v4535 = vmul.f32 %v3901, %v3829
        %v4536 = vmul.f32 %v3930, %v3830
        %v4537 = vmul.f32 %v3959, %v3831
        %v4538 = vmul.f32 %v3988, %v3832
        %v4539 = vmul.f32 %v4017, %v3833
        %v4540 = vmul.f32 %v4046, %v3834
        %v4541 = vmul.f32 %v4075, %v3835
        %v4542 = vmul.f32 %v4104, %v3836
        %v4543 = vmul.f32 %v4133, %v3837
        %v4544 = vmul.f32 %v4162, %v3838
        %v4545 = vmul.f32 %v4191, %v3839
        %v4546 = vmul.f32 %v4220, %v3840
        %v4547 = vmul.f32 %v4249, %v3841
        %v4548 = vmul.f32 %v4278, %v3842
        %v4549 = vmul.f32 %v4307, %v3843
        %v4550 = vmul.f32 %v4336, %v3844
        %v4551 = vmul.f32 %v3904, %v3845
        %v4552 = vmul.f32 %v3933, %v3846
        %v4553 = vmul.f32 %v3962, %v3847
        %v4554 = vmul.f32 %v3991, %v3848
        %v4555 = vmul.f32 %v4020, %v3849
        %v4556 = vmul.f32 %v4049, %v3850
        %v4557 = vmul.f32 %v4078, %v3851
        %v4558 = vmul.f32 %v4107, %v3852
        %v4559 = vmul.f32 %v4136, %v3853
        %v4560 = vmul.f32 %v4165, %v3854
        %v4561 = vmul.f32 %v4194, %v3855
        %v4562 = vmul.f32 %v4223, %v3856
        %v4563 = vmul.f32 %v4252, %v3857
        %v4564 = vmul.f32 %v4281, %v3858
        %v4565 = vmul.f32 %v4310, %v3859
        %v4566 = vmul.f32 %v4339, %v3860
        %v4567 = vadd.f32 %v4535, %v4551
        %v4568 = vrot.slane %v4567, 4
        %v4569 = vadd.f32 %v4567, %v4568
        %v4570 = vrot.slane %v4569, 2
        %v4571 = vadd.f32 %v4569, %v4570
        %v4572 = vrot.slane %v4571, 1
        %v4573 = vadd.f32 %v4571, %v4572
        %v4574 = vadd.f32 %v4536, %v4552
        %v4575 = vrot.slane %v4574, 4
        %v4576 = vadd.f32 %v4574, %v4575
        %v4577 = vrot.slane %v4576, 2
        %v4578 = vadd.f32 %v4576, %v4577
        %v4579 = vrot.slane %v4578, 1
        %v4580 = vadd.f32 %v4578, %v4579
        %v4581 = vadd.f32 %v4537, %v4553
        %v4582 = vrot.slane %v4581, 4
        %v4583 = vadd.f32 %v4581, %v4582
        %v4584 = vrot.slane %v4583, 2
        %v4585 = vadd.f32 %v4583, %v4584
        %v4586 = vrot.slane %v4585, 1
        %v4587 = vadd.f32 %v4585, %v4586
        %v4588 = vadd.f32 %v4538, %v4554
        %v4589 = vrot.slane %v4588, 4
        %v4590 = vadd.f32 %v4588, %v4589
        %v4591 = vrot.slane %v4590, 2
        %v4592 = vadd.f32 %v4590, %v4591
        %v4593 = vrot.slane %v4592, 1
        %v4594 = vadd.f32 %v4592, %v4593
        %v4595 = vadd.f32 %v4539, %v4555
        %v4596 = vrot.slane %v4595, 4
        %v4597 = vadd.f32 %v4595, %v4596
        %v4598 = vrot.slane %v4597, 2
        %v4599 = vadd.f32 %v4597, %v4598
        %v4600 = vrot.slane %v4599, 1
        %v4601 = vadd.f32 %v4599, %v4600
        %v4602 = vadd.f32 %v4540, %v4556
        %v4603 = vrot.slane %v4602, 4
        %v4604 = vadd.f32 %v4602, %v4603
        %v4605 = vrot.slane %v4604, 2
        %v4606 = vadd.f32 %v4604, %v4605
        %v4607 = vrot.slane %v4606, 1
        %v4608 = vadd.f32 %v4606, %v4607
        %v4609 = vadd.f32 %v4541, %v4557
        %v4610 = vrot.slane %v4609, 4
        %v4611 = vadd.f32 %v4609, %v4610
        %v4612 = vrot.slane %v4611, 2
        %v4613 = vadd.f32 %v4611, %v4612
        %v4614 = vrot.slane %v4613, 1
        %v4615 = vadd.f32 %v4613, %v4614
        %v4616 = vadd.f32 %v4542, %v4558
        %v4617 = vrot.slane %v4616, 4
        %v4618 = vadd.f32 %v4616, %v4617
        %v4619 = vrot.slane %v4618, 2
        %v4620 = vadd.f32 %v4618, %v4619
        %v4621 = vrot.slane %v4620, 1
        %v4622 = vadd.f32 %v4620, %v4621
        %v4623 = vadd.f32 %v4543, %v4559
        %v4624 = vrot.slane %v4623, 4
        %v4625 = vadd.f32 %v4623, %v4624
        %v4626 = vrot.slane %v4625, 2
        %v4627 = vadd.f32 %v4625, %v4626
        %v4628 = vrot.slane %v4627, 1
        %v4629 = vadd.f32 %v4627, %v4628
        %v4630 = vadd.f32 %v4544, %v4560
        %v4631 = vrot.slane %v4630, 4
        %v4632 = vadd.f32 %v4630, %v4631
        %v4633 = vrot.slane %v4632, 2
        %v4634 = vadd.f32 %v4632, %v4633
        %v4635 = vrot.slane %v4634, 1
        %v4636 = vadd.f32 %v4634, %v4635
        %v4637 = vadd.f32 %v4545, %v4561
        %v4638 = vrot.slane %v4637, 4
        %v4639 = vadd.f32 %v4637, %v4638
        %v4640 = vrot.slane %v4639, 2
        %v4641 = vadd.f32 %v4639, %v4640
        %v4642 = vrot.slane %v4641, 1
        %v4643 = vadd.f32 %v4641, %v4642
        %v4644 = vadd.f32 %v4546, %v4562
        %v4645 = vrot.slane %v4644, 4
        %v4646 = vadd.f32 %v4644, %v4645
        %v4647 = vrot.slane %v4646, 2
        %v4648 = vadd.f32 %v4646, %v4647
        %v4649 = vrot.slane %v4648, 1
        %v4650 = vadd.f32 %v4648, %v4649
        %v4651 = vadd.f32 %v4547, %v4563
        %v4652 = vrot.slane %v4651, 4
        %v4653 = vadd.f32 %v4651, %v4652
        %v4654 = vrot.slane %v4653, 2
        %v4655 = vadd.f32 %v4653, %v4654
        %v4656 = vrot.slane %v4655, 1
        %v4657 = vadd.f32 %v4655, %v4656
        %v4658 = vadd.f32 %v4548, %v4564
        %v4659 = vrot.slane %v4658, 4
        %v4660 = vadd.f32 %v4658, %v4659
        %v4661 = vrot.slane %v4660, 2
        %v4662 = vadd.f32 %v4660, %v4661
        %v4663 = vrot.slane %v4662, 1
        %v4664 = vadd.f32 %v4662, %v4663
        %v4665 = vadd.f32 %v4549, %v4565
        %v4666 = vrot.slane %v4665, 4
        %v4667 = vadd.f32 %v4665, %v4666
        %v4668 = vrot.slane %v4667, 2
        %v4669 = vadd.f32 %v4667, %v4668
        %v4670 = vrot.slane %v4669, 1
        %v4671 = vadd.f32 %v4669, %v4670
        %v4672 = vadd.f32 %v4550, %v4566
        %v4673 = vrot.slane %v4672, 4
        %v4674 = vadd.f32 %v4672, %v4673
        %v4675 = vrot.slane %v4674, 2
        %v4676 = vadd.f32 %v4674, %v4675
        %v4677 = vrot.slane %v4676, 1
        %v4678 = vadd.f32 %v4676, %v4677
        %v4695 = vrot.slane %v4580, 7
        %v4696 = vrot.slane %v4587, 6
        %v4697 = vrot.slane %v4594, 5
        %v4698 = vrot.slane %v4601, 4
        %v4699 = vrot.slane %v4608, 3
        %v4700 = vrot.slane %v4615, 2
        %v4701 = vrot.slane %v4622, 1
        %v4702 = vrot.slane %v4636, 7
        %v4703 = vrot.slane %v4643, 6
        %v4704 = vrot.slane %v4650, 5
        %v4705 = vrot.slane %v4657, 4
        %v4706 = vrot.slane %v4664, 3
        %v4707 = vrot.slane %v4671, 2
        %v4708 = vrot.slane %v4678, 1
        %v4709 = vsel %vm2404, %v4573, %v4695
        %v4710 = vsel %vm2406, %v4696, %v4697
        %v4711 = vsel %vm2408, %v4709, %v4710
        %v4712 = vsel %vm2410, %v4698, %v4699
        %v4713 = vsel %vm2412, %v4700, %v4701
        %v4714 = vsel %vm2414, %v4712, %v4713
        %v4715 = vsel %vm2416, %v4711, %v4714
        %v4716 = vsel %vm2404, %v4629, %v4702
        %v4717 = vsel %vm2406, %v4703, %v4704
        %v4718 = vsel %vm2408, %v4716, %v4717
        %v4719 = vsel %vm2410, %v4705, %v4706
        %v4720 = vsel %vm2412, %v4707, %v4708
        %v4721 = vsel %vm2414, %v4719, %v4720
        %v4722 = vsel %vm2416, %v4718, %v4721
        %s4725 = scalar_lea.vmem %s164, 3 [#allocation5]
        %4726 = vst [vmem:[%s4725] ss:$4 sm:$0xff] %v4715
        %s4727 = scalar_lea.vmem %s164, 35 [#allocation5]
        %4728 = vst [vmem:[%s4727] ss:$4 sm:$0xff] %v4722
        %s4729 = sand.u32 %s86, 1
        %s4730 = scalar_lea.sflag [#allocation3], %s4729
        %s4731 = sand.u32 %s86, 1
        %s4732 = smul.addr %s4731, 64
        %s4733 = scalar_lea.vmem [#allocation5], %s4732
        // Predicated region
        $region33: #{tpu_custom_call.1} parent=27 // pred_check
          %p4734 = pneg %p96
        $region34: #{tpu_custom_call.1} parent=27 // pred_check_branch
          %4736 = sbr.rel (%p4734) target = $region36
        $region35: #{tpu_custom_call.1} parent=27 // pred_region
          %s4737 = smul.u32 16, %s22
          %4739 = vsyncadd %s4730, 0
          %s4740 = smul.addr %s21, 32
          %s4741 = sadd.s32 %s4737, %s4740
          %s4742 = smul.addr %s4741, 4
          %s4743 = scalar_lea.hbm %s2, %s4742
          %s4745 = sshll.u32 %s4733, 4
          %s4746 = int_to_ptr.vmem [resolvable:$true] %s4745
          %s4747 = sshll.u32 %s4743, 4
          %s4748 = int_to_ptr.hbm [resolvable:$true] %s4747
          %4750 = dma.vmem_to_hbm [thread:$0]  %s4746, 1024, %s4748, %s4730
        $region36: #{tpu_custom_call.1} parent=27 // pred_fallthru
          _
      $region28: #{tpu_custom_call.1} parent=5 // pred_fallthru
        _
      %p4751 = scmp.le.s32.totalorder 2, %s12
      // Predicated region
      $region37: #{tpu_custom_call.1} parent=5 // pred_check
        %p4752 = pneg %p4751
      $region38: #{tpu_custom_call.1} parent=5 // pred_check_branch
        %4754 = sbr.rel (%p4752) target = $region40
      $region39: #{tpu_custom_call.1} parent=5 // pred_region
        %s4755 = ssub.s32 %s12, 2
        // Predicated region
        $region41: #{tpu_custom_call.1} parent=39 // pred_check
          %p4756 = pneg %p102
        $region42: #{tpu_custom_call.1} parent=39 // pred_check_branch
          %4758 = sbr.rel (%p4756) target = $region44
        $region43: #{tpu_custom_call.1} parent=39 // pred_region
          %s4759 = sand.u32 %s87, 1
          %s4760 = scalar_lea.sflag [#allocation3], %s4759
          %s4761 = sand.u32 %s87, 1
          %s4762 = smul.addr %s4761, 64
          %s4763 = scalar_lea.vmem [#allocation5], %s4762
          %4765 = dma.done %s4760, 1024
        $region44: #{tpu_custom_call.1} parent=39 // pred_fallthru
          _
      $region40: #{tpu_custom_call.1} parent=5 // pred_fallthru
        _
    $region6: #{tpu_custom_call.1} parent=1 // loop_footer
      %s16 = sadd.s32 1, %s12
    $region7: #{tpu_custom_call.1} parent=1 // loop_footer_branch
      %11 = sbr.rel target = $region3
    $region8: #{tpu_custom_call.1} parent=1 // loop_exit
      _
    %4766 = vsyncpa [#allocation3], 1
    %s4767 = scalar_lea.sflag [#allocation3], 1
    %4768 = vsyncpa %s4767, 1
    %4769 = vsyncpa [#allocation4], 1
    %s4770 = scalar_lea.sflag [#allocation4], 1
    %4771 = vsyncpa %s4770, 1

</llo_original>
